<compile_context>
chip_gen: v7x
topology: tpu7x:2x2x1
jax: 0.10.0
libtpu: 0.0.40
codegen_flags: <defaults>
</compile_context>

<pallas_src>
import functools

import jax
import jax.numpy as jnp
from jax.experimental import pallas as pl
from jax.experimental.pallas import tpu as pltpu

HIDDEN = 1024
BN_EPS = 1e-5
LEAKY_SLOPE = 0.2


def _leaky_relu(x):
    return jnp.where(x >= 0, x, LEAKY_SLOPE * x)


def _disc_kernel(n_batch,
                 x_ref, w1_ref, b1_ref, gamma_ref, beta_ref,
                 w2_ref, b2_ref, w3_ref, b3_ref,
                 o_ref,
                 s1_ref, s2_ref):
    """Grid = (phase, batch_tile).

    phase 0: Linear-1 per tile, accumulate BN sum / sum-of-squares in scratch.
    phase 1: recompute Linear-1, apply fused BN scale/shift, LeakyReLU,
             Linear-2, LeakyReLU, Linear-3 (VPU+XLU), Sigmoid.
    """
    phase = pl.program_id(0)
    tile = pl.program_id(1)

    # ---- Linear 1: bf16 x bf16 -> f32 accumulation on the MXU ----
    h1 = (jnp.dot(x_ref[...], w1_ref[...], preferred_element_type=jnp.float32)
          + b1_ref[...])

    @pl.when(phase == 0)
    def _stats_pass():
        @pl.when(tile == 0)
        def _init():
            s1_ref[...] = jnp.zeros_like(s1_ref)
            s2_ref[...] = jnp.zeros_like(s2_ref)

        s1_ref[...] += jnp.sum(h1, axis=0, keepdims=True)
        s2_ref[...] += jnp.sum(h1 * h1, axis=0, keepdims=True)
        # Defined placeholder write; phase 1 rewrites this output block.
        o_ref[...] = jnp.zeros_like(o_ref)

    @pl.when(phase == 1)
    def _compute_pass():
        @pl.when(tile == 0)
        def _finalize_stats():
            inv_n = 1.0 / float(n_batch)
            mean = s1_ref[...] * inv_n
            var = s2_ref[...] * inv_n - mean * mean          # biased batch var
            scale = gamma_ref[...] * jax.lax.rsqrt(var + BN_EPS)
            s1_ref[...] = beta_ref[...] - mean * scale        # fused shift
            s2_ref[...] = scale                               # fused scale

        # ---- BatchNorm (fused scale/shift) + LeakyReLU ----
        h = _leaky_relu(h1 * s2_ref[...] + s1_ref[...])

        # ---- Linear 2 (bf16 activations, resident bf16 weights) ----
        h2 = (jnp.dot(h.astype(jnp.bfloat16), w2_ref[...],
                      preferred_element_type=jnp.float32) + b2_ref[...])
        h2 = _leaky_relu(h2)

        # ---- Linear 3 (1024 -> 1): VPU multiply + lane reduce, Sigmoid ----
        logits = jnp.sum(h2 * w3_ref[...], axis=-1, keepdims=True) + b3_ref[...]
        o_ref[...] = jax.nn.sigmoid(logits)


def _choose_tile_b(B, max_tile=256):
    if B <= max_tile:
        return B
    for t in range(max_tile, 7, -8):
        if B % t == 0:
            return t
    # TODO(synk): pad ragged batches instead of falling back to one big tile.
    return B


def _vmem_limit_bytes(tile_b, d_in):
    weight_bytes = d_in * HIDDEN * 2 + HIDDEN * HIDDEN * 2 + (4 * HIDDEN + 1) * 4
    io_bytes = 2 * (tile_b * d_in * 2 + tile_b * 4)           # double-buffered x / out
    temp_bytes = 6 * tile_b * HIDDEN * 4 + 2 * HIDDEN * 4      # f32 intermediates + scratch
    est = int(1.5 * (weight_bytes + io_bytes + temp_bytes))
    return min(32 << 20, max(8 << 20, est))


def _cost_estimate(B, d_in):
    # Linear-1 runs in both phases (recompute), Linear-2/3 once.
    flops = 2 * B * d_in * HIDDEN * 2 + 2 * B * (HIDDEN * HIDDEN + HIDDEN)
    transcendentals = HIDDEN + B                   # rsqrt per feature + sigmoid per row
    weight_bytes = 2 * (d_in * HIDDEN + HIDDEN * HIDDEN) + 4 * (4 * HIDDEN + 1)
    act_bytes = 2 * (2 * B * d_in) + 4 * B         # bf16 x read twice + f32 out
    return pl.CostEstimate(flops=flops, transcendentals=transcendentals,
                           bytes_accessed=weight_bytes + act_bytes)


@functools.partial(jax.jit, static_argnames=("tile_b",))
def discriminator_forward(z, s, params, tile_b=None):
    # torch.cat([z, s], dim=1), demoted to bf16 once for the MXU.
    x = jnp.concatenate([z, s], axis=1).astype(jnp.bfloat16)
    B, d_in = x.shape
    if tile_b is None:
        tile_b = _choose_tile_b(B)
    assert B % tile_b == 0, (B, tile_b)
    n_tiles = B // tile_b

    w1, b1, gamma, beta, w2, b2, w3, b3 = params

    const = lambda p, t: (0, 0)       # weights: resident across all grid steps
    batch = lambda p, t: (t, 0)       # activations / outputs: tiled over batch

    kernel = functools.partial(_disc_kernel, B)

    return pl.pallas_call(
        kernel,
        out_shape=jax.ShapeDtypeStruct((B, 1), jnp.float32),
        grid_spec=pltpu.PrefetchScalarGridSpec(
            num_scalar_prefetch=0,
            grid=(2, n_tiles),
            in_specs=[
                pl.BlockSpec((tile_b, d_in), batch),    # x  (bf16)
                pl.BlockSpec((d_in, HIDDEN), const),    # w1 (bf16)
                pl.BlockSpec((1, HIDDEN), const),       # b1
                pl.BlockSpec((1, HIDDEN), const),       # gamma
                pl.BlockSpec((1, HIDDEN), const),       # beta
                pl.BlockSpec((HIDDEN, HIDDEN), const),  # w2 (bf16)
                pl.BlockSpec((1, HIDDEN), const),       # b2
                pl.BlockSpec((1, HIDDEN), const),       # w3
                pl.BlockSpec((1, 1), const),            # b3
            ],
            out_specs=pl.BlockSpec((tile_b, 1), batch),
            scratch_shapes=[pltpu.VMEM((1, HIDDEN), jnp.float32),   # sum -> shift
                            pltpu.VMEM((1, HIDDEN), jnp.float32)],  # sumsq -> scale
        ),
        compiler_params=pltpu.CompilerParams(
            dimension_semantics=("arbitrary", "arbitrary"),
            vmem_limit_bytes=_vmem_limit_bytes(tile_b, d_in),
        ),
        cost_estimate=_cost_estimate(B, d_in),
    )(x, w1, b1, gamma, beta, w2, b2, w3, b3)


def init_params(key, in_dims, proto_dims):
    """Deterministic synthetic parameters (shapes match the PyTorch module).

    Weights are stored transposed relative to PyTorch ((in_features,
    out_features)) so the kernel computes x @ W; matmul weights are bf16 for
    HBM bandwidth, BN / bias params stay f32.
    """
    ks = jax.random.split(key, 6)
    scale = 0.02
    d_in = in_dims + proto_dims
    w1 = (scale * jax.random.normal(ks[0], (d_in, HIDDEN), jnp.float32)).astype(jnp.bfloat16)
    b1 = scale * jax.random.normal(ks[1], (1, HIDDEN), jnp.float32)
    gamma = jnp.ones((1, HIDDEN), jnp.float32)    # BatchNorm1d default weight
    beta = jnp.zeros((1, HIDDEN), jnp.float32)    # BatchNorm1d default bias
    w2 = (scale * jax.random.normal(ks[2], (HIDDEN, HIDDEN), jnp.float32)).astype(jnp.bfloat16)
    b2 = scale * jax.random.normal(ks[3], (1, HIDDEN), jnp.float32)
    # Final projection stored as a (1, HIDDEN) row for the VPU/XLU reduction.
    w3 = scale * jax.random.normal(ks[4], (1, HIDDEN), jnp.float32)
    b3 = scale * jax.random.normal(ks[5], (1, 1), jnp.float32)
    return (w1, b1, gamma, beta, w2, b2, w3, b3)


def reference_forward(z, s, params):
    """Plain-JAX reference with identical dtype semantics to the kernel."""
    w1, b1, gamma, beta, w2, b2, w3, b3 = params
    x = jnp.concatenate([z, s], axis=1).astype(jnp.bfloat16)
    h1 = jnp.dot(x, w1, preferred_element_type=jnp.float32) + b1
    mean = jnp.mean(h1, axis=0, keepdims=True)
    var = jnp.mean(h1 * h1, axis=0, keepdims=True) - mean * mean
    h = (h1 - mean) * (gamma * jax.lax.rsqrt(var + BN_EPS)) + beta
    h = jnp.where(h >= 0, h, LEAKY_SLOPE * h)
    h2 = jnp.dot(h.astype(jnp.bfloat16), w2, preferred_element_type=jnp.float32) + b2
    h2 = jnp.where(h2 >= 0, h2, LEAKY_SLOPE * h2)
    logits = jnp.sum(h2 * w3, axis=-1, keepdims=True) + b3
    return jax.nn.sigmoid(logits)


def reference_forward_f32(z, s, params):
    """Full-f32 reference of the original module (loose-tolerance check)."""
    w1, b1, gamma, beta, w2, b2, w3, b3 = params
    x = jnp.concatenate([z, s], axis=1)
    h1 = x @ w1.astype(jnp.float32) + b1
    mean = jnp.mean(h1, axis=0, keepdims=True)
    var = jnp.mean((h1 - mean) ** 2, axis=0, keepdims=True)
    h = (h1 - mean) * jax.lax.rsqrt(var + BN_EPS) * gamma + beta
    h = jnp.where(h >= 0, h, LEAKY_SLOPE * h)
    h2 = h @ w2.astype(jnp.float32) + b2
    h2 = jnp.where(h2 >= 0, h2, LEAKY_SLOPE * h2)
    logits = jnp.sum(h2 * w3, axis=-1, keepdims=True) + b3
    return jax.nn.sigmoid(logits)


if __name__ == "__main__":
    in_dims = 128
    proto_dims = 128

    key = jax.random.PRNGKey(0)
    kz, ks_, kp = jax.random.split(key, 3)
    params = init_params(kp, in_dims, proto_dims)

    # Case 1: small batch, single batch tile.
    B = 8
    z = jax.random.normal(kz, (B, in_dims), jnp.float32)
    s = jax.random.normal(ks_, (B, proto_dims), jnp.float32)
    out = jax.block_until_ready(discriminator_forward(z, s, params))
    ref = reference_forward(z, s, params)
    assert out.shape == (B, 1)
    assert jnp.allclose(out, ref, atol=1e-3, rtol=1e-3), (out, ref)
    ref32 = reference_forward_f32(z, s, params)
    assert jnp.allclose(out, ref32, atol=2e-2), (out, ref32)

    # Case 2: multi-tile batch grid (weights stay resident across tiles,
    # BatchNorm stats still computed over the full batch via the two-phase grid).
    B2 = 32
    z2 = jax.random.normal(jax.random.PRNGKey(1), (B2, in_dims), jnp.float32)
    s2 = jax.random.normal(jax.random.PRNGKey(2), (B2, proto_dims), jnp.float32)
    out2 = jax.block_until_ready(discriminator_forward(z2, s2, params, tile_b=8))
    ref2 = reference_forward(z2, s2, params)
    assert out2.shape == (B2, 1)
    assert jnp.allclose(out2, ref2, atol=1e-3, rtol=1e-3), (out2, ref2)

    print("KERNEL_OK")
</pallas_src>

<mosaic_0001>
module attributes {stable_mosaic.version = 11 : i64} {
  func.func @_disc_kernel(%arg0: i32, %arg1: i32, %arg2: memref<8x256xbf16, #tpu.memory_space<vmem>>, %arg3: memref<256x1024xbf16, #tpu.memory_space<vmem>>, %arg4: memref<1x1024xf32, #tpu.memory_space<vmem>>, %arg5: memref<1x1024xf32, #tpu.memory_space<vmem>>, %arg6: memref<1x1024xf32, #tpu.memory_space<vmem>>, %arg7: memref<1024x1024xbf16, #tpu.memory_space<vmem>>, %arg8: memref<1x1024xf32, #tpu.memory_space<vmem>>, %arg9: memref<1x1024xf32, #tpu.memory_space<vmem>>, %arg10: memref<1x1xf32, #tpu.memory_space<vmem>>, %arg11: memref<8x1xf32, #tpu.memory_space<vmem>>, %arg12: memref<1x1024xf32, #tpu.memory_space<vmem>>, %arg13: memref<1x1024xf32, #tpu.memory_space<vmem>>) attributes {dimension_semantics = [#tpu.dimension_semantics<arbitrary>, #tpu.dimension_semantics<arbitrary>], iteration_bounds = array<i64: 2, 1>, scalar_prefetch = 0 : i64, scratch_operands = 2 : i64, tpu.core_type = #tpu.core_type<tc>, window_params = [{transform_indices = @transform_0, window_bounds = array<i64: 8, 256>}, {pipeline_mode = #tpu.pipeline_mode<synchronous>, transform_indices = @transform_1, window_bounds = array<i64: 256, 1024>}, {pipeline_mode = #tpu.pipeline_mode<synchronous>, transform_indices = @transform_2, window_bounds = array<i64: 1, 1024>}, {pipeline_mode = #tpu.pipeline_mode<synchronous>, transform_indices = @transform_3, window_bounds = array<i64: 1, 1024>}, {pipeline_mode = #tpu.pipeline_mode<synchronous>, transform_indices = @transform_4, window_bounds = array<i64: 1, 1024>}, {pipeline_mode = #tpu.pipeline_mode<synchronous>, transform_indices = @transform_5, window_bounds = array<i64: 1024, 1024>}, {pipeline_mode = #tpu.pipeline_mode<synchronous>, transform_indices = @transform_6, window_bounds = array<i64: 1, 1024>}, {pipeline_mode = #tpu.pipeline_mode<synchronous>, transform_indices = @transform_7, window_bounds = array<i64: 1, 1024>}, {pipeline_mode = #tpu.pipeline_mode<synchronous>, transform_indices = @transform_8, window_bounds = array<i64: 1, 1>}, {transform_indices = @transform_9, window_bounds = array<i64: 8, 1>}]} {
    %c0 = arith.constant 0 : index
    %c0_0 = arith.constant 0 : index
    %0 = vector.load %arg2[%c0, %c0_0] : memref<8x256xbf16, #tpu.memory_space<vmem>>, vector<8x256xbf16>
    %c0_1 = arith.constant 0 : index
    %c0_2 = arith.constant 0 : index
    %1 = vector.load %arg3[%c0_1, %c0_2] : memref<256x1024xbf16, #tpu.memory_space<vmem>>, vector<256x1024xbf16>
    %cst = arith.constant dense<0.000000e+00> : vector<8x1024xf32>
    %2 = tpu.matmul %0, %1, %cst {dimension_numbers = #tpu.dot_dimension_numbers<[1], [0], [0], [1], [0, 0, 1, 1], [], []>} : vector<8x256xbf16>, vector<256x1024xbf16>, vector<8x1024xf32> -> vector<8x1024xf32>
    %c0_3 = arith.constant 0 : index
    %c0_4 = arith.constant 0 : index
    %3 = vector.load %arg4[%c0_3, %c0_4] : memref<1x1024xf32, #tpu.memory_space<vmem>>, vector<1x1024xf32>
    %4 = vector.broadcast %3 : vector<1x1024xf32> to vector<8x1024xf32>
    %5 = arith.addf %2, %4 : vector<8x1024xf32>
    %c0_i32 = arith.constant 0 : i32
    %6 = arith.cmpi eq, %arg0, %c0_i32 : i32
    %7 = arith.extui %6 : i1 to i32
    %c0_i32_5 = arith.constant 0 : i32
    %8 = arith.cmpi ne, %7, %c0_i32_5 : i32
    scf.if %8 {
      %c0_i32_7 = arith.constant 0 : i32
      %12 = arith.cmpi eq, %arg1, %c0_i32_7 : i32
      %13 = arith.extui %12 : i1 to i32
      %c0_i32_8 = arith.constant 0 : i32
      %14 = arith.cmpi ne, %13, %c0_i32_8 : i32
      scf.if %14 {
        %cst_22 = arith.constant 0.000000e+00 : f32
        %28 = vector.broadcast %cst_22 : f32 to vector<1x1024xf32>
        %c0_23 = arith.constant 0 : index
        %c0_24 = arith.constant 0 : index
        %29 = vector.load %arg12[%c0_23, %c0_24] : memref<1x1024xf32, #tpu.memory_space<vmem>>, vector<1x1024xf32>
        tpu.vector_store %arg12[%c0_23, %c0_24], %28 {strides = array<i32>} : memref<1x1024xf32, #tpu.memory_space<vmem>>, vector<1x1024xf32>,
        %cst_25 = arith.constant 0.000000e+00 : f32
        %30 = vector.broadcast %cst_25 : f32 to vector<1x1024xf32>
        %c0_26 = arith.constant 0 : index
        %c0_27 = arith.constant 0 : index
        %31 = vector.load %arg13[%c0_26, %c0_27] : memref<1x1024xf32, #tpu.memory_space<vmem>>, vector<1x1024xf32>
        tpu.vector_store %arg13[%c0_26, %c0_27], %30 {strides = array<i32>} : memref<1x1024xf32, #tpu.memory_space<vmem>>, vector<1x1024xf32>,
      } else {
      }
      %c0_9 = arith.constant 0 : index
      %c0_10 = arith.constant 0 : index
      %15 = vector.load %arg12[%c0_9, %c0_10] : memref<1x1024xf32, #tpu.memory_space<vmem>>, vector<1x1024xf32>
      %cst_11 = arith.constant dense<0.000000e+00> : vector<1024xf32>
      %16 = vector.multi_reduction <add>, %5, %cst_11 [0] : vector<8x1024xf32> to vector<1024xf32>
      %17 = vector.shape_cast %16 : vector<1024xf32> to vector<1x1024xf32>
      %18 = arith.addf %15, %17 : vector<1x1024xf32>
      %c0_12 = arith.constant 0 : index
      %c0_13 = arith.constant 0 : index
      %19 = vector.load %arg12[%c0_12, %c0_13] : memref<1x1024xf32, #tpu.memory_space<vmem>>, vector<1x1024xf32>
      tpu.vector_store %arg12[%c0_12, %c0_13], %18 {strides = array<i32>} : memref<1x1024xf32, #tpu.memory_space<vmem>>, vector<1x1024xf32>,
      %c0_14 = arith.constant 0 : index
      %c0_15 = arith.constant 0 : index
      %20 = vector.load %arg13[%c0_14, %c0_15] : memref<1x1024xf32, #tpu.memory_space<vmem>>, vector<1x1024xf32>
      %21 = arith.mulf %5, %5 : vector<8x1024xf32>
      %cst_16 = arith.constant dense<0.000000e+00> : vector<1024xf32>
      %22 = vector.multi_reduction <add>, %21, %cst_16 [0] : vector<8x1024xf32> to vector<1024xf32>
      %23 = vector.shape_cast %22 : vector<1024xf32> to vector<1x1024xf32>
      %24 = arith.addf %20, %23 : vector<1x1024xf32>
      %c0_17 = arith.constant 0 : index
      %c0_18 = arith.constant 0 : index
      %25 = vector.load %arg13[%c0_17, %c0_18] : memref<1x1024xf32, #tpu.memory_space<vmem>>, vector<1x1024xf32>
      tpu.vector_store %arg13[%c0_17, %c0_18], %24 {strides = array<i32>} : memref<1x1024xf32, #tpu.memory_space<vmem>>, vector<1x1024xf32>,
      %cst_19 = arith.constant 0.000000e+00 : f32
      %26 = vector.broadcast %cst_19 : f32 to vector<8x1xf32>
      %c0_20 = arith.constant 0 : index
      %c0_21 = arith.constant 0 : index
      %27 = vector.load %arg11[%c0_20, %c0_21] : memref<8x1xf32, #tpu.memory_space<vmem>>, vector<8x1xf32>
      tpu.vector_store %arg11[%c0_20, %c0_21], %26 {strides = array<i32>} : memref<8x1xf32, #tpu.memory_space<vmem>>, vector<8x1xf32>,
    } else {
    }
    %c1_i32 = arith.constant 1 : i32
    %9 = arith.cmpi eq, %arg0, %c1_i32 : i32
    %10 = arith.extui %9 : i1 to i32
    %c0_i32_6 = arith.constant 0 : i32
    %11 = arith.cmpi ne, %10, %c0_i32_6 : i32
    scf.if %11 {
      %c0_i32_7 = arith.constant 0 : i32
      %12 = arith.cmpi eq, %arg1, %c0_i32_7 : i32
      %13 = arith.extui %12 : i1 to i32
      %c0_i32_8 = arith.constant 0 : i32
      %14 = arith.cmpi ne, %13, %c0_i32_8 : i32
      scf.if %14 {
        %c0_30 = arith.constant 0 : index
        %c0_31 = arith.constant 0 : index
        %51 = vector.load %arg12[%c0_30, %c0_31] : memref<1x1024xf32, #tpu.memory_space<vmem>>, vector<1x1024xf32>
        %cst_32 = arith.constant 1.250000e-01 : f32
        %52 = vector.broadcast %cst_32 : f32 to vector<1x1024xf32>
        %53 = arith.mulf %51, %52 : vector<1x1024xf32>
        %c0_33 = arith.constant 0 : index
        %c0_34 = arith.constant 0 : index
        %54 = vector.load %arg13[%c0_33, %c0_34] : memref<1x1024xf32, #tpu.memory_space<vmem>>, vector<1x1024xf32>
        %cst_35 = arith.constant 1.250000e-01 : f32
        %55 = vector.broadcast %cst_35 : f32 to vector<1x1024xf32>
        %56 = arith.mulf %54, %55 : vector<1x1024xf32>
        %57 = arith.mulf %53, %53 : vector<1x1024xf32>
        %58 = arith.subf %56, %57 : vector<1x1024xf32>
        %c0_36 = arith.constant 0 : index
        %c0_37 = arith.constant 0 : index
        %59 = vector.load %arg5[%c0_36, %c0_37] : memref<1x1024xf32, #tpu.memory_space<vmem>>, vector<1x1024xf32>
        %cst_38 = arith.constant 9.99999974E-6 : f32
        %60 = vector.broadcast %cst_38 : f32 to vector<1x1024xf32>
        %61 = arith.addf %58, %60 : vector<1x1024xf32>
        %62 = math.rsqrt %61 : vector<1x1024xf32>
        %63 = arith.mulf %59, %62 : vector<1x1024xf32>
        %c0_39 = arith.constant 0 : index
        %c0_40 = arith.constant 0 : index
        %64 = vector.load %arg6[%c0_39, %c0_40] : memref<1x1024xf32, #tpu.memory_space<vmem>>, vector<1x1024xf32>
        %65 = arith.mulf %53, %63 : vector<1x1024xf32>
        %66 = arith.subf %64, %65 : vector<1x1024xf32>
        %c0_41 = arith.constant 0 : index
        %c0_42 = arith.constant 0 : index
        %67 = vector.load %arg12[%c0_41, %c0_42] : memref<1x1024xf32, #tpu.memory_space<vmem>>, vector<1x1024xf32>
        tpu.vector_store %arg12[%c0_41, %c0_42], %66 {strides = array<i32>} : memref<1x1024xf32, #tpu.memory_space<vmem>>, vector<1x1024xf32>,
        %c0_43 = arith.constant 0 : index
        %c0_44 = arith.constant 0 : index
        %68 = vector.load %arg13[%c0_43, %c0_44] : memref<1x1024xf32, #tpu.memory_space<vmem>>, vector<1x1024xf32>
        tpu.vector_store %arg13[%c0_43, %c0_44], %63 {strides = array<i32>} : memref<1x1024xf32, #tpu.memory_space<vmem>>, vector<1x1024xf32>,
      } else {
      }
      %c0_9 = arith.constant 0 : index
      %c0_10 = arith.constant 0 : index
      %15 = vector.load %arg13[%c0_9, %c0_10] : memref<1x1024xf32, #tpu.memory_space<vmem>>, vector<1x1024xf32>
      %16 = vector.broadcast %15 : vector<1x1024xf32> to vector<8x1024xf32>
      %17 = arith.mulf %5, %16 : vector<8x1024xf32>
      %c0_11 = arith.constant 0 : index
      %c0_12 = arith.constant 0 : index
      %18 = vector.load %arg12[%c0_11, %c0_12] : memref<1x1024xf32, #tpu.memory_space<vmem>>, vector<1x1024xf32>
      %19 = vector.broadcast %18 : vector<1x1024xf32> to vector<8x1024xf32>
      %20 = arith.addf %17, %19 : vector<8x1024xf32>
      %cst_13 = arith.constant 0.000000e+00 : f32
      %21 = vector.broadcast %cst_13 : f32 to vector<8x1024xf32>
      %22 = arith.cmpf oge, %20, %21 : vector<8x1024xf32>
      %cst_14 = arith.constant 2.000000e-01 : f32
      %23 = vector.broadcast %cst_14 : f32 to vector<8x1024xf32>
      %24 = arith.mulf %23, %20 : vector<8x1024xf32>
      %25 = arith.select %22, %20, %24 : vector<8x1024xi1>, vector<8x1024xf32>
      %26 = arith.truncf %25 : vector<8x1024xf32> to vector<8x1024xbf16>
      %c0_15 = arith.constant 0 : index
      %c0_16 = arith.constant 0 : index
      %27 = vector.load %arg7[%c0_15, %c0_16] : memref<1024x1024xbf16, #tpu.memory_space<vmem>>, vector<1024x1024xbf16>
      %cst_17 = arith.constant dense<0.000000e+00> : vector<8x1024xf32>
      %28 = tpu.matmul %26, %27, %cst_17 {dimension_numbers = #tpu.dot_dimension_numbers<[1], [0], [0], [1], [0, 0, 1, 1], [], []>} : vector<8x1024xbf16>, vector<1024x1024xbf16>, vector<8x1024xf32> -> vector<8x1024xf32>
      %c0_18 = arith.constant 0 : index
      %c0_19 = arith.constant 0 : index
      %29 = vector.load %arg8[%c0_18, %c0_19] : memref<1x1024xf32, #tpu.memory_space<vmem>>, vector<1x1024xf32>
      %30 = vector.broadcast %29 : vector<1x1024xf32> to vector<8x1024xf32>
      %31 = arith.addf %28, %30 : vector<8x1024xf32>
      %cst_20 = arith.constant 0.000000e+00 : f32
      %32 = vector.broadcast %cst_20 : f32 to vector<8x1024xf32>
      %33 = arith.cmpf oge, %31, %32 : vector<8x1024xf32>
      %cst_21 = arith.constant 2.000000e-01 : f32
      %34 = vector.broadcast %cst_21 : f32 to vector<8x1024xf32>
      %35 = arith.mulf %34, %31 : vector<8x1024xf32>
      %36 = arith.select %33, %31, %35 : vector<8x1024xi1>, vector<8x1024xf32>
      %c0_22 = arith.constant 0 : index
      %c0_23 = arith.constant 0 : index
      %37 = vector.load %arg9[%c0_22, %c0_23] : memref<1x1024xf32, #tpu.memory_space<vmem>>, vector<1x1024xf32>
      %38 = vector.broadcast %37 : vector<1x1024xf32> to vector<8x1024xf32>
      %39 = arith.mulf %36, %38 : vector<8x1024xf32>
      %cst_24 = arith.constant dense<0.000000e+00> : vector<8xf32>
      %40 = vector.multi_reduction <add>, %39, %cst_24 [1] : vector<8x1024xf32> to vector<8xf32>
      %41 = vector.shape_cast %40 : vector<8xf32> to vector<8x1xf32>
      %c0_25 = arith.constant 0 : index
      %c0_26 = arith.constant 0 : index
      %42 = vector.load %arg10[%c0_25, %c0_26] : memref<1x1xf32, #tpu.memory_space<vmem>>, vector<1x1xf32>
      %43 = vector.broadcast %42 : vector<1x1xf32> to vector<8x1xf32>
      %44 = arith.addf %41, %43 : vector<8x1xf32>
      %45 = arith.negf %44 : vector<8x1xf32>
      %46 = math.exp %45 : vector<8x1xf32>
      %cst_27 = arith.constant 1.000000e+00 : f32
      %47 = vector.broadcast %cst_27 : f32 to vector<8x1xf32>
      %48 = arith.addf %47, %46 : vector<8x1xf32>
      %49 = arith.divf %47, %48 : vector<8x1xf32>
      %c0_28 = arith.constant 0 : index
      %c0_29 = arith.constant 0 : index
      %50 = vector.load %arg11[%c0_28, %c0_29] : memref<8x1xf32, #tpu.memory_space<vmem>>, vector<8x1xf32>
      tpu.vector_store %arg11[%c0_28, %c0_29], %49 {strides = array<i32>} : memref<8x1xf32, #tpu.memory_space<vmem>>, vector<8x1xf32>,
    } else {
    }
    return
  }
  func.func @transform_0(%arg0: i32, %arg1: i32) -> (i32, i32) {
    %c0_i32 = arith.constant 0 : i32
    %c0_i32_0 = arith.constant 0 : i32
    return %arg1, %c0_i32 : i32, i32
  }
  func.func @transform_1(%arg0: i32, %arg1: i32) -> (i32, i32) {
    %c0_i32 = arith.constant 0 : i32
    %c0_i32_0 = arith.constant 0 : i32
    %c0_i32_1 = arith.constant 0 : i32
    return %c0_i32, %c0_i32_0 : i32, i32
  }
  func.func @transform_2(%arg0: i32, %arg1: i32) -> (i32, i32) {
    %c0_i32 = arith.constant 0 : i32
    %c0_i32_0 = arith.constant 0 : i32
    %c0_i32_1 = arith.constant 0 : i32
    return %c0_i32, %c0_i32_0 : i32, i32
  }
  func.func @transform_3(%arg0: i32, %arg1: i32) -> (i32, i32) {
    %c0_i32 = arith.constant 0 : i32
    %c0_i32_0 = arith.constant 0 : i32
    %c0_i32_1 = arith.constant 0 : i32
    return %c0_i32, %c0_i32_0 : i32, i32
  }
  func.func @transform_4(%arg0: i32, %arg1: i32) -> (i32, i32) {
    %c0_i32 = arith.constant 0 : i32
    %c0_i32_0 = arith.constant 0 : i32
    %c0_i32_1 = arith.constant 0 : i32
    return %c0_i32, %c0_i32_0 : i32, i32
  }
  func.func @transform_5(%arg0: i32, %arg1: i32) -> (i32, i32) {
    %c0_i32 = arith.constant 0 : i32
    %c0_i32_0 = arith.constant 0 : i32
    %c0_i32_1 = arith.constant 0 : i32
    return %c0_i32, %c0_i32_0 : i32, i32
  }
  func.func @transform_6(%arg0: i32, %arg1: i32) -> (i32, i32) {
    %c0_i32 = arith.constant 0 : i32
    %c0_i32_0 = arith.constant 0 : i32
    %c0_i32_1 = arith.constant 0 : i32
    return %c0_i32, %c0_i32_0 : i32, i32
  }
  func.func @transform_7(%arg0: i32, %arg1: i32) -> (i32, i32) {
    %c0_i32 = arith.constant 0 : i32
    %c0_i32_0 = arith.constant 0 : i32
    %c0_i32_1 = arith.constant 0 : i32
    return %c0_i32, %c0_i32_0 : i32, i32
  }
  func.func @transform_8(%arg0: i32, %arg1: i32) -> (i32, i32) {
    %c0_i32 = arith.constant 0 : i32
    %c0_i32_0 = arith.constant 0 : i32
    %c0_i32_1 = arith.constant 0 : i32
    return %c0_i32, %c0_i32_0 : i32, i32
  }
  func.func @transform_9(%arg0: i32, %arg1: i32) -> (i32, i32) {
    %c0_i32 = arith.constant 0 : i32
    %c0_i32_0 = arith.constant 0 : i32
    return %arg1, %c0_i32 : i32, i32
  }
}

</mosaic_0001>

<llo_original>
// kernel: discriminator_forward.1
$region0: #{discriminator_forward.1}
  #allocation0 [shape = 'u32[]', space=smem, size = 0x4, offset = 0x4, fixed_abs, tag = 'smem constant byte address 0x4 - core index']
  #allocation1 [shape = 'u32[144,128]{1,0:T(1,128)}', space=vmem, size = 0x12000, scoped, tag = 'internal scratch']
  #allocation2 [shape = 'f32[1,1024]{1,0:T(1,128)}', space=vmem, size = 0x1000, scoped, tag = 'scratch operand']
  #allocation3 [shape = 'f32[1,1024]{1,0:T(1,128)}', space=vmem, size = 0x1000, scoped, tag = 'scratch operand']
  #allocation4 [shape = 'f32[1,1]{1,0:T(1,128)S(1)}', space=vmem, size = 0x200, scoped, tag = 'scoped memory for discriminator_forward.1']
  %s0 = inlined_call_operand.vmem [shape: bf16[8,256], index: 0, kind: input, shape index: {}]
  %s1 = inlined_call_operand.hbm [shape: bf16[256,1024], index: 1, kind: input, shape index: {}]
  %s2 = inlined_call_operand.hbm [shape: f32[1,1024], index: 2, kind: input, shape index: {}]
  %s3 = inlined_call_operand.hbm [shape: f32[1,1024], index: 3, kind: input, shape index: {}]
  %s4 = inlined_call_operand.hbm [shape: f32[1,1024], index: 4, kind: input, shape index: {}]
  %s5 = inlined_call_operand.hbm [shape: bf16[1024,1024], index: 5, kind: input, shape index: {}]
  %s6 = inlined_call_operand.hbm [shape: f32[1,1024], index: 6, kind: input, shape index: {}]
  %s7 = inlined_call_operand.hbm [shape: f32[1,1024], index: 7, kind: input, shape index: {}]
  %s8 = inlined_call_operand.<no memory space> [shape: f32[1,1], index: 8, kind: input, shape index: {}]
  %s9 = inlined_call_operand.vmem [shape: f32[8,1], index: 9, kind: output, shape index: {}]
  %s10 = sld [smem:[#allocation0]]
  $region113: #{discriminator_forward.1} parent=0
    _
  %s12 = ssub.s32 1, %s10
  %s13 = scalar_select 0, %s12, %s10
  %v14 = vstv %s8
  %15 = vst [vmem:[#allocation4] sm:$0x1] %v14
  $region1: #{discriminator_forward.1} parent=0
    #allocation5 [shape = 'u8[524288]{0}', space=vmem, size = 0x80000, scoped, tag = 'input window, operand 1, single buffered']
    #allocation6 [shape = 's32[2]{0}', space=sflag, size = 0x8, scoped, tag = 'scoped memory for discriminator_forward.1']
    #allocation7 [shape = 'u8[4096]{0}', space=vmem, size = 0x1000, scoped, tag = 'input window, operand 2, single buffered']
    #allocation8 [shape = 's32[1]{0}', space=sflag, size = 0x4, scoped, tag = 'scoped memory for discriminator_forward.1']
    #allocation9 [shape = 'u8[4096]{0}', space=vmem, size = 0x1000, scoped, tag = 'input window, operand 3, single buffered']
    #allocation10 [shape = 'u8[4096]{0}', space=vmem, size = 0x1000, scoped, tag = 'input window, operand 4, single buffered']
    #allocation11 [shape = 's32[1]{0}', space=sflag, size = 0x4, scoped, tag = 'scoped memory for discriminator_forward.1']
    #allocation12 [shape = 'u8[2097152]{0}', space=vmem, size = 0x200000, scoped, tag = 'input window, operand 5, single buffered']
    #allocation13 [shape = 'u8[4096]{0}', space=vmem, size = 0x1000, scoped, tag = 'input window, operand 6, single buffered']
    #allocation14 [shape = 's32[1]{0}', space=sflag, size = 0x4, scoped, tag = 'scoped memory for discriminator_forward.1']
    #allocation15 [shape = 'u8[4096]{0}', space=vmem, size = 0x1000, scoped, tag = 'input window, operand 7, single buffered']
    %16 = vsyncpa [#allocation6], 0
    %17 = vsyncpa [#allocation8], 0
    %18 = vsyncpa [#allocation11], 0
    %19 = vsyncpa [#allocation14], 0
    loop: start=0, step=1, limit=4
    $region2: #{discriminator_forward.1} parent=1 // loop_pre_header
      _
    $region3: #{discriminator_forward.1} parent=1 // loop_header
      %s21 = sphi 0, %s25
      %p22 = scmp.ge.s32.totalorder %s21, 4
      %s28 = sphi 0, %s40
      %s29 = sphi 0, %s36
      %s30 = sphi 0, %s28
      %s31 = sphi 0, %s29
      %s32 = sphi 0, %s30
      %s33 = sphi 0, %s31
      %s43 = sphi 0, %s45
      %s46 = sphi 0, %s43
      %s47 = sphi 0, %s46
      %s63 = sphi 0, %s47
      %s67 = sphi 0, %s67
      %s69 = sphi 0, %s67
      %s70 = sphi 0, %s69
      %s84 = sphi 0, %s70
      %s88 = sphi 0, %s88
      %s90 = sphi 0, %s88
      %s91 = sphi 0, %s90
      %s105 = sphi 0, %s91
      %s109 = sphi 0, %s109
      %s111 = sphi 0, %s109
      %s112 = sphi 0, %s111
      %s126 = sphi 0, %s112
      %s130 = sphi 0, %s130
      %s132 = sphi 0, %s130
      %s133 = sphi 0, %s132
      %s147 = sphi 0, %s133
      %s151 = sphi 0, %s151
      %s153 = sphi 0, %s151
      %s154 = sphi 0, %s153
      %s168 = sphi 0, %s154
      %s172 = sphi 0, %s172
      %s174 = sphi 0, %s172
      %s175 = sphi 0, %s174
      %s189 = sphi 0, %s175
      %s193 = sphi 0, %s193
      %s195 = sphi 0, %s193
      %s196 = sphi 0, %s195
      %s210 = sphi 0, %s196
      %s214 = sphi 0, %s214
      %s216 = sphi 0, %s214
      %s217 = sphi 0, %s216
      %s231 = sphi 0, %s217
      %s237 = sphi 0, %s239
      %s240 = sphi 0, %s237
      %s241 = sphi 0, %s240
      %s257 = sphi 0, %s241
    $region4: #{discriminator_forward.1} parent=1 // loop_header_branch
      %24 = sbr.rel (%p22) target = $region8
    $region5: #{discriminator_forward.1} parent=1 // loop_body
      %s26 = ssub.s32 %s21, 1
      %s27 = ssub.s32 %s21, 2
      %s34 = sadd.s32 1, %s29
      %p35 = scmp.ge.s32.totalorder %s34, 1
      %s36 = scalar_select %p35, 0, %s34
      %s37 = sadd.s32 1, %s28
      %s38 = scalar_select %p35, %s37, %s28
      %p39 = scmp.ge.s32.totalorder %s38, 2
      %s40 = scalar_select %p39, 0, %s38
      %s41 = ssub.s32 %s29, %s36
      %p42 = scmp.eq.s32.totalorder %s41, 0
      %s44 = sadd.s32 %s43, 1
      %s45 = scalar_select %p42, %s43, %s44
      %p48 = pneg %p42
      %p49 = scmp.eq.s32.totalorder %s21, 1
      %p50 = por %p48, %p49
      %p51 = scmp.ne.s32.totalorder %s43, %s46
      %p52 = scmp.eq.s32.totalorder %s21, 0
      %p53 = por %p51, %p52
      %p54 = scmp.ne.s32.totalorder %s43, %s46
      %p55 = scmp.eq.s32.totalorder %s26, 1
      %p56 = por %p54, %p55
      %p57 = scmp.ne.s32.totalorder %s46, %s47
      %p58 = scmp.eq.s32.totalorder %s26, 0
      %p59 = por %p57, %p58
      %p60 = scmp.ne.s32.totalorder %s46, %s47
      %p61 = scmp.eq.s32.totalorder %s27, 1
      %p62 = por %p60, %p61
      %p64 = scmp.ne.s32.totalorder %s47, %s63
      %p65 = scmp.eq.s32.totalorder %s27, 0
      %p66 = por %p64, %p65
      %s68 = sadd.s32 %s67, 1
      %p71 = scmp.eq.s32.totalorder %s21, 1
      %p72 = scmp.ne.s32.totalorder %s67, %s69
      %p73 = scmp.eq.s32.totalorder %s21, 0
      %p74 = por %p72, %p73
      %p75 = scmp.ne.s32.totalorder %s67, %s69
      %p76 = scmp.eq.s32.totalorder %s26, 1
      %p77 = por %p75, %p76
      %p78 = scmp.ne.s32.totalorder %s69, %s70
      %p79 = scmp.eq.s32.totalorder %s26, 0
      %p80 = por %p78, %p79
      %p81 = scmp.ne.s32.totalorder %s69, %s70
      %p82 = scmp.eq.s32.totalorder %s27, 1
      %p83 = por %p81, %p82
      %p85 = scmp.ne.s32.totalorder %s70, %s84
      %p86 = scmp.eq.s32.totalorder %s27, 0
      %p87 = por %p85, %p86
      %s89 = sadd.s32 %s88, 1
      %p92 = scmp.eq.s32.totalorder %s21, 1
      %p93 = scmp.ne.s32.totalorder %s88, %s90
      %p94 = scmp.eq.s32.totalorder %s21, 0
      %p95 = por %p93, %p94
      %p96 = scmp.ne.s32.totalorder %s88, %s90
      %p97 = scmp.eq.s32.totalorder %s26, 1
      %p98 = por %p96, %p97
      %p99 = scmp.ne.s32.totalorder %s90, %s91
      %p100 = scmp.eq.s32.totalorder %s26, 0
      %p101 = por %p99, %p100
      %p102 = scmp.ne.s32.totalorder %s90, %s91
      %p103 = scmp.eq.s32.totalorder %s27, 1
      %p104 = por %p102, %p103
      %p106 = scmp.ne.s32.totalorder %s91, %s105
      %p107 = scmp.eq.s32.totalorder %s27, 0
      %p108 = por %p106, %p107
      %s110 = sadd.s32 %s109, 1
      %p113 = scmp.eq.s32.totalorder %s21, 1
      %p114 = scmp.ne.s32.totalorder %s109, %s111
      %p115 = scmp.eq.s32.totalorder %s21, 0
      %p116 = por %p114, %p115
      %p117 = scmp.ne.s32.totalorder %s109, %s111
      %p118 = scmp.eq.s32.totalorder %s26, 1
      %p119 = por %p117, %p118
      %p120 = scmp.ne.s32.totalorder %s111, %s112
      %p121 = scmp.eq.s32.totalorder %s26, 0
      %p122 = por %p120, %p121
      %p123 = scmp.ne.s32.totalorder %s111, %s112
      %p124 = scmp.eq.s32.totalorder %s27, 1
      %p125 = por %p123, %p124
      %p127 = scmp.ne.s32.totalorder %s112, %s126
      %p128 = scmp.eq.s32.totalorder %s27, 0
      %p129 = por %p127, %p128
      %s131 = sadd.s32 %s130, 1
      %p134 = scmp.eq.s32.totalorder %s21, 1
      %p135 = scmp.ne.s32.totalorder %s130, %s132
      %p136 = scmp.eq.s32.totalorder %s21, 0
      %p137 = por %p135, %p136
      %p138 = scmp.ne.s32.totalorder %s130, %s132
      %p139 = scmp.eq.s32.totalorder %s26, 1
      %p140 = por %p138, %p139
      %p141 = scmp.ne.s32.totalorder %s132, %s133
      %p142 = scmp.eq.s32.totalorder %s26, 0
      %p143 = por %p141, %p142
      %p144 = scmp.ne.s32.totalorder %s132, %s133
      %p145 = scmp.eq.s32.totalorder %s27, 1
      %p146 = por %p144, %p145
      %p148 = scmp.ne.s32.totalorder %s133, %s147
      %p149 = scmp.eq.s32.totalorder %s27, 0
      %p150 = por %p148, %p149
      %s152 = sadd.s32 %s151, 1
      %p155 = scmp.eq.s32.totalorder %s21, 1
      %p156 = scmp.ne.s32.totalorder %s151, %s153
      %p157 = scmp.eq.s32.totalorder %s21, 0
      %p158 = por %p156, %p157
      %p159 = scmp.ne.s32.totalorder %s151, %s153
      %p160 = scmp.eq.s32.totalorder %s26, 1
      %p161 = por %p159, %p160
      %p162 = scmp.ne.s32.totalorder %s153, %s154
      %p163 = scmp.eq.s32.totalorder %s26, 0
      %p164 = por %p162, %p163
      %p165 = scmp.ne.s32.totalorder %s153, %s154
      %p166 = scmp.eq.s32.totalorder %s27, 1
      %p167 = por %p165, %p166
      %p169 = scmp.ne.s32.totalorder %s154, %s168
      %p170 = scmp.eq.s32.totalorder %s27, 0
      %p171 = por %p169, %p170
      %s173 = sadd.s32 %s172, 1
      %p176 = scmp.eq.s32.totalorder %s21, 1
      %p177 = scmp.ne.s32.totalorder %s172, %s174
      %p178 = scmp.eq.s32.totalorder %s21, 0
      %p179 = por %p177, %p178
      %p180 = scmp.ne.s32.totalorder %s172, %s174
      %p181 = scmp.eq.s32.totalorder %s26, 1
      %p182 = por %p180, %p181
      %p183 = scmp.ne.s32.totalorder %s174, %s175
      %p184 = scmp.eq.s32.totalorder %s26, 0
      %p185 = por %p183, %p184
      %p186 = scmp.ne.s32.totalorder %s174, %s175
      %p187 = scmp.eq.s32.totalorder %s27, 1
      %p188 = por %p186, %p187
      %p190 = scmp.ne.s32.totalorder %s175, %s189
      %p191 = scmp.eq.s32.totalorder %s27, 0
      %p192 = por %p190, %p191
      %s194 = sadd.s32 %s193, 1
      %p197 = scmp.eq.s32.totalorder %s21, 1
      %p198 = scmp.ne.s32.totalorder %s193, %s195
      %p199 = scmp.eq.s32.totalorder %s21, 0
      %p200 = por %p198, %p199
      %p201 = scmp.ne.s32.totalorder %s193, %s195
      %p202 = scmp.eq.s32.totalorder %s26, 1
      %p203 = por %p201, %p202
      %p204 = scmp.ne.s32.totalorder %s195, %s196
      %p205 = scmp.eq.s32.totalorder %s26, 0
      %p206 = por %p204, %p205
      %p207 = scmp.ne.s32.totalorder %s195, %s196
      %p208 = scmp.eq.s32.totalorder %s27, 1
      %p209 = por %p207, %p208
      %p211 = scmp.ne.s32.totalorder %s196, %s210
      %p212 = scmp.eq.s32.totalorder %s27, 0
      %p213 = por %p211, %p212
      %s215 = sadd.s32 %s214, 1
      %p218 = scmp.eq.s32.totalorder %s21, 1
      %p219 = scmp.ne.s32.totalorder %s214, %s216
      %p220 = scmp.eq.s32.totalorder %s21, 0
      %p221 = por %p219, %p220
      %p222 = scmp.ne.s32.totalorder %s214, %s216
      %p223 = scmp.eq.s32.totalorder %s26, 1
      %p224 = por %p222, %p223
      %p225 = scmp.ne.s32.totalorder %s216, %s217
      %p226 = scmp.eq.s32.totalorder %s26, 0
      %p227 = por %p225, %p226
      %p228 = scmp.ne.s32.totalorder %s216, %s217
      %p229 = scmp.eq.s32.totalorder %s27, 1
      %p230 = por %p228, %p229
      %p232 = scmp.ne.s32.totalorder %s217, %s231
      %p233 = scmp.eq.s32.totalorder %s27, 0
      %p234 = por %p232, %p233
      %s235 = ssub.s32 %s29, %s36
      %p236 = scmp.eq.s32.totalorder %s235, 0
      %s238 = sadd.s32 %s237, 1
      %s239 = scalar_select %p236, %s237, %s238
      %p242 = pneg %p236
      %p243 = scmp.eq.s32.totalorder %s21, 1
      %p244 = por %p242, %p243
      %p245 = scmp.ne.s32.totalorder %s237, %s240
      %p246 = scmp.eq.s32.totalorder %s21, 0
      %p247 = por %p245, %p246
      %p248 = scmp.ne.s32.totalorder %s237, %s240
      %p249 = scmp.eq.s32.totalorder %s26, 1
      %p250 = por %p248, %p249
      %p251 = scmp.ne.s32.totalorder %s240, %s241
      %p252 = scmp.eq.s32.totalorder %s26, 0
      %p253 = por %p251, %p252
      %p254 = scmp.ne.s32.totalorder %s240, %s241
      %p255 = scmp.eq.s32.totalorder %s27, 1
      %p256 = por %p254, %p255
      %p258 = scmp.ne.s32.totalorder %s241, %s257
      %p259 = scmp.eq.s32.totalorder %s27, 0
      %p260 = por %p258, %p259
      %p261 = scmp.le.s32.totalorder 1, %s21
      %p262 = scmp.lt.s32.totalorder %s21, 3
      %p263 = pnand %p261, %p262
      %p264 = pneg %p263
      // Predicated region
      $region9: #{discriminator_forward.1} parent=5 // pred_check
        _
      $region10: #{discriminator_forward.1} parent=5 // pred_check_branch
        %266 = sbr.rel (%p263) target = $region12
      $region11: #{discriminator_forward.1} parent=5 // pred_region
        %s267 = ssub.s32 %s21, 1
        // Predicated region
        $region13: #{discriminator_forward.1} parent=11 // pred_check
          %p268 = pneg %p59
        $region14: #{discriminator_forward.1} parent=11 // pred_check_branch
          %270 = sbr.rel (%p268) target = $region16
        $region15: #{discriminator_forward.1} parent=11 // pred_region
          %p271 = scmp.lt.s32.totalorder %s31, 0
          %s272 = scalar_select %p271, %s31, 0
          %s273 = smul.addr %s272, 2
          %s274 = smul.addr %s273, 4
          %s275 = scalar_lea.vmem %s0, %s274
        $region16: #{discriminator_forward.1} parent=11 // pred_fallthru
          _
        // Predicated region
        $region17: #{discriminator_forward.1} parent=11 // pred_check
          %p276 = pneg %p80
        $region18: #{discriminator_forward.1} parent=11 // pred_check_branch
          %278 = sbr.rel (%p276) target = $region20
        $region19: #{discriminator_forward.1} parent=11 // pred_region
          %s280 = ssub.s32 16384, 16384
          %281 = vsyncadd [#allocation6], %s280
          %s282 = sshll.u32 [#allocation5], 4
          %s283 = int_to_ptr.vmem [resolvable:$true] %s282
          %288 = dma.hbm_to_vmem [thread:$0]  %s1, 16384, %s283, [#allocation6], 512, 512, 32
        $region20: #{discriminator_forward.1} parent=11 // pred_fallthru
          _
        // Predicated region
        $region21: #{discriminator_forward.1} parent=11 // pred_check
          %p289 = pneg %p101
        $region22: #{discriminator_forward.1} parent=11 // pred_check_branch
          %291 = sbr.rel (%p289) target = $region24
        $region23: #{discriminator_forward.1} parent=11 // pred_region
          %s293 = ssub.s32 128, 128
          %294 = vsyncadd [#allocation8], %s293
          %s296 = sshll.u32 [#allocation7], 4
          %s297 = int_to_ptr.vmem [resolvable:$true] %s296
          %299 = dma.hbm_to_vmem [thread:$0]  %s2, 128, %s297, [#allocation8]
        $region24: #{discriminator_forward.1} parent=11 // pred_fallthru
          _
        // Predicated region
        $region25: #{discriminator_forward.1} parent=11 // pred_check
          %p300 = pneg %p122
        $region26: #{discriminator_forward.1} parent=11 // pred_check_branch
          %302 = sbr.rel (%p300) target = $region28
        $region27: #{discriminator_forward.1} parent=11 // pred_region
          %s304 = ssub.s32 128, 128
          %305 = vsyncadd [#allocation8], %s304
          %s307 = sshll.u32 [#allocation9], 4
          %s308 = int_to_ptr.vmem [resolvable:$true] %s307
          %310 = dma.hbm_to_vmem [thread:$0]  %s3, 128, %s308, [#allocation8]
        $region28: #{discriminator_forward.1} parent=11 // pred_fallthru
          _
        // Predicated region
        $region29: #{discriminator_forward.1} parent=11 // pred_check
          %p311 = pneg %p143
        $region30: #{discriminator_forward.1} parent=11 // pred_check_branch
          %313 = sbr.rel (%p311) target = $region32
        $region31: #{discriminator_forward.1} parent=11 // pred_region
          %s315 = ssub.s32 128, 128
          %316 = vsyncadd [#allocation11], %s315
          %s318 = sshll.u32 [#allocation10], 4
          %s319 = int_to_ptr.vmem [resolvable:$true] %s318
          %321 = dma.hbm_to_vmem [thread:$0]  %s4, 128, %s319, [#allocation11]
        $region32: #{discriminator_forward.1} parent=11 // pred_fallthru
          _
        // Predicated region
        $region33: #{discriminator_forward.1} parent=11 // pred_check
          %p322 = pneg %p164
        $region34: #{discriminator_forward.1} parent=11 // pred_check_branch
          %324 = sbr.rel (%p322) target = $region36
        $region35: #{discriminator_forward.1} parent=11 // pred_region
          %s326 = ssub.s32 65536, 65536
          %327 = vsyncadd [#allocation11], %s326
          %s328 = sshll.u32 [#allocation12], 4
          %s329 = int_to_ptr.vmem [resolvable:$true] %s328
          %334 = dma.hbm_to_vmem [thread:$0]  %s5, 65536, %s329, [#allocation11], 512, 512, 32
        $region36: #{discriminator_forward.1} parent=11 // pred_fallthru
          _
        // Predicated region
        $region37: #{discriminator_forward.1} parent=11 // pred_check
          %p335 = pneg %p185
        $region38: #{discriminator_forward.1} parent=11 // pred_check_branch
          %337 = sbr.rel (%p335) target = $region40
        $region39: #{discriminator_forward.1} parent=11 // pred_region
          %s339 = ssub.s32 128, 128
          %340 = vsyncadd [#allocation14], %s339
          %s342 = sshll.u32 [#allocation13], 4
          %s343 = int_to_ptr.vmem [resolvable:$true] %s342
          %345 = dma.hbm_to_vmem [thread:$0]  %s6, 128, %s343, [#allocation14]
        $region40: #{discriminator_forward.1} parent=11 // pred_fallthru
          _
        // Predicated region
        $region41: #{discriminator_forward.1} parent=11 // pred_check
          %p346 = pneg %p206
        $region42: #{discriminator_forward.1} parent=11 // pred_check_branch
          %348 = sbr.rel (%p346) target = $region44
        $region43: #{discriminator_forward.1} parent=11 // pred_region
          %s350 = ssub.s32 128, 128
          %351 = vsyncadd [#allocation14], %s350
          %s353 = sshll.u32 [#allocation15], 4
          %s354 = int_to_ptr.vmem [resolvable:$true] %s353
          %356 = dma.hbm_to_vmem [thread:$0]  %s7, 128, %s354, [#allocation14]
        $region44: #{discriminator_forward.1} parent=11 // pred_fallthru
          _
        // Predicated region
        $region45: #{discriminator_forward.1} parent=11 // pred_check
          %p357 = pneg %p227
        $region46: #{discriminator_forward.1} parent=11 // pred_check_branch
          %359 = sbr.rel (%p357) target = $region48
        $region47: #{discriminator_forward.1} parent=11 // pred_region
          _
        $region48: #{discriminator_forward.1} parent=11 // pred_fallthru
          _
      $region12: #{discriminator_forward.1} parent=5 // pred_fallthru
        _
      %p360 = scmp.lt.s32.totalorder %s21, 2
      // Predicated region
      $region49: #{discriminator_forward.1} parent=5 // pred_check
        %p361 = pneg %p360
      $region50: #{discriminator_forward.1} parent=5 // pred_check_branch
        %363 = sbr.rel (%p361) target = $region52
      $region51: #{discriminator_forward.1} parent=5 // pred_region
        _
      $region52: #{discriminator_forward.1} parent=5 // pred_fallthru
        _
      %p364 = scmp.le.s32.totalorder 1, %s21
      %p365 = scmp.lt.s32.totalorder %s21, 3
      %p366 = pnand %p364, %p365
      %p367 = pneg %p366
      // Predicated region
      $region53: #{discriminator_forward.1} parent=5 // pred_check
        _
      $region54: #{discriminator_forward.1} parent=5 // pred_check_branch
        %369 = sbr.rel (%p366) target = $region56
      $region55: #{discriminator_forward.1} parent=5 // pred_region
        %s370 = ssub.s32 %s21, 1
        // Predicated region
        $region57: #{discriminator_forward.1} parent=55 // pred_check
          %p371 = pneg %p80
        $region58: #{discriminator_forward.1} parent=55 // pred_check_branch
          %373 = sbr.rel (%p371) target = $region60
        $region59: #{discriminator_forward.1} parent=55 // pred_region
          %374 = dma.done [#allocation6], 16384
        $region60: #{discriminator_forward.1} parent=55 // pred_fallthru
          _
        // Predicated region
        $region61: #{discriminator_forward.1} parent=55 // pred_check
          %p375 = pneg %p101
        $region62: #{discriminator_forward.1} parent=55 // pred_check_branch
          %377 = sbr.rel (%p375) target = $region64
        $region63: #{discriminator_forward.1} parent=55 // pred_region
          %378 = dma.done [#allocation8], 128
        $region64: #{discriminator_forward.1} parent=55 // pred_fallthru
          _
        // Predicated region
        $region65: #{discriminator_forward.1} parent=55 // pred_check
          %p379 = pneg %p122
        $region66: #{discriminator_forward.1} parent=55 // pred_check_branch
          %381 = sbr.rel (%p379) target = $region68
        $region67: #{discriminator_forward.1} parent=55 // pred_region
          %382 = dma.done [#allocation8], 128
        $region68: #{discriminator_forward.1} parent=55 // pred_fallthru
          _
        // Predicated region
        $region69: #{discriminator_forward.1} parent=55 // pred_check
          %p383 = pneg %p143
        $region70: #{discriminator_forward.1} parent=55 // pred_check_branch
          %385 = sbr.rel (%p383) target = $region72
        $region71: #{discriminator_forward.1} parent=55 // pred_region
          %386 = dma.done [#allocation11], 128
        $region72: #{discriminator_forward.1} parent=55 // pred_fallthru
          _
        // Predicated region
        $region73: #{discriminator_forward.1} parent=55 // pred_check
          %p387 = pneg %p164
        $region74: #{discriminator_forward.1} parent=55 // pred_check_branch
          %389 = sbr.rel (%p387) target = $region76
        $region75: #{discriminator_forward.1} parent=55 // pred_region
          %390 = dma.done [#allocation11], 65536
        $region76: #{discriminator_forward.1} parent=55 // pred_fallthru
          _
        // Predicated region
        $region77: #{discriminator_forward.1} parent=55 // pred_check
          %p391 = pneg %p185
        $region78: #{discriminator_forward.1} parent=55 // pred_check_branch
          %393 = sbr.rel (%p391) target = $region80
        $region79: #{discriminator_forward.1} parent=55 // pred_region
          %394 = dma.done [#allocation14], 128
        $region80: #{discriminator_forward.1} parent=55 // pred_fallthru
          _
        // Predicated region
        $region81: #{discriminator_forward.1} parent=55 // pred_check
          %p395 = pneg %p206
        $region82: #{discriminator_forward.1} parent=55 // pred_check_branch
          %397 = sbr.rel (%p395) target = $region84
        $region83: #{discriminator_forward.1} parent=55 // pred_region
          %398 = dma.done [#allocation14], 128
        $region84: #{discriminator_forward.1} parent=55 // pred_fallthru
          _
        %p399 = scmp.lt.s32.totalorder %s31, 0
        %s400 = scalar_select %p399, %s31, 0
        %s401 = smul.addr %s400, 2
        %s402 = smul.addr %s401, 4
        %s403 = scalar_lea.vmem %s0, %s402
        %p404 = pneg %p59
        %p405 = pneg %p56
        %p406 = pneg %p80
        %p407 = pneg %p77
        %p408 = pneg %p101
        %p409 = pneg %p98
        %p410 = pneg %p122
        %p411 = pneg %p119
        %p412 = pneg %p143
        %p413 = pneg %p140
        %p414 = pneg %p164
        %p415 = pneg %p161
        %p416 = pneg %p185
        %p417 = pneg %p182
        %p418 = pneg %p206
        %p419 = pneg %p203
        %p420 = pneg %p227
        %p421 = pneg %p224
        %p422 = pneg %p253
        %p423 = pneg %p250
        %p424 = scmp.lt.s32.totalorder %s31, 0
        %s425 = scalar_select %p424, %s31, 0
        %s426 = smul.addr %s425, 8
        %s427 = scalar_lea.vmem %s9, %s426
        %p428 = scmp.lt.s32.totalorder %s31, 0
        %s429 = scalar_select %p428, %s31, 0
        %s430 = smul.addr %s429, 2
        %s431 = smul.addr %s430, 4
        %s432 = scalar_lea.vmem %s0, %s431
        %p433 = scmp.lt.s32.totalorder %s31, 0
        %s434 = scalar_select %p433, %s31, 0
        %s435 = smul.addr %s434, 8
        %s436 = scalar_lea.vmem %s9, %s435
        %v437 = vld [vmem:[%s432] sm:$0xff]
        %v438 = vld [vmem:[#allocation5] sm:$0xff]
        %v439 = vld [vmem:[#allocation5 + $0x8] sm:$0xff]
        %v440 = vld [vmem:[#allocation5 + $0x10] sm:$0xff]
        %v441 = vld [vmem:[#allocation5 + $0x18] sm:$0xff]
        %v442 = vld [vmem:[#allocation5 + $0x20] sm:$0xff]
        %v443 = vld [vmem:[#allocation5 + $0x28] sm:$0xff]
        %v444 = vld [vmem:[#allocation5 + $0x30] sm:$0xff]
        %v445 = vld [vmem:[#allocation5 + $0x38] sm:$0xff]
        %v446 = vld [vmem:[#allocation5 + $0x40] sm:$0xff]
        %v447 = vld [vmem:[#allocation5 + $0x48] sm:$0xff]
        %v448 = vld [vmem:[#allocation5 + $0x50] sm:$0xff]
        %v449 = vld [vmem:[#allocation5 + $0x58] sm:$0xff]
        %v450 = vld [vmem:[#allocation5 + $0x60] sm:$0xff]
        %v451 = vld [vmem:[#allocation5 + $0x68] sm:$0xff]
        %v452 = vld [vmem:[#allocation5 + $0x70] sm:$0xff]
        %v453 = vld [vmem:[#allocation5 + $0x78] sm:$0xff]
        %v454 = vld [vmem:[#allocation5 + $0x80] sm:$0xff]
        %v455 = vld [vmem:[#allocation5 + $0x88] sm:$0xff]
        %v456 = vld [vmem:[#allocation5 + $0x90] sm:$0xff]
        %v457 = vld [vmem:[#allocation5 + $0x98] sm:$0xff]
        %v458 = vld [vmem:[#allocation5 + $0xa0] sm:$0xff]
        %v459 = vld [vmem:[#allocation5 + $0xa8] sm:$0xff]
        %v460 = vld [vmem:[#allocation5 + $0xb0] sm:$0xff]
        %v461 = vld [vmem:[#allocation5 + $0xb8] sm:$0xff]
        %v462 = vld [vmem:[#allocation5 + $0xc0] sm:$0xff]
        %v463 = vld [vmem:[#allocation5 + $0xc8] sm:$0xff]
        %v464 = vld [vmem:[#allocation5 + $0xd0] sm:$0xff]
        %v465 = vld [vmem:[#allocation5 + $0xd8] sm:$0xff]
        %v466 = vld [vmem:[#allocation5 + $0xe0] sm:$0xff]
        %v467 = vld [vmem:[#allocation5 + $0xe8] sm:$0xff]
        %v468 = vld [vmem:[#allocation5 + $0xf0] sm:$0xff]
        %v469 = vld [vmem:[#allocation5 + $0xf8] sm:$0xff]
        %v470 = vld [vmem:[#allocation5 + $0x100] sm:$0xff]
        %v471 = vld [vmem:[#allocation5 + $0x108] sm:$0xff]
        %v472 = vld [vmem:[#allocation5 + $0x110] sm:$0xff]
        %v473 = vld [vmem:[#allocation5 + $0x118] sm:$0xff]
        %v474 = vld [vmem:[#allocation5 + $0x120] sm:$0xff]
        %v475 = vld [vmem:[#allocation5 + $0x128] sm:$0xff]
        %v476 = vld [vmem:[#allocation5 + $0x130] sm:$0xff]
        %v477 = vld [vmem:[#allocation5 + $0x138] sm:$0xff]
        %v478 = vld [vmem:[#allocation5 + $0x140] sm:$0xff]
        %v479 = vld [vmem:[#allocation5 + $0x148] sm:$0xff]
        %v480 = vld [vmem:[#allocation5 + $0x150] sm:$0xff]
        %v481 = vld [vmem:[#allocation5 + $0x158] sm:$0xff]
        %v482 = vld [vmem:[#allocation5 + $0x160] sm:$0xff]
        %v483 = vld [vmem:[#allocation5 + $0x168] sm:$0xff]
        %v484 = vld [vmem:[#allocation5 + $0x170] sm:$0xff]
        %v485 = vld [vmem:[#allocation5 + $0x178] sm:$0xff]
        %v486 = vld [vmem:[#allocation5 + $0x180] sm:$0xff]
        %v487 = vld [vmem:[#allocation5 + $0x188] sm:$0xff]
        %v488 = vld [vmem:[#allocation5 + $0x190] sm:$0xff]
        %v489 = vld [vmem:[#allocation5 + $0x198] sm:$0xff]
        %v490 = vld [vmem:[#allocation5 + $0x1a0] sm:$0xff]
        %v491 = vld [vmem:[#allocation5 + $0x1a8] sm:$0xff]
        %v492 = vld [vmem:[#allocation5 + $0x1b0] sm:$0xff]
        %v493 = vld [vmem:[#allocation5 + $0x1b8] sm:$0xff]
        %v494 = vld [vmem:[#allocation5 + $0x1c0] sm:$0xff]
        %v495 = vld [vmem:[#allocation5 + $0x1c8] sm:$0xff]
        %v496 = vld [vmem:[#allocation5 + $0x1d0] sm:$0xff]
        %v497 = vld [vmem:[#allocation5 + $0x1d8] sm:$0xff]
        %v498 = vld [vmem:[#allocation5 + $0x1e0] sm:$0xff]
        %v499 = vld [vmem:[#allocation5 + $0x1e8] sm:$0xff]
        %v500 = vld [vmem:[#allocation5 + $0x1f0] sm:$0xff]
        %v501 = vld [vmem:[#allocation5 + $0x1f8] sm:$0xff]
        %v502 = vld [vmem:[#allocation5 + $0x200] sm:$0xff]
        %v503 = vld [vmem:[#allocation5 + $0x208] sm:$0xff]
        %v504 = vld [vmem:[#allocation5 + $0x210] sm:$0xff]
        %v505 = vld [vmem:[#allocation5 + $0x218] sm:$0xff]
        %v506 = vld [vmem:[#allocation5 + $0x220] sm:$0xff]
        %v507 = vld [vmem:[#allocation5 + $0x228] sm:$0xff]
        %v508 = vld [vmem:[#allocation5 + $0x230] sm:$0xff]
        %v509 = vld [vmem:[#allocation5 + $0x238] sm:$0xff]
        %v510 = vld [vmem:[#allocation5 + $0x240] sm:$0xff]
        %v511 = vld [vmem:[#allocation5 + $0x248] sm:$0xff]
        %v512 = vld [vmem:[#allocation5 + $0x250] sm:$0xff]
        %v513 = vld [vmem:[#allocation5 + $0x258] sm:$0xff]
        %v514 = vld [vmem:[#allocation5 + $0x260] sm:$0xff]
        %v515 = vld [vmem:[#allocation5 + $0x268] sm:$0xff]
        %v516 = vld [vmem:[#allocation5 + $0x270] sm:$0xff]
        %v517 = vld [vmem:[#allocation5 + $0x278] sm:$0xff]
        %v518 = vld [vmem:[#allocation5 + $0x280] sm:$0xff]
        %v519 = vld [vmem:[#allocation5 + $0x288] sm:$0xff]
        %v520 = vld [vmem:[#allocation5 + $0x290] sm:$0xff]
        %v521 = vld [vmem:[#allocation5 + $0x298] sm:$0xff]
        %v522 = vld [vmem:[#allocation5 + $0x2a0] sm:$0xff]
        %v523 = vld [vmem:[#allocation5 + $0x2a8] sm:$0xff]
        %v524 = vld [vmem:[#allocation5 + $0x2b0] sm:$0xff]
        %v525 = vld [vmem:[#allocation5 + $0x2b8] sm:$0xff]
        %v526 = vld [vmem:[#allocation5 + $0x2c0] sm:$0xff]
        %v527 = vld [vmem:[#allocation5 + $0x2c8] sm:$0xff]
        %v528 = vld [vmem:[#allocation5 + $0x2d0] sm:$0xff]
        %v529 = vld [vmem:[#allocation5 + $0x2d8] sm:$0xff]
        %v530 = vld [vmem:[#allocation5 + $0x2e0] sm:$0xff]
        %v531 = vld [vmem:[#allocation5 + $0x2e8] sm:$0xff]
        %v532 = vld [vmem:[#allocation5 + $0x2f0] sm:$0xff]
        %v533 = vld [vmem:[#allocation5 + $0x2f8] sm:$0xff]
        %v534 = vld [vmem:[#allocation5 + $0x300] sm:$0xff]
        %v535 = vld [vmem:[#allocation5 + $0x308] sm:$0xff]
        %v536 = vld [vmem:[#allocation5 + $0x310] sm:$0xff]
        %v537 = vld [vmem:[#allocation5 + $0x318] sm:$0xff]
        %v538 = vld [vmem:[#allocation5 + $0x320] sm:$0xff]
        %v539 = vld [vmem:[#allocation5 + $0x328] sm:$0xff]
        %v540 = vld [vmem:[#allocation5 + $0x330] sm:$0xff]
        %v541 = vld [vmem:[#allocation5 + $0x338] sm:$0xff]
        %v542 = vld [vmem:[#allocation5 + $0x340] sm:$0xff]
        %v543 = vld [vmem:[#allocation5 + $0x348] sm:$0xff]
        %v544 = vld [vmem:[#allocation5 + $0x350] sm:$0xff]
        %v545 = vld [vmem:[#allocation5 + $0x358] sm:$0xff]
        %v546 = vld [vmem:[#allocation5 + $0x360] sm:$0xff]
        %v547 = vld [vmem:[#allocation5 + $0x368] sm:$0xff]
        %v548 = vld [vmem:[#allocation5 + $0x370] sm:$0xff]
        %v549 = vld [vmem:[#allocation5 + $0x378] sm:$0xff]
        %v550 = vld [vmem:[#allocation5 + $0x380] sm:$0xff]
        %v551 = vld [vmem:[#allocation5 + $0x388] sm:$0xff]
        %v552 = vld [vmem:[#allocation5 + $0x390] sm:$0xff]
        %v553 = vld [vmem:[#allocation5 + $0x398] sm:$0xff]
        %v554 = vld [vmem:[#allocation5 + $0x3a0] sm:$0xff]
        %v555 = vld [vmem:[#allocation5 + $0x3a8] sm:$0xff]
        %v556 = vld [vmem:[#allocation5 + $0x3b0] sm:$0xff]
        %v557 = vld [vmem:[#allocation5 + $0x3b8] sm:$0xff]
        %v558 = vld [vmem:[#allocation5 + $0x3c0] sm:$0xff]
        %v559 = vld [vmem:[#allocation5 + $0x3c8] sm:$0xff]
        %v560 = vld [vmem:[#allocation5 + $0x3d0] sm:$0xff]
        %v561 = vld [vmem:[#allocation5 + $0x3d8] sm:$0xff]
        %v562 = vld [vmem:[#allocation5 + $0x3e0] sm:$0xff]
        %v563 = vld [vmem:[#allocation5 + $0x3e8] sm:$0xff]
        %v564 = vld [vmem:[#allocation5 + $0x3f0] sm:$0xff]
        %v565 = vld [vmem:[#allocation5 + $0x3f8] sm:$0xff]
        %v566 = vld [vmem:[#allocation7] sm:$0xff]
        %v568 = vlaneseq
        %v569 = vshrl.u32 %v568, 7
        %v570 = vsub.s32 0, %v569
        %v571 = vrot.slane %v566, %v570
        %v572 = vlaneseq
        %v573 = vshrl.u32 %v572, 7
        %v574 = vsub.s32 1, %v573
        %v575 = vrot.slane %v566, %v574
        %v576 = vlaneseq
        %v577 = vshrl.u32 %v576, 7
        %v578 = vsub.s32 2, %v577
        %v579 = vrot.slane %v566, %v578
        %v580 = vlaneseq
        %v581 = vshrl.u32 %v580, 7
        %v582 = vsub.s32 3, %v581
        %v583 = vrot.slane %v566, %v582
        %v584 = vlaneseq
        %v585 = vshrl.u32 %v584, 7
        %v586 = vsub.s32 4, %v585
        %v587 = vrot.slane %v566, %v586
        %v588 = vlaneseq
        %v589 = vshrl.u32 %v588, 7
        %v590 = vsub.s32 5, %v589
        %v591 = vrot.slane %v566, %v590
        %v592 = vlaneseq
        %v593 = vshrl.u32 %v592, 7
        %v594 = vsub.s32 6, %v593
        %v595 = vrot.slane %v566, %v594
        %v596 = vlaneseq
        %v597 = vshrl.u32 %v596, 7
        %v598 = vsub.s32 7, %v597
        %v599 = vrot.slane %v566, %v598
        %v609 = vunpack.c.l.b16 %v437
        %v610 = vunpack.c.h.b16 %v437
        %v611 = vpack.c.b16 %v609, %v609
        %v612 = vpack.c.b16 %v610, %v610
        %v743 = vunpack.c.l.b16 %v438
        %v744 = vunpack.c.h.b16 %v438
        %v745 = vunpack.c.l.b16 %v439
        %v746 = vunpack.c.h.b16 %v439
        %v747 = vunpack.c.l.b16 %v440
        %v748 = vunpack.c.h.b16 %v440
        %v749 = vunpack.c.l.b16 %v441
        %v750 = vunpack.c.h.b16 %v441
        %v751 = vunpack.c.l.b16 %v442
        %v752 = vunpack.c.h.b16 %v442
        %v753 = vunpack.c.l.b16 %v443
        %v754 = vunpack.c.h.b16 %v443
        %v755 = vunpack.c.l.b16 %v444
        %v756 = vunpack.c.h.b16 %v444
        %v757 = vunpack.c.l.b16 %v445
        %v758 = vunpack.c.h.b16 %v445
        %v759 = vunpack.c.l.b16 %v446
        %v760 = vunpack.c.h.b16 %v446
        %v761 = vunpack.c.l.b16 %v447
        %v762 = vunpack.c.h.b16 %v447
        %v763 = vunpack.c.l.b16 %v448
        %v764 = vunpack.c.h.b16 %v448
        %v765 = vunpack.c.l.b16 %v449
        %v766 = vunpack.c.h.b16 %v449
        %v767 = vunpack.c.l.b16 %v450
        %v768 = vunpack.c.h.b16 %v450
        %v769 = vunpack.c.l.b16 %v451
        %v770 = vunpack.c.h.b16 %v451
        %v771 = vunpack.c.l.b16 %v452
        %v772 = vunpack.c.h.b16 %v452
        %v773 = vunpack.c.l.b16 %v453
        %v774 = vunpack.c.h.b16 %v453
        %v775 = vunpack.c.l.b16 %v454
        %v776 = vunpack.c.h.b16 %v454
        %v777 = vunpack.c.l.b16 %v455
        %v778 = vunpack.c.h.b16 %v455
        %v779 = vunpack.c.l.b16 %v456
        %v780 = vunpack.c.h.b16 %v456
        %v781 = vunpack.c.l.b16 %v457
        %v782 = vunpack.c.h.b16 %v457
        %v783 = vunpack.c.l.b16 %v458
        %v784 = vunpack.c.h.b16 %v458
        %v785 = vunpack.c.l.b16 %v459
        %v786 = vunpack.c.h.b16 %v459
        %v787 = vunpack.c.l.b16 %v460
        %v788 = vunpack.c.h.b16 %v460
        %v789 = vunpack.c.l.b16 %v461
        %v790 = vunpack.c.h.b16 %v461
        %v791 = vunpack.c.l.b16 %v462
        %v792 = vunpack.c.h.b16 %v462
        %v793 = vunpack.c.l.b16 %v463
        %v794 = vunpack.c.h.b16 %v463
        %v795 = vunpack.c.l.b16 %v464
        %v796 = vunpack.c.h.b16 %v464
        %v797 = vunpack.c.l.b16 %v465
        %v798 = vunpack.c.h.b16 %v465
        %v799 = vunpack.c.l.b16 %v466
        %v800 = vunpack.c.h.b16 %v466
        %v801 = vunpack.c.l.b16 %v467
        %v802 = vunpack.c.h.b16 %v467
        %v803 = vunpack.c.l.b16 %v468
        %v804 = vunpack.c.h.b16 %v468
        %v805 = vunpack.c.l.b16 %v469
        %v806 = vunpack.c.h.b16 %v469
        %v807 = vunpack.c.l.b16 %v470
        %v808 = vunpack.c.h.b16 %v470
        %v809 = vunpack.c.l.b16 %v471
        %v810 = vunpack.c.h.b16 %v471
        %v811 = vunpack.c.l.b16 %v472
        %v812 = vunpack.c.h.b16 %v472
        %v813 = vunpack.c.l.b16 %v473
        %v814 = vunpack.c.h.b16 %v473
        %v815 = vunpack.c.l.b16 %v474
        %v816 = vunpack.c.h.b16 %v474
        %v817 = vunpack.c.l.b16 %v475
        %v818 = vunpack.c.h.b16 %v475
        %v819 = vunpack.c.l.b16 %v476
        %v820 = vunpack.c.h.b16 %v476
        %v821 = vunpack.c.l.b16 %v477
        %v822 = vunpack.c.h.b16 %v477
        %v823 = vunpack.c.l.b16 %v478
        %v824 = vunpack.c.h.b16 %v478
        %v825 = vunpack.c.l.b16 %v479
        %v826 = vunpack.c.h.b16 %v479
        %v827 = vunpack.c.l.b16 %v480
        %v828 = vunpack.c.h.b16 %v480
        %v829 = vunpack.c.l.b16 %v481
        %v830 = vunpack.c.h.b16 %v481
        %v831 = vunpack.c.l.b16 %v482
        %v832 = vunpack.c.h.b16 %v482
        %v833 = vunpack.c.l.b16 %v483
        %v834 = vunpack.c.h.b16 %v483
        %v835 = vunpack.c.l.b16 %v484
        %v836 = vunpack.c.h.b16 %v484
        %v837 = vunpack.c.l.b16 %v485
        %v838 = vunpack.c.h.b16 %v485
        %v839 = vunpack.c.l.b16 %v486
        %v840 = vunpack.c.h.b16 %v486
        %v841 = vunpack.c.l.b16 %v487
        %v842 = vunpack.c.h.b16 %v487
        %v843 = vunpack.c.l.b16 %v488
        %v844 = vunpack.c.h.b16 %v488
        %v845 = vunpack.c.l.b16 %v489
        %v846 = vunpack.c.h.b16 %v489
        %v847 = vunpack.c.l.b16 %v490
        %v848 = vunpack.c.h.b16 %v490
        %v849 = vunpack.c.l.b16 %v491
        %v850 = vunpack.c.h.b16 %v491
        %v851 = vunpack.c.l.b16 %v492
        %v852 = vunpack.c.h.b16 %v492
        %v853 = vunpack.c.l.b16 %v493
        %v854 = vunpack.c.h.b16 %v493
        %v855 = vunpack.c.l.b16 %v494
        %v856 = vunpack.c.h.b16 %v494
        %v857 = vunpack.c.l.b16 %v495
        %v858 = vunpack.c.h.b16 %v495
        %v859 = vunpack.c.l.b16 %v496
        %v860 = vunpack.c.h.b16 %v496
        %v861 = vunpack.c.l.b16 %v497
        %v862 = vunpack.c.h.b16 %v497
        %v863 = vunpack.c.l.b16 %v498
        %v864 = vunpack.c.h.b16 %v498
        %v865 = vunpack.c.l.b16 %v499
        %v866 = vunpack.c.h.b16 %v499
        %v867 = vunpack.c.l.b16 %v500
        %v868 = vunpack.c.h.b16 %v500
        %v869 = vunpack.c.l.b16 %v501
        %v870 = vunpack.c.h.b16 %v501
        %v871 = vunpack.c.l.b16 %v502
        %v872 = vunpack.c.h.b16 %v502
        %v873 = vunpack.c.l.b16 %v503
        %v874 = vunpack.c.h.b16 %v503
        %v875 = vunpack.c.l.b16 %v504
        %v876 = vunpack.c.h.b16 %v504
        %v877 = vunpack.c.l.b16 %v505
        %v878 = vunpack.c.h.b16 %v505
        %v879 = vunpack.c.l.b16 %v506
        %v880 = vunpack.c.h.b16 %v506
        %v881 = vunpack.c.l.b16 %v507
        %v882 = vunpack.c.h.b16 %v507
        %v883 = vunpack.c.l.b16 %v508
        %v884 = vunpack.c.h.b16 %v508
        %v885 = vunpack.c.l.b16 %v509
        %v886 = vunpack.c.h.b16 %v509
        %v887 = vunpack.c.l.b16 %v510
        %v888 = vunpack.c.h.b16 %v510
        %v889 = vunpack.c.l.b16 %v511
        %v890 = vunpack.c.h.b16 %v511
        %v891 = vunpack.c.l.b16 %v512
        %v892 = vunpack.c.h.b16 %v512
        %v893 = vunpack.c.l.b16 %v513
        %v894 = vunpack.c.h.b16 %v513
        %v895 = vunpack.c.l.b16 %v514
        %v896 = vunpack.c.h.b16 %v514
        %v897 = vunpack.c.l.b16 %v515
        %v898 = vunpack.c.h.b16 %v515
        %v899 = vunpack.c.l.b16 %v516
        %v900 = vunpack.c.h.b16 %v516
        %v901 = vunpack.c.l.b16 %v517
        %v902 = vunpack.c.h.b16 %v517
        %v903 = vunpack.c.l.b16 %v518
        %v904 = vunpack.c.h.b16 %v518
        %v905 = vunpack.c.l.b16 %v519
        %v906 = vunpack.c.h.b16 %v519
        %v907 = vunpack.c.l.b16 %v520
        %v908 = vunpack.c.h.b16 %v520
        %v909 = vunpack.c.l.b16 %v521
        %v910 = vunpack.c.h.b16 %v521
        %v911 = vunpack.c.l.b16 %v522
        %v912 = vunpack.c.h.b16 %v522
        %v913 = vunpack.c.l.b16 %v523
        %v914 = vunpack.c.h.b16 %v523
        %v915 = vunpack.c.l.b16 %v524
        %v916 = vunpack.c.h.b16 %v524
        %v917 = vunpack.c.l.b16 %v525
        %v918 = vunpack.c.h.b16 %v525
        %v919 = vunpack.c.l.b16 %v526
        %v920 = vunpack.c.h.b16 %v526
        %v921 = vunpack.c.l.b16 %v527
        %v922 = vunpack.c.h.b16 %v527
        %v923 = vunpack.c.l.b16 %v528
        %v924 = vunpack.c.h.b16 %v528
        %v925 = vunpack.c.l.b16 %v529
        %v926 = vunpack.c.h.b16 %v529
        %v927 = vunpack.c.l.b16 %v530
        %v928 = vunpack.c.h.b16 %v530
        %v929 = vunpack.c.l.b16 %v531
        %v930 = vunpack.c.h.b16 %v531
        %v931 = vunpack.c.l.b16 %v532
        %v932 = vunpack.c.h.b16 %v532
        %v933 = vunpack.c.l.b16 %v533
        %v934 = vunpack.c.h.b16 %v533
        %v935 = vunpack.c.l.b16 %v534
        %v936 = vunpack.c.h.b16 %v534
        %v937 = vunpack.c.l.b16 %v535
        %v938 = vunpack.c.h.b16 %v535
        %v939 = vunpack.c.l.b16 %v536
        %v940 = vunpack.c.h.b16 %v536
        %v941 = vunpack.c.l.b16 %v537
        %v942 = vunpack.c.h.b16 %v537
        %v943 = vunpack.c.l.b16 %v538
        %v944 = vunpack.c.h.b16 %v538
        %v945 = vunpack.c.l.b16 %v539
        %v946 = vunpack.c.h.b16 %v539
        %v947 = vunpack.c.l.b16 %v540
        %v948 = vunpack.c.h.b16 %v540
        %v949 = vunpack.c.l.b16 %v541
        %v950 = vunpack.c.h.b16 %v541
        %v951 = vunpack.c.l.b16 %v542
        %v952 = vunpack.c.h.b16 %v542
        %v953 = vunpack.c.l.b16 %v543
        %v954 = vunpack.c.h.b16 %v543
        %v955 = vunpack.c.l.b16 %v544
        %v956 = vunpack.c.h.b16 %v544
        %v957 = vunpack.c.l.b16 %v545
        %v958 = vunpack.c.h.b16 %v545
        %v959 = vunpack.c.l.b16 %v546
        %v960 = vunpack.c.h.b16 %v546
        %v961 = vunpack.c.l.b16 %v547
        %v962 = vunpack.c.h.b16 %v547
        %v963 = vunpack.c.l.b16 %v548
        %v964 = vunpack.c.h.b16 %v548
        %v965 = vunpack.c.l.b16 %v549
        %v966 = vunpack.c.h.b16 %v549
        %v967 = vunpack.c.l.b16 %v550
        %v968 = vunpack.c.h.b16 %v550
        %v969 = vunpack.c.l.b16 %v551
        %v970 = vunpack.c.h.b16 %v551
        %v971 = vunpack.c.l.b16 %v552
        %v972 = vunpack.c.h.b16 %v552
        %v973 = vunpack.c.l.b16 %v553
        %v974 = vunpack.c.h.b16 %v553
        %v975 = vunpack.c.l.b16 %v554
        %v976 = vunpack.c.h.b16 %v554
        %v977 = vunpack.c.l.b16 %v555
        %v978 = vunpack.c.h.b16 %v555
        %v979 = vunpack.c.l.b16 %v556
        %v980 = vunpack.c.h.b16 %v556
        %v981 = vunpack.c.l.b16 %v557
        %v982 = vunpack.c.h.b16 %v557
        %v983 = vunpack.c.l.b16 %v558
        %v984 = vunpack.c.h.b16 %v558
        %v985 = vunpack.c.l.b16 %v559
        %v986 = vunpack.c.h.b16 %v559
        %v987 = vunpack.c.l.b16 %v560
        %v988 = vunpack.c.h.b16 %v560
        %v989 = vunpack.c.l.b16 %v561
        %v990 = vunpack.c.h.b16 %v561
        %v991 = vunpack.c.l.b16 %v562
        %v992 = vunpack.c.h.b16 %v562
        %v993 = vunpack.c.l.b16 %v563
        %v994 = vunpack.c.h.b16 %v563
        %v995 = vunpack.c.l.b16 %v564
        %v996 = vunpack.c.h.b16 %v564
        %v997 = vunpack.c.l.b16 %v565
        %v998 = vunpack.c.h.b16 %v565
        %v999 = vpack.c.b16 %v751, %v743
        %v1000 = vpack.c.b16 %v752, %v744
        %v1001 = vpack.c.b16 %v753, %v745
        %v1002 = vpack.c.b16 %v754, %v746
        %v1003 = vpack.c.b16 %v755, %v747
        %v1004 = vpack.c.b16 %v756, %v748
        %v1005 = vpack.c.b16 %v757, %v749
        %v1006 = vpack.c.b16 %v758, %v750
        %v1007 = vpack.c.b16 %v767, %v759
        %v1008 = vpack.c.b16 %v768, %v760
        %v1009 = vpack.c.b16 %v769, %v761
        %v1010 = vpack.c.b16 %v770, %v762
        %v1011 = vpack.c.b16 %v771, %v763
        %v1012 = vpack.c.b16 %v772, %v764
        %v1013 = vpack.c.b16 %v773, %v765
        %v1014 = vpack.c.b16 %v774, %v766
        %v1015 = vpack.c.b16 %v783, %v775
        %v1016 = vpack.c.b16 %v784, %v776
        %v1017 = vpack.c.b16 %v785, %v777
        %v1018 = vpack.c.b16 %v786, %v778
        %v1019 = vpack.c.b16 %v787, %v779
        %v1020 = vpack.c.b16 %v788, %v780
        %v1021 = vpack.c.b16 %v789, %v781
        %v1022 = vpack.c.b16 %v790, %v782
        %v1023 = vpack.c.b16 %v799, %v791
        %v1024 = vpack.c.b16 %v800, %v792
        %v1025 = vpack.c.b16 %v801, %v793
        %v1026 = vpack.c.b16 %v802, %v794
        %v1027 = vpack.c.b16 %v803, %v795
        %v1028 = vpack.c.b16 %v804, %v796
        %v1029 = vpack.c.b16 %v805, %v797
        %v1030 = vpack.c.b16 %v806, %v798
        %v1031 = vpack.c.b16 %v815, %v807
        %v1032 = vpack.c.b16 %v816, %v808
        %v1033 = vpack.c.b16 %v817, %v809
        %v1034 = vpack.c.b16 %v818, %v810
        %v1035 = vpack.c.b16 %v819, %v811
        %v1036 = vpack.c.b16 %v820, %v812
        %v1037 = vpack.c.b16 %v821, %v813
        %v1038 = vpack.c.b16 %v822, %v814
        %v1039 = vpack.c.b16 %v831, %v823
        %v1040 = vpack.c.b16 %v832, %v824
        %v1041 = vpack.c.b16 %v833, %v825
        %v1042 = vpack.c.b16 %v834, %v826
        %v1043 = vpack.c.b16 %v835, %v827
        %v1044 = vpack.c.b16 %v836, %v828
        %v1045 = vpack.c.b16 %v837, %v829
        %v1046 = vpack.c.b16 %v838, %v830
        %v1047 = vpack.c.b16 %v847, %v839
        %v1048 = vpack.c.b16 %v848, %v840
        %v1049 = vpack.c.b16 %v849, %v841
        %v1050 = vpack.c.b16 %v850, %v842
        %v1051 = vpack.c.b16 %v851, %v843
        %v1052 = vpack.c.b16 %v852, %v844
        %v1053 = vpack.c.b16 %v853, %v845
        %v1054 = vpack.c.b16 %v854, %v846
        %v1055 = vpack.c.b16 %v863, %v855
        %v1056 = vpack.c.b16 %v864, %v856
        %v1057 = vpack.c.b16 %v865, %v857
        %v1058 = vpack.c.b16 %v866, %v858
        %v1059 = vpack.c.b16 %v867, %v859
        %v1060 = vpack.c.b16 %v868, %v860
        %v1061 = vpack.c.b16 %v869, %v861
        %v1062 = vpack.c.b16 %v870, %v862
        %v1063 = vpack.c.b16 %v879, %v871
        %v1064 = vpack.c.b16 %v880, %v872
        %v1065 = vpack.c.b16 %v881, %v873
        %v1066 = vpack.c.b16 %v882, %v874
        %v1067 = vpack.c.b16 %v883, %v875
        %v1068 = vpack.c.b16 %v884, %v876
        %v1069 = vpack.c.b16 %v885, %v877
        %v1070 = vpack.c.b16 %v886, %v878
        %v1071 = vpack.c.b16 %v895, %v887
        %v1072 = vpack.c.b16 %v896, %v888
        %v1073 = vpack.c.b16 %v897, %v889
        %v1074 = vpack.c.b16 %v898, %v890
        %v1075 = vpack.c.b16 %v899, %v891
        %v1076 = vpack.c.b16 %v900, %v892
        %v1077 = vpack.c.b16 %v901, %v893
        %v1078 = vpack.c.b16 %v902, %v894
        %v1079 = vpack.c.b16 %v911, %v903
        %v1080 = vpack.c.b16 %v912, %v904
        %v1081 = vpack.c.b16 %v913, %v905
        %v1082 = vpack.c.b16 %v914, %v906
        %v1083 = vpack.c.b16 %v915, %v907
        %v1084 = vpack.c.b16 %v916, %v908
        %v1085 = vpack.c.b16 %v917, %v909
        %v1086 = vpack.c.b16 %v918, %v910
        %v1087 = vpack.c.b16 %v927, %v919
        %v1088 = vpack.c.b16 %v928, %v920
        %v1089 = vpack.c.b16 %v929, %v921
        %v1090 = vpack.c.b16 %v930, %v922
        %v1091 = vpack.c.b16 %v931, %v923
        %v1092 = vpack.c.b16 %v932, %v924
        %v1093 = vpack.c.b16 %v933, %v925
        %v1094 = vpack.c.b16 %v934, %v926
        %v1095 = vpack.c.b16 %v943, %v935
        %v1096 = vpack.c.b16 %v944, %v936
        %v1097 = vpack.c.b16 %v945, %v937
        %v1098 = vpack.c.b16 %v946, %v938
        %v1099 = vpack.c.b16 %v947, %v939
        %v1100 = vpack.c.b16 %v948, %v940
        %v1101 = vpack.c.b16 %v949, %v941
        %v1102 = vpack.c.b16 %v950, %v942
        %v1103 = vpack.c.b16 %v959, %v951
        %v1104 = vpack.c.b16 %v960, %v952
        %v1105 = vpack.c.b16 %v961, %v953
        %v1106 = vpack.c.b16 %v962, %v954
        %v1107 = vpack.c.b16 %v963, %v955
        %v1108 = vpack.c.b16 %v964, %v956
        %v1109 = vpack.c.b16 %v965, %v957
        %v1110 = vpack.c.b16 %v966, %v958
        %v1111 = vpack.c.b16 %v975, %v967
        %v1112 = vpack.c.b16 %v976, %v968
        %v1113 = vpack.c.b16 %v977, %v969
        %v1114 = vpack.c.b16 %v978, %v970
        %v1115 = vpack.c.b16 %v979, %v971
        %v1116 = vpack.c.b16 %v980, %v972
        %v1117 = vpack.c.b16 %v981, %v973
        %v1118 = vpack.c.b16 %v982, %v974
        %v1119 = vpack.c.b16 %v991, %v983
        %v1120 = vpack.c.b16 %v992, %v984
        %v1121 = vpack.c.b16 %v993, %v985
        %v1122 = vpack.c.b16 %v994, %v986
        %v1123 = vpack.c.b16 %v995, %v987
        %v1124 = vpack.c.b16 %v996, %v988
        %v1125 = vpack.c.b16 %v997, %v989
        %v1126 = vpack.c.b16 %v998, %v990
        %1255 = vmatprep.subr.bf16.mxu0 %v1000
        %1256 = vmatpush1.bf16.msra.mxu0 %v999
        %1257 = vmatprep.subr.bf16.mxu0 %v1008
        %1258 = vmatpush1.bf16.msra.mxu0 %v1007
        %1259 = vmatprep.subr.bf16.mxu0 %v1016
        %1260 = vmatpush1.bf16.msra.mxu0 %v1015
        %1261 = vmatprep.subr.bf16.mxu0 %v1024
        %1262 = vmatpush1.bf16.msra.mxu0 %v1023
        %1263 = vmatprep.subr.bf16.mxu0 %v1032
        %1264 = vmatpush1.bf16.msra.mxu0 %v1031
        %1265 = vmatprep.subr.bf16.mxu0 %v1040
        %1266 = vmatpush1.bf16.msra.mxu0 %v1039
        %1267 = vmatprep.subr.bf16.mxu0 %v1048
        %1268 = vmatpush1.bf16.msra.mxu0 %v1047
        %1269 = vmatprep.subr.bf16.mxu0 %v1056
        %1270 = vmatpush1.bf16.msra.mxu0 %v1055
        %1271 = vmatprep.subr.bf16.mxu0 %v1064
        %1272 = vmatpush1.bf16.msra.mxu0 %v1063
        %1273 = vmatprep.subr.bf16.mxu0 %v1072
        %1274 = vmatpush1.bf16.msra.mxu0 %v1071
        %1275 = vmatprep.subr.bf16.mxu0 %v1080
        %1276 = vmatpush1.bf16.msra.mxu0 %v1079
        %1277 = vmatprep.subr.bf16.mxu0 %v1088
        %1278 = vmatpush1.bf16.msra.mxu0 %v1087
        %1279 = vmatprep.subr.bf16.mxu0 %v1096
        %1280 = vmatpush1.bf16.msra.mxu0 %v1095
        %1281 = vmatprep.subr.bf16.mxu0 %v1104
        %1282 = vmatpush1.bf16.msra.mxu0 %v1103
        %1283 = vmatprep.subr.bf16.mxu0 %v1112
        %1284 = vmatpush1.bf16.msra.mxu0 %v1111
        %1285 = vmatprep.subr.bf16.mxu0 %v1120
        %1286 = vmatpush1.bf16.msra.mxu0 %v1119
        %1287 = vmatprep.mubr.bf16.mxu0 %v612
        %1288 = vmatmul.mubr.bf16.gmra.mrb[0].mxu0 %v611
        %v1289 = vpop.f32.mrb[0].mxu0
        %v1290 = vadd.f32 %v571, %v1289
        %v1291 = vpop.f32.mrb[0].mxu0
        %v1292 = vadd.f32 %v575, %v1291
        %v1293 = vpop.f32.mrb[0].mxu0
        %v1294 = vpop.f32.mrb[0].mxu0
        %1295 = vdwg.mxu0
        %1296 = vmatprep.subr.bf16.mxu0 %v1002
        %1297 = vmatpush1.bf16.msra.mxu0 %v1001
        %1298 = vmatprep.subr.bf16.mxu0 %v1010
        %1299 = vmatpush1.bf16.msra.mxu0 %v1009
        %1300 = vmatprep.subr.bf16.mxu0 %v1018
        %1301 = vmatpush1.bf16.msra.mxu0 %v1017
        %1302 = vmatprep.subr.bf16.mxu0 %v1026
        %1303 = vmatpush1.bf16.msra.mxu0 %v1025
        %1304 = vmatprep.subr.bf16.mxu0 %v1034
        %1305 = vmatpush1.bf16.msra.mxu0 %v1033
        %1306 = vmatprep.subr.bf16.mxu0 %v1042
        %1307 = vmatpush1.bf16.msra.mxu0 %v1041
        %1308 = vmatprep.subr.bf16.mxu0 %v1050
        %1309 = vmatpush1.bf16.msra.mxu0 %v1049
        %1310 = vmatprep.subr.bf16.mxu0 %v1058
        %1311 = vmatpush1.bf16.msra.mxu0 %v1057
        %1312 = vmatprep.subr.bf16.mxu0 %v1066
        %1313 = vmatpush1.bf16.msra.mxu0 %v1065
        %1314 = vmatprep.subr.bf16.mxu0 %v1074
        %1315 = vmatpush1.bf16.msra.mxu0 %v1073
        %1316 = vmatprep.subr.bf16.mxu0 %v1082
        %1317 = vmatpush1.bf16.msra.mxu0 %v1081
        %1318 = vmatprep.subr.bf16.mxu0 %v1090
        %1319 = vmatpush1.bf16.msra.mxu0 %v1089
        %1320 = vmatprep.subr.bf16.mxu0 %v1098
        %1321 = vmatpush1.bf16.msra.mxu0 %v1097
        %1322 = vmatprep.subr.bf16.mxu0 %v1106
        %1323 = vmatpush1.bf16.msra.mxu0 %v1105
        %1324 = vmatprep.subr.bf16.mxu0 %v1114
        %1325 = vmatpush1.bf16.msra.mxu0 %v1113
        %1326 = vmatprep.subr.bf16.mxu0 %v1122
        %1327 = vmatpush1.bf16.msra.mxu0 %v1121
        %1328 = vmatprep.mubr.bf16.mxu0 %v612
        %1329 = vmatmul.mubr.bf16.gmra.mrb[0].mxu0 %v611
        %v1330 = vpop.f32.mrb[0].mxu0
        %v1331 = vadd.f32 %v579, %v1330
        %v1332 = vpop.f32.mrb[0].mxu0
        %v1333 = vadd.f32 %v583, %v1332
        %v1334 = vpop.f32.mrb[0].mxu0
        %v1335 = vpop.f32.mrb[0].mxu0
        %1336 = vdwg.mxu0
        %1337 = vmatprep.subr.bf16.mxu0 %v1004
        %1338 = vmatpush1.bf16.msra.mxu0 %v1003
        %1339 = vmatprep.subr.bf16.mxu0 %v1012
        %1340 = vmatpush1.bf16.msra.mxu0 %v1011
        %1341 = vmatprep.subr.bf16.mxu0 %v1020
        %1342 = vmatpush1.bf16.msra.mxu0 %v1019
        %1343 = vmatprep.subr.bf16.mxu0 %v1028
        %1344 = vmatpush1.bf16.msra.mxu0 %v1027
        %1345 = vmatprep.subr.bf16.mxu0 %v1036
        %1346 = vmatpush1.bf16.msra.mxu0 %v1035
        %1347 = vmatprep.subr.bf16.mxu0 %v1044
        %1348 = vmatpush1.bf16.msra.mxu0 %v1043
        %1349 = vmatprep.subr.bf16.mxu0 %v1052
        %1350 = vmatpush1.bf16.msra.mxu0 %v1051
        %1351 = vmatprep.subr.bf16.mxu0 %v1060
        %1352 = vmatpush1.bf16.msra.mxu0 %v1059
        %1353 = vmatprep.subr.bf16.mxu0 %v1068
        %1354 = vmatpush1.bf16.msra.mxu0 %v1067
        %1355 = vmatprep.subr.bf16.mxu0 %v1076
        %1356 = vmatpush1.bf16.msra.mxu0 %v1075
        %1357 = vmatprep.subr.bf16.mxu0 %v1084
        %1358 = vmatpush1.bf16.msra.mxu0 %v1083
        %1359 = vmatprep.subr.bf16.mxu0 %v1092
        %1360 = vmatpush1.bf16.msra.mxu0 %v1091
        %1361 = vmatprep.subr.bf16.mxu0 %v1100
        %1362 = vmatpush1.bf16.msra.mxu0 %v1099
        %1363 = vmatprep.subr.bf16.mxu0 %v1108
        %1364 = vmatpush1.bf16.msra.mxu0 %v1107
        %1365 = vmatprep.subr.bf16.mxu0 %v1116
        %1366 = vmatpush1.bf16.msra.mxu0 %v1115
        %1367 = vmatprep.subr.bf16.mxu0 %v1124
        %1368 = vmatpush1.bf16.msra.mxu0 %v1123
        %1369 = vmatprep.mubr.bf16.mxu0 %v612
        %1370 = vmatmul.mubr.bf16.gmra.mrb[0].mxu0 %v611
        %v1371 = vpop.f32.mrb[0].mxu0
        %v1372 = vadd.f32 %v587, %v1371
        %v1373 = vpop.f32.mrb[0].mxu0
        %v1374 = vadd.f32 %v591, %v1373
        %v1375 = vpop.f32.mrb[0].mxu0
        %v1376 = vpop.f32.mrb[0].mxu0
        %1377 = vdwg.mxu0
        %1378 = vmatprep.subr.bf16.mxu0 %v1006
        %1379 = vmatpush1.bf16.msra.mxu0 %v1005
        %1380 = vmatprep.subr.bf16.mxu0 %v1014
        %1381 = vmatpush1.bf16.msra.mxu0 %v1013
        %1382 = vmatprep.subr.bf16.mxu0 %v1022
        %1383 = vmatpush1.bf16.msra.mxu0 %v1021
        %1384 = vmatprep.subr.bf16.mxu0 %v1030
        %1385 = vmatpush1.bf16.msra.mxu0 %v1029
        %1386 = vmatprep.subr.bf16.mxu0 %v1038
        %1387 = vmatpush1.bf16.msra.mxu0 %v1037
        %1388 = vmatprep.subr.bf16.mxu0 %v1046
        %1389 = vmatpush1.bf16.msra.mxu0 %v1045
        %1390 = vmatprep.subr.bf16.mxu0 %v1054
        %1391 = vmatpush1.bf16.msra.mxu0 %v1053
        %1392 = vmatprep.subr.bf16.mxu0 %v1062
        %1393 = vmatpush1.bf16.msra.mxu0 %v1061
        %1394 = vmatprep.subr.bf16.mxu0 %v1070
        %1395 = vmatpush1.bf16.msra.mxu0 %v1069
        %1396 = vmatprep.subr.bf16.mxu0 %v1078
        %1397 = vmatpush1.bf16.msra.mxu0 %v1077
        %1398 = vmatprep.subr.bf16.mxu0 %v1086
        %1399 = vmatpush1.bf16.msra.mxu0 %v1085
        %1400 = vmatprep.subr.bf16.mxu0 %v1094
        %1401 = vmatpush1.bf16.msra.mxu0 %v1093
        %1402 = vmatprep.subr.bf16.mxu0 %v1102
        %1403 = vmatpush1.bf16.msra.mxu0 %v1101
        %1404 = vmatprep.subr.bf16.mxu0 %v1110
        %1405 = vmatpush1.bf16.msra.mxu0 %v1109
        %1406 = vmatprep.subr.bf16.mxu0 %v1118
        %1407 = vmatpush1.bf16.msra.mxu0 %v1117
        %1408 = vmatprep.subr.bf16.mxu0 %v1126
        %1409 = vmatpush1.bf16.msra.mxu0 %v1125
        %1410 = vmatprep.mubr.bf16.mxu0 %v612
        %1411 = vmatmul.mubr.bf16.gmra.mrb[0].mxu0 %v611
        %v1412 = vpop.f32.mrb[0].mxu0
        %v1413 = vadd.f32 %v595, %v1412
        %v1414 = vpop.f32.mrb[0].mxu0
        %v1415 = vadd.f32 %v599, %v1414
        %v1416 = vpop.f32.mrb[0].mxu0
        %v1417 = vpop.f32.mrb[0].mxu0
        %1418 = vdwg.mxu0
        %p1419 = scmp.eq.s32.totalorder %s30, 0
        // Predicated region
        $region85: #{discriminator_forward.1} parent=55 // pred_check
          %p1420 = pneg %p1419
        $region86: #{discriminator_forward.1} parent=55 // pred_check_branch
          %1422 = sbr.rel (%p1420) target = $region88
        $region87: #{discriminator_forward.1} parent=55 // pred_region
          %p1423 = scmp.eq.s32.totalorder %s31, 0
          // Predicated region
          $region89: #{discriminator_forward.1} parent=87 // pred_check
            %p1424 = pneg %p1423
          $region90: #{discriminator_forward.1} parent=87 // pred_check_branch
            %1426 = sbr.rel (%p1424) target = $region92
          $region91: #{discriminator_forward.1} parent=87 // pred_region
            %1427 = vst [vmem:[#allocation2] sm:$0xff] 0.0
            %1428 = vst [vmem:[#allocation3] sm:$0xff] 0.0
          $region92: #{discriminator_forward.1} parent=87 // pred_fallthru
            _
          %v1429 = vld [vmem:[#allocation2] sm:$0xff]
          %v1430 = vrot.slane %v1290, 4
          %v1431 = vadd.f32 %v1290, %v1430
          %v1432 = vrot.slane %v1431, 2
          %v1433 = vadd.f32 %v1431, %v1432
          %v1434 = vrot.slane %v1433, 1
          %v1435 = vadd.f32 %v1433, %v1434
          %v1436 = vrot.slane %v1292, 4
          %v1437 = vadd.f32 %v1292, %v1436
          %v1438 = vrot.slane %v1437, 2
          %v1439 = vadd.f32 %v1437, %v1438
          %v1440 = vrot.slane %v1439, 1
          %v1441 = vadd.f32 %v1439, %v1440
          %v1442 = vrot.slane %v1331, 4
          %v1443 = vadd.f32 %v1331, %v1442
          %v1444 = vrot.slane %v1443, 2
          %v1445 = vadd.f32 %v1443, %v1444
          %v1446 = vrot.slane %v1445, 1
          %v1447 = vadd.f32 %v1445, %v1446
          %v1448 = vrot.slane %v1333, 4
          %v1449 = vadd.f32 %v1333, %v1448
          %v1450 = vrot.slane %v1449, 2
          %v1451 = vadd.f32 %v1449, %v1450
          %v1452 = vrot.slane %v1451, 1
          %v1453 = vadd.f32 %v1451, %v1452
          %v1454 = vrot.slane %v1372, 4
          %v1455 = vadd.f32 %v1372, %v1454
          %v1456 = vrot.slane %v1455, 2
          %v1457 = vadd.f32 %v1455, %v1456
          %v1458 = vrot.slane %v1457, 1
          %v1459 = vadd.f32 %v1457, %v1458
          %v1460 = vrot.slane %v1374, 4
          %v1461 = vadd.f32 %v1374, %v1460
          %v1462 = vrot.slane %v1461, 2
          %v1463 = vadd.f32 %v1461, %v1462
          %v1464 = vrot.slane %v1463, 1
          %v1465 = vadd.f32 %v1463, %v1464
          %v1466 = vrot.slane %v1413, 4
          %v1467 = vadd.f32 %v1413, %v1466
          %v1468 = vrot.slane %v1467, 2
          %v1469 = vadd.f32 %v1467, %v1468
          %v1470 = vrot.slane %v1469, 1
          %v1471 = vadd.f32 %v1469, %v1470
          %v1472 = vrot.slane %v1415, 4
          %v1473 = vadd.f32 %v1415, %v1472
          %v1474 = vrot.slane %v1473, 2
          %v1475 = vadd.f32 %v1473, %v1474
          %v1476 = vrot.slane %v1475, 1
          %v1477 = vadd.f32 %v1475, %v1476
          %v1486 = vcombine.low %v1435, %v1441
          %v1487 = vcombine.low %v1447, %v1453
          %v1488 = vcombine.low %v1459, %v1465
          %v1489 = vcombine.low %v1471, %v1477
          %v1491 = vunpack.c.l.s4 1966171168
          %v1492 = vunpack.c.0.s8 %v1491
          %v1493 = vlaneseq
          %v1494 = vshrl.u32 %v1493, 7
          %v1495 = vsub.s32 %v1492, %v1494
          %v1496 = vrot.slane %v1486, %v1495
          %v1498 = vunpack.c.l.s4 1966171168
          %v1499 = vunpack.c.0.s8 %v1498
          %v1500 = vlaneseq
          %v1501 = vshrl.u32 %v1500, 7
          %v1502 = vsub.s32 %v1499, %v1501
          %v1503 = vrot.slane %v1487, %v1502
          %v1505 = vunpack.c.l.s4 1966171168
          %v1506 = vunpack.c.0.s8 %v1505
          %v1507 = vlaneseq
          %v1508 = vshrl.u32 %v1507, 7
          %v1509 = vsub.s32 %v1506, %v1508
          %v1510 = vrot.slane %v1488, %v1509
          %v1512 = vunpack.c.l.s4 1966171168
          %v1513 = vunpack.c.0.s8 %v1512
          %v1514 = vlaneseq
          %v1515 = vshrl.u32 %v1514, 7
          %v1516 = vsub.s32 %v1513, %v1515
          %v1517 = vrot.slane %v1489, %v1516
          %v1518 = vcombine.low %v1496, %v1503
          %v1519 = vcombine.low %v1510, %v1517
          %v1521 = vunpack.c.l.s4 1966171168
          %v1522 = vunpack.c.0.s8 %v1521
          %v1523 = vlaneseq
          %v1524 = vshrl.u32 %v1523, 7
          %v1525 = vsub.s32 %v1522, %v1524
          %v1526 = vrot.slane %v1518, %v1525
          %v1528 = vunpack.c.l.s4 1966171168
          %v1529 = vunpack.c.0.s8 %v1528
          %v1530 = vlaneseq
          %v1531 = vshrl.u32 %v1530, 7
          %v1532 = vsub.s32 %v1529, %v1531
          %v1533 = vrot.slane %v1519, %v1532
          %v1534 = vcombine.low %v1526, %v1533
          %v1536 = vadd.f32 %v1429, %v1534
          %1537 = vst [vmem:[#allocation2] sm:$0xff] %v1536
          %v1538 = vld [vmem:[#allocation3] sm:$0xff]
          %v1539 = vmul.f32 %v1290, %v1290
          %v1540 = vmul.f32 %v1292, %v1292
          %v1541 = vmul.f32 %v1331, %v1331
          %v1542 = vmul.f32 %v1333, %v1333
          %v1543 = vmul.f32 %v1372, %v1372
          %v1544 = vmul.f32 %v1374, %v1374
          %v1545 = vmul.f32 %v1413, %v1413
          %v1546 = vmul.f32 %v1415, %v1415
          %v1547 = vrot.slane %v1539, 4
          %v1548 = vadd.f32 %v1539, %v1547
          %v1549 = vrot.slane %v1548, 2
          %v1550 = vadd.f32 %v1548, %v1549
          %v1551 = vrot.slane %v1550, 1
          %v1552 = vadd.f32 %v1550, %v1551
          %v1553 = vrot.slane %v1540, 4
          %v1554 = vadd.f32 %v1540, %v1553
          %v1555 = vrot.slane %v1554, 2
          %v1556 = vadd.f32 %v1554, %v1555
          %v1557 = vrot.slane %v1556, 1
          %v1558 = vadd.f32 %v1556, %v1557
          %v1559 = vrot.slane %v1541, 4
          %v1560 = vadd.f32 %v1541, %v1559
          %v1561 = vrot.slane %v1560, 2
          %v1562 = vadd.f32 %v1560, %v1561
          %v1563 = vrot.slane %v1562, 1
          %v1564 = vadd.f32 %v1562, %v1563
          %v1565 = vrot.slane %v1542, 4
          %v1566 = vadd.f32 %v1542, %v1565
          %v1567 = vrot.slane %v1566, 2
          %v1568 = vadd.f32 %v1566, %v1567
          %v1569 = vrot.slane %v1568, 1
          %v1570 = vadd.f32 %v1568, %v1569
          %v1571 = vrot.slane %v1543, 4
          %v1572 = vadd.f32 %v1543, %v1571
          %v1573 = vrot.slane %v1572, 2
          %v1574 = vadd.f32 %v1572, %v1573
          %v1575 = vrot.slane %v1574, 1
          %v1576 = vadd.f32 %v1574, %v1575
          %v1577 = vrot.slane %v1544, 4
          %v1578 = vadd.f32 %v1544, %v1577
          %v1579 = vrot.slane %v1578, 2
          %v1580 = vadd.f32 %v1578, %v1579
          %v1581 = vrot.slane %v1580, 1
          %v1582 = vadd.f32 %v1580, %v1581
          %v1583 = vrot.slane %v1545, 4
          %v1584 = vadd.f32 %v1545, %v1583
          %v1585 = vrot.slane %v1584, 2
          %v1586 = vadd.f32 %v1584, %v1585
          %v1587 = vrot.slane %v1586, 1
          %v1588 = vadd.f32 %v1586, %v1587
          %v1589 = vrot.slane %v1546, 4
          %v1590 = vadd.f32 %v1546, %v1589
          %v1591 = vrot.slane %v1590, 2
          %v1592 = vadd.f32 %v1590, %v1591
          %v1593 = vrot.slane %v1592, 1
          %v1594 = vadd.f32 %v1592, %v1593
          %v1603 = vcombine.low %v1552, %v1558
          %v1604 = vcombine.low %v1564, %v1570
          %v1605 = vcombine.low %v1576, %v1582
          %v1606 = vcombine.low %v1588, %v1594
          %v1608 = vunpack.c.l.s4 1966171168
          %v1609 = vunpack.c.0.s8 %v1608
          %v1610 = vlaneseq
          %v1611 = vshrl.u32 %v1610, 7
          %v1612 = vsub.s32 %v1609, %v1611
          %v1613 = vrot.slane %v1603, %v1612
          %v1615 = vunpack.c.l.s4 1966171168
          %v1616 = vunpack.c.0.s8 %v1615
          %v1617 = vlaneseq
          %v1618 = vshrl.u32 %v1617, 7
          %v1619 = vsub.s32 %v1616, %v1618
          %v1620 = vrot.slane %v1604, %v1619
          %v1622 = vunpack.c.l.s4 1966171168
          %v1623 = vunpack.c.0.s8 %v1622
          %v1624 = vlaneseq
          %v1625 = vshrl.u32 %v1624, 7
          %v1626 = vsub.s32 %v1623, %v1625
          %v1627 = vrot.slane %v1605, %v1626
          %v1629 = vunpack.c.l.s4 1966171168
          %v1630 = vunpack.c.0.s8 %v1629
          %v1631 = vlaneseq
          %v1632 = vshrl.u32 %v1631, 7
          %v1633 = vsub.s32 %v1630, %v1632
          %v1634 = vrot.slane %v1606, %v1633
          %v1635 = vcombine.low %v1613, %v1620
          %v1636 = vcombine.low %v1627, %v1634
          %v1638 = vunpack.c.l.s4 1966171168
          %v1639 = vunpack.c.0.s8 %v1638
          %v1640 = vlaneseq
          %v1641 = vshrl.u32 %v1640, 7
          %v1642 = vsub.s32 %v1639, %v1641
          %v1643 = vrot.slane %v1635, %v1642
          %v1645 = vunpack.c.l.s4 1966171168
          %v1646 = vunpack.c.0.s8 %v1645
          %v1647 = vlaneseq
          %v1648 = vshrl.u32 %v1647, 7
          %v1649 = vsub.s32 %v1646, %v1648
          %v1650 = vrot.slane %v1636, %v1649
          %v1651 = vcombine.low %v1643, %v1650
          %v1653 = vadd.f32 %v1538, %v1651
          %1654 = vst [vmem:[#allocation3] sm:$0xff] %v1653
          %vm1655 = vcmask 7168
          %1656 = vst.msk [vmem:[%s436] sm:$0xff] %vm1655, 0.0
        $region88: #{discriminator_forward.1} parent=55 // pred_fallthru
          _
        %p1657 = scmp.eq.s32.totalorder %s30, 1
        // Predicated region
        $region93: #{discriminator_forward.1} parent=55 // pred_check
          %p1658 = pneg %p1657
        $region94: #{discriminator_forward.1} parent=55 // pred_check_branch
          %1660 = sbr.rel (%p1658) target = $region96
        $region95: #{discriminator_forward.1} parent=55 // pred_region
          %p1661 = scmp.eq.s32.totalorder %s31, 0
          // Predicated region
          $region97: #{discriminator_forward.1} parent=95 // pred_check
            %p1662 = pneg %p1661
          $region98: #{discriminator_forward.1} parent=95 // pred_check_branch
            %1664 = sbr.rel (%p1662) target = $region100
          $region99: #{discriminator_forward.1} parent=95 // pred_region
            %v1665 = vld [vmem:[#allocation2] sm:$0xff]
            %v1666 = vmul.f32 %v1665, 0.125
            %v1667 = vld [vmem:[#allocation3] sm:$0xff]
            %v1668 = vmul.f32 %v1667, 0.125
            %v1669 = vmul.f32 %v1666, %v1666
            %v1670 = vsub.f32 %v1668, %v1669
            %v1671 = vld [vmem:[#allocation9] sm:$0xff]
            %v1672 = vadd.f32 %v1670, 1e-05
            %v1673 = vrsqrt.pop %v1672
            %v1674 = vmul.f32 %v1671, %v1673
            %v1675 = vld [vmem:[#allocation10] sm:$0xff]
            %v1676 = vmul.f32 %v1666, %v1674
            %v1677 = vsub.f32 %v1675, %v1676
            %1678 = vst [vmem:[#allocation2] sm:$0xff] %v1677
            %1679 = vst [vmem:[#allocation3] sm:$0xff] %v1674
          $region100: #{discriminator_forward.1} parent=95 // pred_fallthru
            _
          %v1680 = vld [vmem:[#allocation3] sm:$0xff]
          %v1682 = vlaneseq
          %v1683 = vshrl.u32 %v1682, 7
          %v1684 = vsub.s32 0, %v1683
          %v1685 = vrot.slane %v1680, %v1684
          %v1686 = vlaneseq
          %v1687 = vshrl.u32 %v1686, 7
          %v1688 = vsub.s32 1, %v1687
          %v1689 = vrot.slane %v1680, %v1688
          %v1690 = vlaneseq
          %v1691 = vshrl.u32 %v1690, 7
          %v1692 = vsub.s32 2, %v1691
          %v1693 = vrot.slane %v1680, %v1692
          %v1694 = vlaneseq
          %v1695 = vshrl.u32 %v1694, 7
          %v1696 = vsub.s32 3, %v1695
          %v1697 = vrot.slane %v1680, %v1696
          %v1698 = vlaneseq
          %v1699 = vshrl.u32 %v1698, 7
          %v1700 = vsub.s32 4, %v1699
          %v1701 = vrot.slane %v1680, %v1700
          %v1702 = vlaneseq
          %v1703 = vshrl.u32 %v1702, 7
          %v1704 = vsub.s32 5, %v1703
          %v1705 = vrot.slane %v1680, %v1704
          %v1706 = vlaneseq
          %v1707 = vshrl.u32 %v1706, 7
          %v1708 = vsub.s32 6, %v1707
          %v1709 = vrot.slane %v1680, %v1708
          %v1710 = vlaneseq
          %v1711 = vshrl.u32 %v1710, 7
          %v1712 = vsub.s32 7, %v1711
          %v1713 = vrot.slane %v1680, %v1712
          %v1722 = vmul.f32 %v1290, %v1685
          %v1723 = vmul.f32 %v1292, %v1689
          %v1724 = vmul.f32 %v1331, %v1693
          %v1725 = vmul.f32 %v1333, %v1697
          %v1726 = vmul.f32 %v1372, %v1701
          %v1727 = vmul.f32 %v1374, %v1705
          %v1728 = vmul.f32 %v1413, %v1709
          %v1729 = vmul.f32 %v1415, %v1713
          %v1730 = vld [vmem:[#allocation2] sm:$0xff]
          %v1732 = vlaneseq
          %v1733 = vshrl.u32 %v1732, 7
          %v1734 = vsub.s32 0, %v1733
          %v1735 = vrot.slane %v1730, %v1734
          %v1736 = vlaneseq
          %v1737 = vshrl.u32 %v1736, 7
          %v1738 = vsub.s32 1, %v1737
          %v1739 = vrot.slane %v1730, %v1738
          %v1740 = vlaneseq
          %v1741 = vshrl.u32 %v1740, 7
          %v1742 = vsub.s32 2, %v1741
          %v1743 = vrot.slane %v1730, %v1742
          %v1744 = vlaneseq
          %v1745 = vshrl.u32 %v1744, 7
          %v1746 = vsub.s32 3, %v1745
          %v1747 = vrot.slane %v1730, %v1746
          %v1748 = vlaneseq
          %v1749 = vshrl.u32 %v1748, 7
          %v1750 = vsub.s32 4, %v1749
          %v1751 = vrot.slane %v1730, %v1750
          %v1752 = vlaneseq
          %v1753 = vshrl.u32 %v1752, 7
          %v1754 = vsub.s32 5, %v1753
          %v1755 = vrot.slane %v1730, %v1754
          %v1756 = vlaneseq
          %v1757 = vshrl.u32 %v1756, 7
          %v1758 = vsub.s32 6, %v1757
          %v1759 = vrot.slane %v1730, %v1758
          %v1760 = vlaneseq
          %v1761 = vshrl.u32 %v1760, 7
          %v1762 = vsub.s32 7, %v1761
          %v1763 = vrot.slane %v1730, %v1762
          %v1772 = vadd.f32 %v1722, %v1735
          %v1773 = vadd.f32 %v1723, %v1739
          %v1774 = vadd.f32 %v1724, %v1743
          %v1775 = vadd.f32 %v1725, %v1747
          %v1776 = vadd.f32 %v1726, %v1751
          %v1777 = vadd.f32 %v1727, %v1755
          %v1778 = vadd.f32 %v1728, %v1759
          %v1779 = vadd.f32 %v1729, %v1763
          %vm1780 = vcmp.ge.f32.partialorder %v1772, 0.0
          %vm1781 = vcmp.ge.f32.partialorder %v1773, 0.0
          %vm1782 = vcmp.ge.f32.partialorder %v1774, 0.0
          %vm1783 = vcmp.ge.f32.partialorder %v1775, 0.0
          %vm1784 = vcmp.ge.f32.partialorder %v1776, 0.0
          %vm1785 = vcmp.ge.f32.partialorder %v1777, 0.0
          %vm1786 = vcmp.ge.f32.partialorder %v1778, 0.0
          %vm1787 = vcmp.ge.f32.partialorder %v1779, 0.0
          %v1788 = vmul.f32 %v1772, 0.2
          %v1789 = vmul.f32 %v1773, 0.2
          %v1790 = vmul.f32 %v1774, 0.2
          %v1791 = vmul.f32 %v1775, 0.2
          %v1792 = vmul.f32 %v1776, 0.2
          %v1793 = vmul.f32 %v1777, 0.2
          %v1794 = vmul.f32 %v1778, 0.2
          %v1795 = vmul.f32 %v1779, 0.2
          %v1796 = vsel %vm1780, %v1772, %v1788
          %v1797 = vsel %vm1781, %v1773, %v1789
          %v1798 = vsel %vm1782, %v1774, %v1790
          %v1799 = vsel %vm1783, %v1775, %v1791
          %v1800 = vsel %vm1784, %v1776, %v1792
          %v1801 = vsel %vm1785, %v1777, %v1793
          %v1802 = vsel %vm1786, %v1778, %v1794
          %v1803 = vsel %vm1787, %v1779, %v1795
          %v1804 = vpack.c.bf16 %v1796, %v1796
          %v1805 = vpack.c.bf16 %v1797, %v1797
          %v1806 = vpack.c.bf16 %v1798, %v1798
          %v1807 = vpack.c.bf16 %v1799, %v1799
          %v1808 = vpack.c.bf16 %v1800, %v1800
          %v1809 = vpack.c.bf16 %v1801, %v1801
          %v1810 = vpack.c.bf16 %v1802, %v1802
          %v1811 = vpack.c.bf16 %v1803, %v1803
          %v1812 = vld [vmem:[#allocation12] sm:$0xff]
          %v1813 = vld [vmem:[#allocation12 + $0x8] sm:$0xff]
          %v1814 = vld [vmem:[#allocation12 + $0x10] sm:$0xff]
          %v1815 = vld [vmem:[#allocation12 + $0x18] sm:$0xff]
          %v1816 = vld [vmem:[#allocation12 + $0x20] sm:$0xff]
          %v1817 = vld [vmem:[#allocation12 + $0x28] sm:$0xff]
          %v1818 = vld [vmem:[#allocation12 + $0x30] sm:$0xff]
          %v1819 = vld [vmem:[#allocation12 + $0x38] sm:$0xff]
          %v1820 = vld [vmem:[#allocation12 + $0x40] sm:$0xff]
          %v1821 = vld [vmem:[#allocation12 + $0x48] sm:$0xff]
          %v1822 = vld [vmem:[#allocation12 + $0x50] sm:$0xff]
          %v1823 = vld [vmem:[#allocation12 + $0x58] sm:$0xff]
          %v1824 = vld [vmem:[#allocation12 + $0x60] sm:$0xff]
          %v1825 = vld [vmem:[#allocation12 + $0x68] sm:$0xff]
          %v1826 = vld [vmem:[#allocation12 + $0x70] sm:$0xff]
          %v1827 = vld [vmem:[#allocation12 + $0x78] sm:$0xff]
          %v1828 = vld [vmem:[#allocation12 + $0x80] sm:$0xff]
          %v1829 = vld [vmem:[#allocation12 + $0x88] sm:$0xff]
          %v1830 = vld [vmem:[#allocation12 + $0x90] sm:$0xff]
          %v1831 = vld [vmem:[#allocation12 + $0x98] sm:$0xff]
          %v1832 = vld [vmem:[#allocation12 + $0xa0] sm:$0xff]
          %v1833 = vld [vmem:[#allocation12 + $0xa8] sm:$0xff]
          %v1834 = vld [vmem:[#allocation12 + $0xb0] sm:$0xff]
          %v1835 = vld [vmem:[#allocation12 + $0xb8] sm:$0xff]
          %v1836 = vld [vmem:[#allocation12 + $0xc0] sm:$0xff]
          %v1837 = vld [vmem:[#allocation12 + $0xc8] sm:$0xff]
          %v1838 = vld [vmem:[#allocation12 + $0xd0] sm:$0xff]
          %v1839 = vld [vmem:[#allocation12 + $0xd8] sm:$0xff]
          %v1840 = vld [vmem:[#allocation12 + $0xe0] sm:$0xff]
          %v1841 = vld [vmem:[#allocation12 + $0xe8] sm:$0xff]
          %v1842 = vld [vmem:[#allocation12 + $0xf0] sm:$0xff]
          %v1843 = vld [vmem:[#allocation12 + $0xf8] sm:$0xff]
          %v1844 = vld [vmem:[#allocation12 + $0x100] sm:$0xff]
          %v1845 = vld [vmem:[#allocation12 + $0x108] sm:$0xff]
          %v1846 = vld [vmem:[#allocation12 + $0x110] sm:$0xff]
          %v1847 = vld [vmem:[#allocation12 + $0x118] sm:$0xff]
          %v1848 = vld [vmem:[#allocation12 + $0x120] sm:$0xff]
          %v1849 = vld [vmem:[#allocation12 + $0x128] sm:$0xff]
          %v1850 = vld [vmem:[#allocation12 + $0x130] sm:$0xff]
          %v1851 = vld [vmem:[#allocation12 + $0x138] sm:$0xff]
          %v1852 = vld [vmem:[#allocation12 + $0x140] sm:$0xff]
          %v1853 = vld [vmem:[#allocation12 + $0x148] sm:$0xff]
          %v1854 = vld [vmem:[#allocation12 + $0x150] sm:$0xff]
          %v1855 = vld [vmem:[#allocation12 + $0x158] sm:$0xff]
          %v1856 = vld [vmem:[#allocation12 + $0x160] sm:$0xff]
          %v1857 = vld [vmem:[#allocation12 + $0x168] sm:$0xff]
          %v1858 = vld [vmem:[#allocation12 + $0x170] sm:$0xff]
          %v1859 = vld [vmem:[#allocation12 + $0x178] sm:$0xff]
          %v1860 = vld [vmem:[#allocation12 + $0x180] sm:$0xff]
          %v1861 = vld [vmem:[#allocation12 + $0x188] sm:$0xff]
          %v1862 = vld [vmem:[#allocation12 + $0x190] sm:$0xff]
          %v1863 = vld [vmem:[#allocation12 + $0x198] sm:$0xff]
          %v1864 = vld [vmem:[#allocation12 + $0x1a0] sm:$0xff]
          %v1865 = vld [vmem:[#allocation12 + $0x1a8] sm:$0xff]
          %v1866 = vld [vmem:[#allocation12 + $0x1b0] sm:$0xff]
          %v1867 = vld [vmem:[#allocation12 + $0x1b8] sm:$0xff]
          %v1868 = vld [vmem:[#allocation12 + $0x1c0] sm:$0xff]
          %v1869 = vld [vmem:[#allocation12 + $0x1c8] sm:$0xff]
          %v1870 = vld [vmem:[#allocation12 + $0x1d0] sm:$0xff]
          %v1871 = vld [vmem:[#allocation12 + $0x1d8] sm:$0xff]
          %v1872 = vld [vmem:[#allocation12 + $0x1e0] sm:$0xff]
          %v1873 = vld [vmem:[#allocation12 + $0x1e8] sm:$0xff]
          %v1874 = vld [vmem:[#allocation12 + $0x1f0] sm:$0xff]
          %v1875 = vld [vmem:[#allocation12 + $0x1f8] sm:$0xff]
          %v1876 = vld [vmem:[#allocation12 + $0x200] sm:$0xff]
          %v1877 = vld [vmem:[#allocation12 + $0x208] sm:$0xff]
          %v1878 = vld [vmem:[#allocation12 + $0x210] sm:$0xff]
          %v1879 = vld [vmem:[#allocation12 + $0x218] sm:$0xff]
          %v1880 = vld [vmem:[#allocation12 + $0x220] sm:$0xff]
          %v1881 = vld [vmem:[#allocation12 + $0x228] sm:$0xff]
          %v1882 = vld [vmem:[#allocation12 + $0x230] sm:$0xff]
          %v1883 = vld [vmem:[#allocation12 + $0x238] sm:$0xff]
          %v1884 = vld [vmem:[#allocation12 + $0x240] sm:$0xff]
          %v1885 = vld [vmem:[#allocation12 + $0x248] sm:$0xff]
          %v1886 = vld [vmem:[#allocation12 + $0x250] sm:$0xff]
          %v1887 = vld [vmem:[#allocation12 + $0x258] sm:$0xff]
          %v1888 = vld [vmem:[#allocation12 + $0x260] sm:$0xff]
          %v1889 = vld [vmem:[#allocation12 + $0x268] sm:$0xff]
          %v1890 = vld [vmem:[#allocation12 + $0x270] sm:$0xff]
          %v1891 = vld [vmem:[#allocation12 + $0x278] sm:$0xff]
          %v1892 = vld [vmem:[#allocation12 + $0x280] sm:$0xff]
          %v1893 = vld [vmem:[#allocation12 + $0x288] sm:$0xff]
          %v1894 = vld [vmem:[#allocation12 + $0x290] sm:$0xff]
          %v1895 = vld [vmem:[#allocation12 + $0x298] sm:$0xff]
          %v1896 = vld [vmem:[#allocation12 + $0x2a0] sm:$0xff]
          %v1897 = vld [vmem:[#allocation12 + $0x2a8] sm:$0xff]
          %v1898 = vld [vmem:[#allocation12 + $0x2b0] sm:$0xff]
          %v1899 = vld [vmem:[#allocation12 + $0x2b8] sm:$0xff]
          %v1900 = vld [vmem:[#allocation12 + $0x2c0] sm:$0xff]
          %v1901 = vld [vmem:[#allocation12 + $0x2c8] sm:$0xff]
          %v1902 = vld [vmem:[#allocation12 + $0x2d0] sm:$0xff]
          %v1903 = vld [vmem:[#allocation12 + $0x2d8] sm:$0xff]
          %v1904 = vld [vmem:[#allocation12 + $0x2e0] sm:$0xff]
          %v1905 = vld [vmem:[#allocation12 + $0x2e8] sm:$0xff]
          %v1906 = vld [vmem:[#allocation12 + $0x2f0] sm:$0xff]
          %v1907 = vld [vmem:[#allocation12 + $0x2f8] sm:$0xff]
          %v1908 = vld [vmem:[#allocation12 + $0x300] sm:$0xff]
          %v1909 = vld [vmem:[#allocation12 + $0x308] sm:$0xff]
          %v1910 = vld [vmem:[#allocation12 + $0x310] sm:$0xff]
          %v1911 = vld [vmem:[#allocation12 + $0x318] sm:$0xff]
          %v1912 = vld [vmem:[#allocation12 + $0x320] sm:$0xff]
          %v1913 = vld [vmem:[#allocation12 + $0x328] sm:$0xff]
          %v1914 = vld [vmem:[#allocation12 + $0x330] sm:$0xff]
          %v1915 = vld [vmem:[#allocation12 + $0x338] sm:$0xff]
          %v1916 = vld [vmem:[#allocation12 + $0x340] sm:$0xff]
          %v1917 = vld [vmem:[#allocation12 + $0x348] sm:$0xff]
          %v1918 = vld [vmem:[#allocation12 + $0x350] sm:$0xff]
          %v1919 = vld [vmem:[#allocation12 + $0x358] sm:$0xff]
          %v1920 = vld [vmem:[#allocation12 + $0x360] sm:$0xff]
          %v1921 = vld [vmem:[#allocation12 + $0x368] sm:$0xff]
          %v1922 = vld [vmem:[#allocation12 + $0x370] sm:$0xff]
          %v1923 = vld [vmem:[#allocation12 + $0x378] sm:$0xff]
          %v1924 = vld [vmem:[#allocation12 + $0x380] sm:$0xff]
          %v1925 = vld [vmem:[#allocation12 + $0x388] sm:$0xff]
          %v1926 = vld [vmem:[#allocation12 + $0x390] sm:$0xff]
          %v1927 = vld [vmem:[#allocation12 + $0x398] sm:$0xff]
          %v1928 = vld [vmem:[#allocation12 + $0x3a0] sm:$0xff]
          %v1929 = vld [vmem:[#allocation12 + $0x3a8] sm:$0xff]
          %v1930 = vld [vmem:[#allocation12 + $0x3b0] sm:$0xff]
          %v1931 = vld [vmem:[#allocation12 + $0x3b8] sm:$0xff]
          %v1932 = vld [vmem:[#allocation12 + $0x3c0] sm:$0xff]
          %v1933 = vld [vmem:[#allocation12 + $0x3c8] sm:$0xff]
          %v1934 = vld [vmem:[#allocation12 + $0x3d0] sm:$0xff]
          %v1935 = vld [vmem:[#allocation12 + $0x3d8] sm:$0xff]
          %v1936 = vld [vmem:[#allocation12 + $0x3e0] sm:$0xff]
          %v1937 = vld [vmem:[#allocation12 + $0x3e8] sm:$0xff]
          %v1938 = vld [vmem:[#allocation12 + $0x3f0] sm:$0xff]
          %v1939 = vld [vmem:[#allocation12 + $0x3f8] sm:$0xff]
          %v1940 = vld [vmem:[#allocation12 + $0x400] sm:$0xff]
          %v1941 = vld [vmem:[#allocation12 + $0x408] sm:$0xff]
          %v1942 = vld [vmem:[#allocation12 + $0x410] sm:$0xff]
          %v1943 = vld [vmem:[#allocation12 + $0x418] sm:$0xff]
          %v1944 = vld [vmem:[#allocation12 + $0x420] sm:$0xff]
          %v1945 = vld [vmem:[#allocation12 + $0x428] sm:$0xff]
          %v1946 = vld [vmem:[#allocation12 + $0x430] sm:$0xff]
          %v1947 = vld [vmem:[#allocation12 + $0x438] sm:$0xff]
          %v1948 = vld [vmem:[#allocation12 + $0x440] sm:$0xff]
          %v1949 = vld [vmem:[#allocation12 + $0x448] sm:$0xff]
          %v1950 = vld [vmem:[#allocation12 + $0x450] sm:$0xff]
          %v1951 = vld [vmem:[#allocation12 + $0x458] sm:$0xff]
          %v1952 = vld [vmem:[#allocation12 + $0x460] sm:$0xff]
          %v1953 = vld [vmem:[#allocation12 + $0x468] sm:$0xff]
          %v1954 = vld [vmem:[#allocation12 + $0x470] sm:$0xff]
          %v1955 = vld [vmem:[#allocation12 + $0x478] sm:$0xff]
          %v1956 = vld [vmem:[#allocation12 + $0x480] sm:$0xff]
          %v1957 = vld [vmem:[#allocation12 + $0x488] sm:$0xff]
          %v1958 = vld [vmem:[#allocation12 + $0x490] sm:$0xff]
          %v1959 = vld [vmem:[#allocation12 + $0x498] sm:$0xff]
          %v1960 = vld [vmem:[#allocation12 + $0x4a0] sm:$0xff]
          %v1961 = vld [vmem:[#allocation12 + $0x4a8] sm:$0xff]
          %v1962 = vld [vmem:[#allocation12 + $0x4b0] sm:$0xff]
          %v1963 = vld [vmem:[#allocation12 + $0x4b8] sm:$0xff]
          %v1964 = vld [vmem:[#allocation12 + $0x4c0] sm:$0xff]
          %v1965 = vld [vmem:[#allocation12 + $0x4c8] sm:$0xff]
          %v1966 = vld [vmem:[#allocation12 + $0x4d0] sm:$0xff]
          %v1967 = vld [vmem:[#allocation12 + $0x4d8] sm:$0xff]
          %v1968 = vld [vmem:[#allocation12 + $0x4e0] sm:$0xff]
          %v1969 = vld [vmem:[#allocation12 + $0x4e8] sm:$0xff]
          %v1970 = vld [vmem:[#allocation12 + $0x4f0] sm:$0xff]
          %v1971 = vld [vmem:[#allocation12 + $0x4f8] sm:$0xff]
          %v1972 = vld [vmem:[#allocation12 + $0x500] sm:$0xff]
          %v1973 = vld [vmem:[#allocation12 + $0x508] sm:$0xff]
          %v1974 = vld [vmem:[#allocation12 + $0x510] sm:$0xff]
          %v1975 = vld [vmem:[#allocation12 + $0x518] sm:$0xff]
          %v1976 = vld [vmem:[#allocation12 + $0x520] sm:$0xff]
          %v1977 = vld [vmem:[#allocation12 + $0x528] sm:$0xff]
          %v1978 = vld [vmem:[#allocation12 + $0x530] sm:$0xff]
          %v1979 = vld [vmem:[#allocation12 + $0x538] sm:$0xff]
          %v1980 = vld [vmem:[#allocation12 + $0x540] sm:$0xff]
          %v1981 = vld [vmem:[#allocation12 + $0x548] sm:$0xff]
          %v1982 = vld [vmem:[#allocation12 + $0x550] sm:$0xff]
          %v1983 = vld [vmem:[#allocation12 + $0x558] sm:$0xff]
          %v1984 = vld [vmem:[#allocation12 + $0x560] sm:$0xff]
          %v1985 = vld [vmem:[#allocation12 + $0x568] sm:$0xff]
          %v1986 = vld [vmem:[#allocation12 + $0x570] sm:$0xff]
          %v1987 = vld [vmem:[#allocation12 + $0x578] sm:$0xff]
          %v1988 = vld [vmem:[#allocation12 + $0x580] sm:$0xff]
          %v1989 = vld [vmem:[#allocation12 + $0x588] sm:$0xff]
          %v1990 = vld [vmem:[#allocation12 + $0x590] sm:$0xff]
          %v1991 = vld [vmem:[#allocation12 + $0x598] sm:$0xff]
          %v1992 = vld [vmem:[#allocation12 + $0x5a0] sm:$0xff]
          %v1993 = vld [vmem:[#allocation12 + $0x5a8] sm:$0xff]
          %v1994 = vld [vmem:[#allocation12 + $0x5b0] sm:$0xff]
          %v1995 = vld [vmem:[#allocation12 + $0x5b8] sm:$0xff]
          %v1996 = vld [vmem:[#allocation12 + $0x5c0] sm:$0xff]
          %v1997 = vld [vmem:[#allocation12 + $0x5c8] sm:$0xff]
          %v1998 = vld [vmem:[#allocation12 + $0x5d0] sm:$0xff]
          %v1999 = vld [vmem:[#allocation12 + $0x5d8] sm:$0xff]
          %v2000 = vld [vmem:[#allocation12 + $0x5e0] sm:$0xff]
          %v2001 = vld [vmem:[#allocation12 + $0x5e8] sm:$0xff]
          %v2002 = vld [vmem:[#allocation12 + $0x5f0] sm:$0xff]
          %v2003 = vld [vmem:[#allocation12 + $0x5f8] sm:$0xff]
          %v2004 = vld [vmem:[#allocation12 + $0x600] sm:$0xff]
          %v2005 = vld [vmem:[#allocation12 + $0x608] sm:$0xff]
          %v2006 = vld [vmem:[#allocation12 + $0x610] sm:$0xff]
          %v2007 = vld [vmem:[#allocation12 + $0x618] sm:$0xff]
          %v2008 = vld [vmem:[#allocation12 + $0x620] sm:$0xff]
          %v2009 = vld [vmem:[#allocation12 + $0x628] sm:$0xff]
          %v2010 = vld [vmem:[#allocation12 + $0x630] sm:$0xff]
          %v2011 = vld [vmem:[#allocation12 + $0x638] sm:$0xff]
          %v2012 = vld [vmem:[#allocation12 + $0x640] sm:$0xff]
          %v2013 = vld [vmem:[#allocation12 + $0x648] sm:$0xff]
          %v2014 = vld [vmem:[#allocation12 + $0x650] sm:$0xff]
          %v2015 = vld [vmem:[#allocation12 + $0x658] sm:$0xff]
          %v2016 = vld [vmem:[#allocation12 + $0x660] sm:$0xff]
          %v2017 = vld [vmem:[#allocation12 + $0x668] sm:$0xff]
          %v2018 = vld [vmem:[#allocation12 + $0x670] sm:$0xff]
          %v2019 = vld [vmem:[#allocation12 + $0x678] sm:$0xff]
          %v2020 = vld [vmem:[#allocation12 + $0x680] sm:$0xff]
          %v2021 = vld [vmem:[#allocation12 + $0x688] sm:$0xff]
          %v2022 = vld [vmem:[#allocation12 + $0x690] sm:$0xff]
          %v2023 = vld [vmem:[#allocation12 + $0x698] sm:$0xff]
          %v2024 = vld [vmem:[#allocation12 + $0x6a0] sm:$0xff]
          %v2025 = vld [vmem:[#allocation12 + $0x6a8] sm:$0xff]
          %v2026 = vld [vmem:[#allocation12 + $0x6b0] sm:$0xff]
          %v2027 = vld [vmem:[#allocation12 + $0x6b8] sm:$0xff]
          %v2028 = vld [vmem:[#allocation12 + $0x6c0] sm:$0xff]
          %v2029 = vld [vmem:[#allocation12 + $0x6c8] sm:$0xff]
          %v2030 = vld [vmem:[#allocation12 + $0x6d0] sm:$0xff]
          %v2031 = vld [vmem:[#allocation12 + $0x6d8] sm:$0xff]
          %v2032 = vld [vmem:[#allocation12 + $0x6e0] sm:$0xff]
          %v2033 = vld [vmem:[#allocation12 + $0x6e8] sm:$0xff]
          %v2034 = vld [vmem:[#allocation12 + $0x6f0] sm:$0xff]
          %v2035 = vld [vmem:[#allocation12 + $0x6f8] sm:$0xff]
          %v2036 = vld [vmem:[#allocation12 + $0x700] sm:$0xff]
          %v2037 = vld [vmem:[#allocation12 + $0x708] sm:$0xff]
          %v2038 = vld [vmem:[#allocation12 + $0x710] sm:$0xff]
          %v2039 = vld [vmem:[#allocation12 + $0x718] sm:$0xff]
          %v2040 = vld [vmem:[#allocation12 + $0x720] sm:$0xff]
          %v2041 = vld [vmem:[#allocation12 + $0x728] sm:$0xff]
          %v2042 = vld [vmem:[#allocation12 + $0x730] sm:$0xff]
          %v2043 = vld [vmem:[#allocation12 + $0x738] sm:$0xff]
          %v2044 = vld [vmem:[#allocation12 + $0x740] sm:$0xff]
          %v2045 = vld [vmem:[#allocation12 + $0x748] sm:$0xff]
          %v2046 = vld [vmem:[#allocation12 + $0x750] sm:$0xff]
          %v2047 = vld [vmem:[#allocation12 + $0x758] sm:$0xff]
          %v2048 = vld [vmem:[#allocation12 + $0x760] sm:$0xff]
          %v2049 = vld [vmem:[#allocation12 + $0x768] sm:$0xff]
          %v2050 = vld [vmem:[#allocation12 + $0x770] sm:$0xff]
          %v2051 = vld [vmem:[#allocation12 + $0x778] sm:$0xff]
          %v2052 = vld [vmem:[#allocation12 + $0x780] sm:$0xff]
          %v2053 = vld [vmem:[#allocation12 + $0x788] sm:$0xff]
          %v2054 = vld [vmem:[#allocation12 + $0x790] sm:$0xff]
          %v2055 = vld [vmem:[#allocation12 + $0x798] sm:$0xff]
          %v2056 = vld [vmem:[#allocation12 + $0x7a0] sm:$0xff]
          %v2057 = vld [vmem:[#allocation12 + $0x7a8] sm:$0xff]
          %v2058 = vld [vmem:[#allocation12 + $0x7b0] sm:$0xff]
          %v2059 = vld [vmem:[#allocation12 + $0x7b8] sm:$0xff]
          %v2060 = vld [vmem:[#allocation12 + $0x7c0] sm:$0xff]
          %v2061 = vld [vmem:[#allocation12 + $0x7c8] sm:$0xff]
          %v2062 = vld [vmem:[#allocation12 + $0x7d0] sm:$0xff]
          %v2063 = vld [vmem:[#allocation12 + $0x7d8] sm:$0xff]
          %v2064 = vld [vmem:[#allocation12 + $0x7e0] sm:$0xff]
          %v2065 = vld [vmem:[#allocation12 + $0x7e8] sm:$0xff]
          %v2066 = vld [vmem:[#allocation12 + $0x7f0] sm:$0xff]
          %v2067 = vld [vmem:[#allocation12 + $0x7f8] sm:$0xff]
          %v2068 = vld [vmem:[#allocation12 + $0x800] sm:$0xff]
          %v2069 = vld [vmem:[#allocation12 + $0x808] sm:$0xff]
          %v2070 = vld [vmem:[#allocation12 + $0x810] sm:$0xff]
          %v2071 = vld [vmem:[#allocation12 + $0x818] sm:$0xff]
          %v2072 = vld [vmem:[#allocation12 + $0x820] sm:$0xff]
          %v2073 = vld [vmem:[#allocation12 + $0x828] sm:$0xff]
          %v2074 = vld [vmem:[#allocation12 + $0x830] sm:$0xff]
          %v2075 = vld [vmem:[#allocation12 + $0x838] sm:$0xff]
          %v2076 = vld [vmem:[#allocation12 + $0x840] sm:$0xff]
          %v2077 = vld [vmem:[#allocation12 + $0x848] sm:$0xff]
          %v2078 = vld [vmem:[#allocation12 + $0x850] sm:$0xff]
          %v2079 = vld [vmem:[#allocation12 + $0x858] sm:$0xff]
          %v2080 = vld [vmem:[#allocation12 + $0x860] sm:$0xff]
          %v2081 = vld [vmem:[#allocation12 + $0x868] sm:$0xff]
          %v2082 = vld [vmem:[#allocation12 + $0x870] sm:$0xff]
          %v2083 = vld [vmem:[#allocation12 + $0x878] sm:$0xff]
          %v2084 = vld [vmem:[#allocation12 + $0x880] sm:$0xff]
          %v2085 = vld [vmem:[#allocation12 + $0x888] sm:$0xff]
          %v2086 = vld [vmem:[#allocation12 + $0x890] sm:$0xff]
          %v2087 = vld [vmem:[#allocation12 + $0x898] sm:$0xff]
          %v2088 = vld [vmem:[#allocation12 + $0x8a0] sm:$0xff]
          %v2089 = vld [vmem:[#allocation12 + $0x8a8] sm:$0xff]
          %v2090 = vld [vmem:[#allocation12 + $0x8b0] sm:$0xff]
          %v2091 = vld [vmem:[#allocation12 + $0x8b8] sm:$0xff]
          %v2092 = vld [vmem:[#allocation12 + $0x8c0] sm:$0xff]
          %v2093 = vld [vmem:[#allocation12 + $0x8c8] sm:$0xff]
          %v2094 = vld [vmem:[#allocation12 + $0x8d0] sm:$0xff]
          %v2095 = vld [vmem:[#allocation12 + $0x8d8] sm:$0xff]
          %v2096 = vld [vmem:[#allocation12 + $0x8e0] sm:$0xff]
          %v2097 = vld [vmem:[#allocation12 + $0x8e8] sm:$0xff]
          %v2098 = vld [vmem:[#allocation12 + $0x8f0] sm:$0xff]
          %v2099 = vld [vmem:[#allocation12 + $0x8f8] sm:$0xff]
          %v2100 = vld [vmem:[#allocation12 + $0x900] sm:$0xff]
          %v2101 = vld [vmem:[#allocation12 + $0x908] sm:$0xff]
          %v2102 = vld [vmem:[#allocation12 + $0x910] sm:$0xff]
          %v2103 = vld [vmem:[#allocation12 + $0x918] sm:$0xff]
          %v2104 = vld [vmem:[#allocation12 + $0x920] sm:$0xff]
          %v2105 = vld [vmem:[#allocation12 + $0x928] sm:$0xff]
          %v2106 = vld [vmem:[#allocation12 + $0x930] sm:$0xff]
          %v2107 = vld [vmem:[#allocation12 + $0x938] sm:$0xff]
          %v2108 = vld [vmem:[#allocation12 + $0x940] sm:$0xff]
          %v2109 = vld [vmem:[#allocation12 + $0x948] sm:$0xff]
          %v2110 = vld [vmem:[#allocation12 + $0x950] sm:$0xff]
          %v2111 = vld [vmem:[#allocation12 + $0x958] sm:$0xff]
          %v2112 = vld [vmem:[#allocation12 + $0x960] sm:$0xff]
          %v2113 = vld [vmem:[#allocation12 + $0x968] sm:$0xff]
          %v2114 = vld [vmem:[#allocation12 + $0x970] sm:$0xff]
          %v2115 = vld [vmem:[#allocation12 + $0x978] sm:$0xff]
          %v2116 = vld [vmem:[#allocation12 + $0x980] sm:$0xff]
          %v2117 = vld [vmem:[#allocation12 + $0x988] sm:$0xff]
          %v2118 = vld [vmem:[#allocation12 + $0x990] sm:$0xff]
          %v2119 = vld [vmem:[#allocation12 + $0x998] sm:$0xff]
          %v2120 = vld [vmem:[#allocation12 + $0x9a0] sm:$0xff]
          %v2121 = vld [vmem:[#allocation12 + $0x9a8] sm:$0xff]
          %v2122 = vld [vmem:[#allocation12 + $0x9b0] sm:$0xff]
          %v2123 = vld [vmem:[#allocation12 + $0x9b8] sm:$0xff]
          %v2124 = vld [vmem:[#allocation12 + $0x9c0] sm:$0xff]
          %v2125 = vld [vmem:[#allocation12 + $0x9c8] sm:$0xff]
          %v2126 = vld [vmem:[#allocation12 + $0x9d0] sm:$0xff]
          %v2127 = vld [vmem:[#allocation12 + $0x9d8] sm:$0xff]
          %v2128 = vld [vmem:[#allocation12 + $0x9e0] sm:$0xff]
          %v2129 = vld [vmem:[#allocation12 + $0x9e8] sm:$0xff]
          %v2130 = vld [vmem:[#allocation12 + $0x9f0] sm:$0xff]
          %v2131 = vld [vmem:[#allocation12 + $0x9f8] sm:$0xff]
          %v2132 = vld [vmem:[#allocation12 + $0xa00] sm:$0xff]
          %v2133 = vld [vmem:[#allocation12 + $0xa08] sm:$0xff]
          %v2134 = vld [vmem:[#allocation12 + $0xa10] sm:$0xff]
          %v2135 = vld [vmem:[#allocation12 + $0xa18] sm:$0xff]
          %v2136 = vld [vmem:[#allocation12 + $0xa20] sm:$0xff]
          %v2137 = vld [vmem:[#allocation12 + $0xa28] sm:$0xff]
          %v2138 = vld [vmem:[#allocation12 + $0xa30] sm:$0xff]
          %v2139 = vld [vmem:[#allocation12 + $0xa38] sm:$0xff]
          %v2140 = vld [vmem:[#allocation12 + $0xa40] sm:$0xff]
          %v2141 = vld [vmem:[#allocation12 + $0xa48] sm:$0xff]
          %v2142 = vld [vmem:[#allocation12 + $0xa50] sm:$0xff]
          %v2143 = vld [vmem:[#allocation12 + $0xa58] sm:$0xff]
          %v2144 = vld [vmem:[#allocation12 + $0xa60] sm:$0xff]
          %v2145 = vld [vmem:[#allocation12 + $0xa68] sm:$0xff]
          %v2146 = vld [vmem:[#allocation12 + $0xa70] sm:$0xff]
          %v2147 = vld [vmem:[#allocation12 + $0xa78] sm:$0xff]
          %v2148 = vld [vmem:[#allocation12 + $0xa80] sm:$0xff]
          %v2149 = vld [vmem:[#allocation12 + $0xa88] sm:$0xff]
          %v2150 = vld [vmem:[#allocation12 + $0xa90] sm:$0xff]
          %v2151 = vld [vmem:[#allocation12 + $0xa98] sm:$0xff]
          %v2152 = vld [vmem:[#allocation12 + $0xaa0] sm:$0xff]
          %v2153 = vld [vmem:[#allocation12 + $0xaa8] sm:$0xff]
          %v2154 = vld [vmem:[#allocation12 + $0xab0] sm:$0xff]
          %v2155 = vld [vmem:[#allocation12 + $0xab8] sm:$0xff]
          %v2156 = vld [vmem:[#allocation12 + $0xac0] sm:$0xff]
          %v2157 = vld [vmem:[#allocation12 + $0xac8] sm:$0xff]
          %v2158 = vld [vmem:[#allocation12 + $0xad0] sm:$0xff]
          %v2159 = vld [vmem:[#allocation12 + $0xad8] sm:$0xff]
          %v2160 = vld [vmem:[#allocation12 + $0xae0] sm:$0xff]
          %v2161 = vld [vmem:[#allocation12 + $0xae8] sm:$0xff]
          %v2162 = vld [vmem:[#allocation12 + $0xaf0] sm:$0xff]
          %v2163 = vld [vmem:[#allocation12 + $0xaf8] sm:$0xff]
          %v2164 = vld [vmem:[#allocation12 + $0xb00] sm:$0xff]
          %v2165 = vld [vmem:[#allocation12 + $0xb08] sm:$0xff]
          %v2166 = vld [vmem:[#allocation12 + $0xb10] sm:$0xff]
          %v2167 = vld [vmem:[#allocation12 + $0xb18] sm:$0xff]
          %v2168 = vld [vmem:[#allocation12 + $0xb20] sm:$0xff]
          %v2169 = vld [vmem:[#allocation12 + $0xb28] sm:$0xff]
          %v2170 = vld [vmem:[#allocation12 + $0xb30] sm:$0xff]
          %v2171 = vld [vmem:[#allocation12 + $0xb38] sm:$0xff]
          %v2172 = vld [vmem:[#allocation12 + $0xb40] sm:$0xff]
          %v2173 = vld [vmem:[#allocation12 + $0xb48] sm:$0xff]
          %v2174 = vld [vmem:[#allocation12 + $0xb50] sm:$0xff]
          %v2175 = vld [vmem:[#allocation12 + $0xb58] sm:$0xff]
          %v2176 = vld [vmem:[#allocation12 + $0xb60] sm:$0xff]
          %v2177 = vld [vmem:[#allocation12 + $0xb68] sm:$0xff]
          %v2178 = vld [vmem:[#allocation12 + $0xb70] sm:$0xff]
          %v2179 = vld [vmem:[#allocation12 + $0xb78] sm:$0xff]
          %v2180 = vld [vmem:[#allocation12 + $0xb80] sm:$0xff]
          %v2181 = vld [vmem:[#allocation12 + $0xb88] sm:$0xff]
          %v2182 = vld [vmem:[#allocation12 + $0xb90] sm:$0xff]
          %v2183 = vld [vmem:[#allocation12 + $0xb98] sm:$0xff]
          %v2184 = vld [vmem:[#allocation12 + $0xba0] sm:$0xff]
          %v2185 = vld [vmem:[#allocation12 + $0xba8] sm:$0xff]
          %v2186 = vld [vmem:[#allocation12 + $0xbb0] sm:$0xff]
          %v2187 = vld [vmem:[#allocation12 + $0xbb8] sm:$0xff]
          %v2188 = vld [vmem:[#allocation12 + $0xbc0] sm:$0xff]
          %v2189 = vld [vmem:[#allocation12 + $0xbc8] sm:$0xff]
          %v2190 = vld [vmem:[#allocation12 + $0xbd0] sm:$0xff]
          %v2191 = vld [vmem:[#allocation12 + $0xbd8] sm:$0xff]
          %v2192 = vld [vmem:[#allocation12 + $0xbe0] sm:$0xff]
          %v2193 = vld [vmem:[#allocation12 + $0xbe8] sm:$0xff]
          %v2194 = vld [vmem:[#allocation12 + $0xbf0] sm:$0xff]
          %v2195 = vld [vmem:[#allocation12 + $0xbf8] sm:$0xff]
          %v2196 = vld [vmem:[#allocation12 + $0xc00] sm:$0xff]
          %v2197 = vld [vmem:[#allocation12 + $0xc08] sm:$0xff]
          %v2198 = vld [vmem:[#allocation12 + $0xc10] sm:$0xff]
          %v2199 = vld [vmem:[#allocation12 + $0xc18] sm:$0xff]
          %v2200 = vld [vmem:[#allocation12 + $0xc20] sm:$0xff]
          %v2201 = vld [vmem:[#allocation12 + $0xc28] sm:$0xff]
          %v2202 = vld [vmem:[#allocation12 + $0xc30] sm:$0xff]
          %v2203 = vld [vmem:[#allocation12 + $0xc38] sm:$0xff]
          %v2204 = vld [vmem:[#allocation12 + $0xc40] sm:$0xff]
          %v2205 = vld [vmem:[#allocation12 + $0xc48] sm:$0xff]
          %v2206 = vld [vmem:[#allocation12 + $0xc50] sm:$0xff]
          %v2207 = vld [vmem:[#allocation12 + $0xc58] sm:$0xff]
          %v2208 = vld [vmem:[#allocation12 + $0xc60] sm:$0xff]
          %v2209 = vld [vmem:[#allocation12 + $0xc68] sm:$0xff]
          %v2210 = vld [vmem:[#allocation12 + $0xc70] sm:$0xff]
          %v2211 = vld [vmem:[#allocation12 + $0xc78] sm:$0xff]
          %v2212 = vld [vmem:[#allocation12 + $0xc80] sm:$0xff]
          %v2213 = vld [vmem:[#allocation12 + $0xc88] sm:$0xff]
          %v2214 = vld [vmem:[#allocation12 + $0xc90] sm:$0xff]
          %v2215 = vld [vmem:[#allocation12 + $0xc98] sm:$0xff]
          %v2216 = vld [vmem:[#allocation12 + $0xca0] sm:$0xff]
          %v2217 = vld [vmem:[#allocation12 + $0xca8] sm:$0xff]
          %v2218 = vld [vmem:[#allocation12 + $0xcb0] sm:$0xff]
          %v2219 = vld [vmem:[#allocation12 + $0xcb8] sm:$0xff]
          %v2220 = vld [vmem:[#allocation12 + $0xcc0] sm:$0xff]
          %v2221 = vld [vmem:[#allocation12 + $0xcc8] sm:$0xff]
          %v2222 = vld [vmem:[#allocation12 + $0xcd0] sm:$0xff]
          %v2223 = vld [vmem:[#allocation12 + $0xcd8] sm:$0xff]
          %v2224 = vld [vmem:[#allocation12 + $0xce0] sm:$0xff]
          %v2225 = vld [vmem:[#allocation12 + $0xce8] sm:$0xff]
          %v2226 = vld [vmem:[#allocation12 + $0xcf0] sm:$0xff]
          %v2227 = vld [vmem:[#allocation12 + $0xcf8] sm:$0xff]
          %v2228 = vld [vmem:[#allocation12 + $0xd00] sm:$0xff]
          %v2229 = vld [vmem:[#allocation12 + $0xd08] sm:$0xff]
          %v2230 = vld [vmem:[#allocation12 + $0xd10] sm:$0xff]
          %v2231 = vld [vmem:[#allocation12 + $0xd18] sm:$0xff]
          %v2232 = vld [vmem:[#allocation12 + $0xd20] sm:$0xff]
          %v2233 = vld [vmem:[#allocation12 + $0xd28] sm:$0xff]
          %v2234 = vld [vmem:[#allocation12 + $0xd30] sm:$0xff]
          %v2235 = vld [vmem:[#allocation12 + $0xd38] sm:$0xff]
          %v2236 = vld [vmem:[#allocation12 + $0xd40] sm:$0xff]
          %v2237 = vld [vmem:[#allocation12 + $0xd48] sm:$0xff]
          %v2238 = vld [vmem:[#allocation12 + $0xd50] sm:$0xff]
          %v2239 = vld [vmem:[#allocation12 + $0xd58] sm:$0xff]
          %v2240 = vld [vmem:[#allocation12 + $0xd60] sm:$0xff]
          %v2241 = vld [vmem:[#allocation12 + $0xd68] sm:$0xff]
          %v2242 = vld [vmem:[#allocation12 + $0xd70] sm:$0xff]
          %v2243 = vld [vmem:[#allocation12 + $0xd78] sm:$0xff]
          %v2244 = vld [vmem:[#allocation12 + $0xd80] sm:$0xff]
          %v2245 = vld [vmem:[#allocation12 + $0xd88] sm:$0xff]
          %v2246 = vld [vmem:[#allocation12 + $0xd90] sm:$0xff]
          %v2247 = vld [vmem:[#allocation12 + $0xd98] sm:$0xff]
          %v2248 = vld [vmem:[#allocation12 + $0xda0] sm:$0xff]
          %v2249 = vld [vmem:[#allocation12 + $0xda8] sm:$0xff]
          %v2250 = vld [vmem:[#allocation12 + $0xdb0] sm:$0xff]
          %v2251 = vld [vmem:[#allocation12 + $0xdb8] sm:$0xff]
          %v2252 = vld [vmem:[#allocation12 + $0xdc0] sm:$0xff]
          %v2253 = vld [vmem:[#allocation12 + $0xdc8] sm:$0xff]
          %v2254 = vld [vmem:[#allocation12 + $0xdd0] sm:$0xff]
          %v2255 = vld [vmem:[#allocation12 + $0xdd8] sm:$0xff]
          %v2256 = vld [vmem:[#allocation12 + $0xde0] sm:$0xff]
          %v2257 = vld [vmem:[#allocation12 + $0xde8] sm:$0xff]
          %v2258 = vld [vmem:[#allocation12 + $0xdf0] sm:$0xff]
          %v2259 = vld [vmem:[#allocation12 + $0xdf8] sm:$0xff]
          %v2260 = vld [vmem:[#allocation12 + $0xe00] sm:$0xff]
          %v2261 = vld [vmem:[#allocation12 + $0xe08] sm:$0xff]
          %v2262 = vld [vmem:[#allocation12 + $0xe10] sm:$0xff]
          %v2263 = vld [vmem:[#allocation12 + $0xe18] sm:$0xff]
          %v2264 = vld [vmem:[#allocation12 + $0xe20] sm:$0xff]
          %v2265 = vld [vmem:[#allocation12 + $0xe28] sm:$0xff]
          %v2266 = vld [vmem:[#allocation12 + $0xe30] sm:$0xff]
          %v2267 = vld [vmem:[#allocation12 + $0xe38] sm:$0xff]
          %v2268 = vld [vmem:[#allocation12 + $0xe40] sm:$0xff]
          %v2269 = vld [vmem:[#allocation12 + $0xe48] sm:$0xff]
          %v2270 = vld [vmem:[#allocation12 + $0xe50] sm:$0xff]
          %v2271 = vld [vmem:[#allocation12 + $0xe58] sm:$0xff]
          %v2272 = vld [vmem:[#allocation12 + $0xe60] sm:$0xff]
          %v2273 = vld [vmem:[#allocation12 + $0xe68] sm:$0xff]
          %v2274 = vld [vmem:[#allocation12 + $0xe70] sm:$0xff]
          %v2275 = vld [vmem:[#allocation12 + $0xe78] sm:$0xff]
          %v2276 = vld [vmem:[#allocation12 + $0xe80] sm:$0xff]
          %v2277 = vld [vmem:[#allocation12 + $0xe88] sm:$0xff]
          %v2278 = vld [vmem:[#allocation12 + $0xe90] sm:$0xff]
          %v2279 = vld [vmem:[#allocation12 + $0xe98] sm:$0xff]
          %v2280 = vld [vmem:[#allocation12 + $0xea0] sm:$0xff]
          %v2281 = vld [vmem:[#allocation12 + $0xea8] sm:$0xff]
          %v2282 = vld [vmem:[#allocation12 + $0xeb0] sm:$0xff]
          %v2283 = vld [vmem:[#allocation12 + $0xeb8] sm:$0xff]
          %v2284 = vld [vmem:[#allocation12 + $0xec0] sm:$0xff]
          %v2285 = vld [vmem:[#allocation12 + $0xec8] sm:$0xff]
          %v2286 = vld [vmem:[#allocation12 + $0xed0] sm:$0xff]
          %v2287 = vld [vmem:[#allocation12 + $0xed8] sm:$0xff]
          %v2288 = vld [vmem:[#allocation12 + $0xee0] sm:$0xff]
          %v2289 = vld [vmem:[#allocation12 + $0xee8] sm:$0xff]
          %v2290 = vld [vmem:[#allocation12 + $0xef0] sm:$0xff]
          %v2291 = vld [vmem:[#allocation12 + $0xef8] sm:$0xff]
          %v2292 = vld [vmem:[#allocation12 + $0xf00] sm:$0xff]
          %v2293 = vld [vmem:[#allocation12 + $0xf08] sm:$0xff]
          %v2294 = vld [vmem:[#allocation12 + $0xf10] sm:$0xff]
          %v2295 = vld [vmem:[#allocation12 + $0xf18] sm:$0xff]
          %v2296 = vld [vmem:[#allocation12 + $0xf20] sm:$0xff]
          %v2297 = vld [vmem:[#allocation12 + $0xf28] sm:$0xff]
          %v2298 = vld [vmem:[#allocation12 + $0xf30] sm:$0xff]
          %v2299 = vld [vmem:[#allocation12 + $0xf38] sm:$0xff]
          %v2300 = vld [vmem:[#allocation12 + $0xf40] sm:$0xff]
          %v2301 = vld [vmem:[#allocation12 + $0xf48] sm:$0xff]
          %v2302 = vld [vmem:[#allocation12 + $0xf50] sm:$0xff]
          %v2303 = vld [vmem:[#allocation12 + $0xf58] sm:$0xff]
          %v2304 = vld [vmem:[#allocation12 + $0xf60] sm:$0xff]
          %v2305 = vld [vmem:[#allocation12 + $0xf68] sm:$0xff]
          %v2306 = vld [vmem:[#allocation12 + $0xf70] sm:$0xff]
          %v2307 = vld [vmem:[#allocation12 + $0xf78] sm:$0xff]
          %v2308 = vld [vmem:[#allocation12 + $0xf80] sm:$0xff]
          %v2309 = vld [vmem:[#allocation12 + $0xf88] sm:$0xff]
          %v2310 = vld [vmem:[#allocation12 + $0xf90] sm:$0xff]
          %v2311 = vld [vmem:[#allocation12 + $0xf98] sm:$0xff]
          %v2312 = vld [vmem:[#allocation12 + $0xfa0] sm:$0xff]
          %v2313 = vld [vmem:[#allocation12 + $0xfa8] sm:$0xff]
          %v2314 = vld [vmem:[#allocation12 + $0xfb0] sm:$0xff]
          %v2315 = vld [vmem:[#allocation12 + $0xfb8] sm:$0xff]
          %v2316 = vld [vmem:[#allocation12 + $0xfc0] sm:$0xff]
          %v2317 = vld [vmem:[#allocation12 + $0xfc8] sm:$0xff]
          %v2318 = vld [vmem:[#allocation12 + $0xfd0] sm:$0xff]
          %v2319 = vld [vmem:[#allocation12 + $0xfd8] sm:$0xff]
          %v2320 = vld [vmem:[#allocation12 + $0xfe0] sm:$0xff]
          %v2321 = vld [vmem:[#allocation12 + $0xfe8] sm:$0xff]
          %v2322 = vld [vmem:[#allocation12 + $0xff0] sm:$0xff]
          %v2323 = vld [vmem:[#allocation12 + $0xff8] sm:$0xff]
          %v2324 = vld [vmem:[#allocation13] sm:$0xff]
          %v2326 = vlaneseq
          %v2327 = vshrl.u32 %v2326, 7
          %v2328 = vsub.s32 0, %v2327
          %v2329 = vrot.slane %v2324, %v2328
          %v2330 = vlaneseq
          %v2331 = vshrl.u32 %v2330, 7
          %v2332 = vsub.s32 1, %v2331
          %v2333 = vrot.slane %v2324, %v2332
          %v2334 = vlaneseq
          %v2335 = vshrl.u32 %v2334, 7
          %v2336 = vsub.s32 2, %v2335
          %v2337 = vrot.slane %v2324, %v2336
          %v2338 = vlaneseq
          %v2339 = vshrl.u32 %v2338, 7
          %v2340 = vsub.s32 3, %v2339
          %v2341 = vrot.slane %v2324, %v2340
          %v2342 = vlaneseq
          %v2343 = vshrl.u32 %v2342, 7
          %v2344 = vsub.s32 4, %v2343
          %v2345 = vrot.slane %v2324, %v2344
          %v2346 = vlaneseq
          %v2347 = vshrl.u32 %v2346, 7
          %v2348 = vsub.s32 5, %v2347
          %v2349 = vrot.slane %v2324, %v2348
          %v2350 = vlaneseq
          %v2351 = vshrl.u32 %v2350, 7
          %v2352 = vsub.s32 6, %v2351
          %v2353 = vrot.slane %v2324, %v2352
          %v2354 = vlaneseq
          %v2355 = vshrl.u32 %v2354, 7
          %v2356 = vsub.s32 7, %v2355
          %v2357 = vrot.slane %v2324, %v2356
          %v2878 = vunpack.c.l.b16 %v1812
          %v2879 = vunpack.c.h.b16 %v1812
          %v2880 = vunpack.c.l.b16 %v1813
          %v2881 = vunpack.c.h.b16 %v1813
          %v2882 = vunpack.c.l.b16 %v1814
          %v2883 = vunpack.c.h.b16 %v1814
          %v2884 = vunpack.c.l.b16 %v1815
          %v2885 = vunpack.c.h.b16 %v1815
          %v2886 = vunpack.c.l.b16 %v1816
          %v2887 = vunpack.c.h.b16 %v1816
          %v2888 = vunpack.c.l.b16 %v1817
          %v2889 = vunpack.c.h.b16 %v1817
          %v2890 = vunpack.c.l.b16 %v1818
          %v2891 = vunpack.c.h.b16 %v1818
          %v2892 = vunpack.c.l.b16 %v1819
          %v2893 = vunpack.c.h.b16 %v1819
          %v2894 = vunpack.c.l.b16 %v1820
          %v2895 = vunpack.c.h.b16 %v1820
          %v2896 = vunpack.c.l.b16 %v1821
          %v2897 = vunpack.c.h.b16 %v1821
          %v2898 = vunpack.c.l.b16 %v1822
          %v2899 = vunpack.c.h.b16 %v1822
          %v2900 = vunpack.c.l.b16 %v1823
          %v2901 = vunpack.c.h.b16 %v1823
          %v2902 = vunpack.c.l.b16 %v1824
          %v2903 = vunpack.c.h.b16 %v1824
          %v2904 = vunpack.c.l.b16 %v1825
          %v2905 = vunpack.c.h.b16 %v1825
          %v2906 = vunpack.c.l.b16 %v1826
          %v2907 = vunpack.c.h.b16 %v1826
          %v2908 = vunpack.c.l.b16 %v1827
          %v2909 = vunpack.c.h.b16 %v1827
          %v2910 = vunpack.c.l.b16 %v1828
          %v2911 = vunpack.c.h.b16 %v1828
          %v2912 = vunpack.c.l.b16 %v1829
          %v2913 = vunpack.c.h.b16 %v1829
          %v2914 = vunpack.c.l.b16 %v1830
          %v2915 = vunpack.c.h.b16 %v1830
          %v2916 = vunpack.c.l.b16 %v1831
          %v2917 = vunpack.c.h.b16 %v1831
          %v2918 = vunpack.c.l.b16 %v1832
          %v2919 = vunpack.c.h.b16 %v1832
          %v2920 = vunpack.c.l.b16 %v1833
          %v2921 = vunpack.c.h.b16 %v1833
          %v2922 = vunpack.c.l.b16 %v1834
          %v2923 = vunpack.c.h.b16 %v1834
          %v2924 = vunpack.c.l.b16 %v1835
          %v2925 = vunpack.c.h.b16 %v1835
          %v2926 = vunpack.c.l.b16 %v1836
          %v2927 = vunpack.c.h.b16 %v1836
          %v2928 = vunpack.c.l.b16 %v1837
          %v2929 = vunpack.c.h.b16 %v1837
          %v2930 = vunpack.c.l.b16 %v1838
          %v2931 = vunpack.c.h.b16 %v1838
          %v2932 = vunpack.c.l.b16 %v1839
          %v2933 = vunpack.c.h.b16 %v1839
          %v2934 = vunpack.c.l.b16 %v1840
          %v2935 = vunpack.c.h.b16 %v1840
          %v2936 = vunpack.c.l.b16 %v1841
          %v2937 = vunpack.c.h.b16 %v1841
          %v2938 = vunpack.c.l.b16 %v1842
          %v2939 = vunpack.c.h.b16 %v1842
          %v2940 = vunpack.c.l.b16 %v1843
          %v2941 = vunpack.c.h.b16 %v1843
          %v2942 = vunpack.c.l.b16 %v1844
          %v2943 = vunpack.c.h.b16 %v1844
          %v2944 = vunpack.c.l.b16 %v1845
          %v2945 = vunpack.c.h.b16 %v1845
          %v2946 = vunpack.c.l.b16 %v1846
          %v2947 = vunpack.c.h.b16 %v1846
          %v2948 = vunpack.c.l.b16 %v1847
          %v2949 = vunpack.c.h.b16 %v1847
          %v2950 = vunpack.c.l.b16 %v1848
          %v2951 = vunpack.c.h.b16 %v1848
          %v2952 = vunpack.c.l.b16 %v1849
          %v2953 = vunpack.c.h.b16 %v1849
          %v2954 = vunpack.c.l.b16 %v1850
          %v2955 = vunpack.c.h.b16 %v1850
          %v2956 = vunpack.c.l.b16 %v1851
          %v2957 = vunpack.c.h.b16 %v1851
          %v2958 = vunpack.c.l.b16 %v1852
          %v2959 = vunpack.c.h.b16 %v1852
          %v2960 = vunpack.c.l.b16 %v1853
          %v2961 = vunpack.c.h.b16 %v1853
          %v2962 = vunpack.c.l.b16 %v1854
          %v2963 = vunpack.c.h.b16 %v1854
          %v2964 = vunpack.c.l.b16 %v1855
          %v2965 = vunpack.c.h.b16 %v1855
          %v2966 = vunpack.c.l.b16 %v1856
          %v2967 = vunpack.c.h.b16 %v1856
          %v2968 = vunpack.c.l.b16 %v1857
          %v2969 = vunpack.c.h.b16 %v1857
          %v2970 = vunpack.c.l.b16 %v1858
          %v2971 = vunpack.c.h.b16 %v1858
          %v2972 = vunpack.c.l.b16 %v1859
          %v2973 = vunpack.c.h.b16 %v1859
          %v2974 = vunpack.c.l.b16 %v1860
          %v2975 = vunpack.c.h.b16 %v1860
          %v2976 = vunpack.c.l.b16 %v1861
          %v2977 = vunpack.c.h.b16 %v1861
          %v2978 = vunpack.c.l.b16 %v1862
          %v2979 = vunpack.c.h.b16 %v1862
          %v2980 = vunpack.c.l.b16 %v1863
          %v2981 = vunpack.c.h.b16 %v1863
          %v2982 = vunpack.c.l.b16 %v1864
          %v2983 = vunpack.c.h.b16 %v1864
          %v2984 = vunpack.c.l.b16 %v1865
          %v2985 = vunpack.c.h.b16 %v1865
          %v2986 = vunpack.c.l.b16 %v1866
          %v2987 = vunpack.c.h.b16 %v1866
          %v2988 = vunpack.c.l.b16 %v1867
          %v2989 = vunpack.c.h.b16 %v1867
          %v2990 = vunpack.c.l.b16 %v1868
          %v2991 = vunpack.c.h.b16 %v1868
          %v2992 = vunpack.c.l.b16 %v1869
          %v2993 = vunpack.c.h.b16 %v1869
          %v2994 = vunpack.c.l.b16 %v1870
          %v2995 = vunpack.c.h.b16 %v1870
          %v2996 = vunpack.c.l.b16 %v1871
          %v2997 = vunpack.c.h.b16 %v1871
          %v2998 = vunpack.c.l.b16 %v1872
          %v2999 = vunpack.c.h.b16 %v1872
          %v3000 = vunpack.c.l.b16 %v1873
          %v3001 = vunpack.c.h.b16 %v1873
          %v3002 = vunpack.c.l.b16 %v1874
          %v3003 = vunpack.c.h.b16 %v1874
          %v3004 = vunpack.c.l.b16 %v1875
          %v3005 = vunpack.c.h.b16 %v1875
          %v3006 = vunpack.c.l.b16 %v1876
          %v3007 = vunpack.c.h.b16 %v1876
          %v3008 = vunpack.c.l.b16 %v1877
          %v3009 = vunpack.c.h.b16 %v1877
          %v3010 = vunpack.c.l.b16 %v1878
          %v3011 = vunpack.c.h.b16 %v1878
          %v3012 = vunpack.c.l.b16 %v1879
          %v3013 = vunpack.c.h.b16 %v1879
          %v3014 = vunpack.c.l.b16 %v1880
          %v3015 = vunpack.c.h.b16 %v1880
          %v3016 = vunpack.c.l.b16 %v1881
          %v3017 = vunpack.c.h.b16 %v1881
          %v3018 = vunpack.c.l.b16 %v1882
          %v3019 = vunpack.c.h.b16 %v1882
          %v3020 = vunpack.c.l.b16 %v1883
          %v3021 = vunpack.c.h.b16 %v1883
          %v3022 = vunpack.c.l.b16 %v1884
          %v3023 = vunpack.c.h.b16 %v1884
          %v3024 = vunpack.c.l.b16 %v1885
          %v3025 = vunpack.c.h.b16 %v1885
          %v3026 = vunpack.c.l.b16 %v1886
          %v3027 = vunpack.c.h.b16 %v1886
          %v3028 = vunpack.c.l.b16 %v1887
          %v3029 = vunpack.c.h.b16 %v1887
          %v3030 = vunpack.c.l.b16 %v1888
          %v3031 = vunpack.c.h.b16 %v1888
          %v3032 = vunpack.c.l.b16 %v1889
          %v3033 = vunpack.c.h.b16 %v1889
          %v3034 = vunpack.c.l.b16 %v1890
          %v3035 = vunpack.c.h.b16 %v1890
          %v3036 = vunpack.c.l.b16 %v1891
          %v3037 = vunpack.c.h.b16 %v1891
          %v3038 = vunpack.c.l.b16 %v1892
          %v3039 = vunpack.c.h.b16 %v1892
          %v3040 = vunpack.c.l.b16 %v1893
          %v3041 = vunpack.c.h.b16 %v1893
          %v3042 = vunpack.c.l.b16 %v1894
          %v3043 = vunpack.c.h.b16 %v1894
          %v3044 = vunpack.c.l.b16 %v1895
          %v3045 = vunpack.c.h.b16 %v1895
          %v3046 = vunpack.c.l.b16 %v1896
          %v3047 = vunpack.c.h.b16 %v1896
          %v3048 = vunpack.c.l.b16 %v1897
          %v3049 = vunpack.c.h.b16 %v1897
          %v3050 = vunpack.c.l.b16 %v1898
          %v3051 = vunpack.c.h.b16 %v1898
          %v3052 = vunpack.c.l.b16 %v1899
          %v3053 = vunpack.c.h.b16 %v1899
          %v3054 = vunpack.c.l.b16 %v1900
          %v3055 = vunpack.c.h.b16 %v1900
          %v3056 = vunpack.c.l.b16 %v1901
          %v3057 = vunpack.c.h.b16 %v1901
          %v3058 = vunpack.c.l.b16 %v1902
          %v3059 = vunpack.c.h.b16 %v1902
          %v3060 = vunpack.c.l.b16 %v1903
          %v3061 = vunpack.c.h.b16 %v1903
          %v3062 = vunpack.c.l.b16 %v1904
          %v3063 = vunpack.c.h.b16 %v1904
          %v3064 = vunpack.c.l.b16 %v1905
          %v3065 = vunpack.c.h.b16 %v1905
          %v3066 = vunpack.c.l.b16 %v1906
          %v3067 = vunpack.c.h.b16 %v1906
          %v3068 = vunpack.c.l.b16 %v1907
          %v3069 = vunpack.c.h.b16 %v1907
          %v3070 = vunpack.c.l.b16 %v1908
          %v3071 = vunpack.c.h.b16 %v1908
          %v3072 = vunpack.c.l.b16 %v1909
          %v3073 = vunpack.c.h.b16 %v1909
          %v3074 = vunpack.c.l.b16 %v1910
          %v3075 = vunpack.c.h.b16 %v1910
          %v3076 = vunpack.c.l.b16 %v1911
          %v3077 = vunpack.c.h.b16 %v1911
          %v3078 = vunpack.c.l.b16 %v1912
          %v3079 = vunpack.c.h.b16 %v1912
          %v3080 = vunpack.c.l.b16 %v1913
          %v3081 = vunpack.c.h.b16 %v1913
          %v3082 = vunpack.c.l.b16 %v1914
          %v3083 = vunpack.c.h.b16 %v1914
          %v3084 = vunpack.c.l.b16 %v1915
          %v3085 = vunpack.c.h.b16 %v1915
          %v3086 = vunpack.c.l.b16 %v1916
          %v3087 = vunpack.c.h.b16 %v1916
          %v3088 = vunpack.c.l.b16 %v1917
          %v3089 = vunpack.c.h.b16 %v1917
          %v3090 = vunpack.c.l.b16 %v1918
          %v3091 = vunpack.c.h.b16 %v1918
          %v3092 = vunpack.c.l.b16 %v1919
          %v3093 = vunpack.c.h.b16 %v1919
          %v3094 = vunpack.c.l.b16 %v1920
          %v3095 = vunpack.c.h.b16 %v1920
          %v3096 = vunpack.c.l.b16 %v1921
          %v3097 = vunpack.c.h.b16 %v1921
          %v3098 = vunpack.c.l.b16 %v1922
          %v3099 = vunpack.c.h.b16 %v1922
          %v3100 = vunpack.c.l.b16 %v1923
          %v3101 = vunpack.c.h.b16 %v1923
          %v3102 = vunpack.c.l.b16 %v1924
          %v3103 = vunpack.c.h.b16 %v1924
          %v3104 = vunpack.c.l.b16 %v1925
          %v3105 = vunpack.c.h.b16 %v1925
          %v3106 = vunpack.c.l.b16 %v1926
          %v3107 = vunpack.c.h.b16 %v1926
          %v3108 = vunpack.c.l.b16 %v1927
          %v3109 = vunpack.c.h.b16 %v1927
          %v3110 = vunpack.c.l.b16 %v1928
          %v3111 = vunpack.c.h.b16 %v1928
          %v3112 = vunpack.c.l.b16 %v1929
          %v3113 = vunpack.c.h.b16 %v1929
          %v3114 = vunpack.c.l.b16 %v1930
          %v3115 = vunpack.c.h.b16 %v1930
          %v3116 = vunpack.c.l.b16 %v1931
          %v3117 = vunpack.c.h.b16 %v1931
          %v3118 = vunpack.c.l.b16 %v1932
          %v3119 = vunpack.c.h.b16 %v1932
          %v3120 = vunpack.c.l.b16 %v1933
          %v3121 = vunpack.c.h.b16 %v1933
          %v3122 = vunpack.c.l.b16 %v1934
          %v3123 = vunpack.c.h.b16 %v1934
          %v3124 = vunpack.c.l.b16 %v1935
          %v3125 = vunpack.c.h.b16 %v1935
          %v3126 = vunpack.c.l.b16 %v1936
          %v3127 = vunpack.c.h.b16 %v1936
          %v3128 = vunpack.c.l.b16 %v1937
          %v3129 = vunpack.c.h.b16 %v1937
          %v3130 = vunpack.c.l.b16 %v1938
          %v3131 = vunpack.c.h.b16 %v1938
          %v3132 = vunpack.c.l.b16 %v1939
          %v3133 = vunpack.c.h.b16 %v1939
          %v3134 = vunpack.c.l.b16 %v1940
          %v3135 = vunpack.c.h.b16 %v1940
          %v3136 = vunpack.c.l.b16 %v1941
          %v3137 = vunpack.c.h.b16 %v1941
          %v3138 = vunpack.c.l.b16 %v1942
          %v3139 = vunpack.c.h.b16 %v1942
          %v3140 = vunpack.c.l.b16 %v1943
          %v3141 = vunpack.c.h.b16 %v1943
          %v3142 = vunpack.c.l.b16 %v1944
          %v3143 = vunpack.c.h.b16 %v1944
          %v3144 = vunpack.c.l.b16 %v1945
          %v3145 = vunpack.c.h.b16 %v1945
          %v3146 = vunpack.c.l.b16 %v1946
          %v3147 = vunpack.c.h.b16 %v1946
          %v3148 = vunpack.c.l.b16 %v1947
          %v3149 = vunpack.c.h.b16 %v1947
          %v3150 = vunpack.c.l.b16 %v1948
          %v3151 = vunpack.c.h.b16 %v1948
          %v3152 = vunpack.c.l.b16 %v1949
          %v3153 = vunpack.c.h.b16 %v1949
          %v3154 = vunpack.c.l.b16 %v1950
          %v3155 = vunpack.c.h.b16 %v1950
          %v3156 = vunpack.c.l.b16 %v1951
          %v3157 = vunpack.c.h.b16 %v1951
          %v3158 = vunpack.c.l.b16 %v1952
          %v3159 = vunpack.c.h.b16 %v1952
          %v3160 = vunpack.c.l.b16 %v1953
          %v3161 = vunpack.c.h.b16 %v1953
          %v3162 = vunpack.c.l.b16 %v1954
          %v3163 = vunpack.c.h.b16 %v1954
          %v3164 = vunpack.c.l.b16 %v1955
          %v3165 = vunpack.c.h.b16 %v1955
          %v3166 = vunpack.c.l.b16 %v1956
          %v3167 = vunpack.c.h.b16 %v1956
          %v3168 = vunpack.c.l.b16 %v1957
          %v3169 = vunpack.c.h.b16 %v1957
          %v3170 = vunpack.c.l.b16 %v1958
          %v3171 = vunpack.c.h.b16 %v1958
          %v3172 = vunpack.c.l.b16 %v1959
          %v3173 = vunpack.c.h.b16 %v1959
          %v3174 = vunpack.c.l.b16 %v1960
          %v3175 = vunpack.c.h.b16 %v1960
          %v3176 = vunpack.c.l.b16 %v1961
          %v3177 = vunpack.c.h.b16 %v1961
          %v3178 = vunpack.c.l.b16 %v1962
          %v3179 = vunpack.c.h.b16 %v1962
          %v3180 = vunpack.c.l.b16 %v1963
          %v3181 = vunpack.c.h.b16 %v1963
          %v3182 = vunpack.c.l.b16 %v1964
          %v3183 = vunpack.c.h.b16 %v1964
          %v3184 = vunpack.c.l.b16 %v1965
          %v3185 = vunpack.c.h.b16 %v1965
          %v3186 = vunpack.c.l.b16 %v1966
          %v3187 = vunpack.c.h.b16 %v1966
          %v3188 = vunpack.c.l.b16 %v1967
          %v3189 = vunpack.c.h.b16 %v1967
          %v3190 = vunpack.c.l.b16 %v1968
          %v3191 = vunpack.c.h.b16 %v1968
          %v3192 = vunpack.c.l.b16 %v1969
          %v3193 = vunpack.c.h.b16 %v1969
          %v3194 = vunpack.c.l.b16 %v1970
          %v3195 = vunpack.c.h.b16 %v1970
          %v3196 = vunpack.c.l.b16 %v1971
          %v3197 = vunpack.c.h.b16 %v1971
          %v3198 = vunpack.c.l.b16 %v1972
          %v3199 = vunpack.c.h.b16 %v1972
          %v3200 = vunpack.c.l.b16 %v1973
          %v3201 = vunpack.c.h.b16 %v1973
          %v3202 = vunpack.c.l.b16 %v1974
          %v3203 = vunpack.c.h.b16 %v1974
          %v3204 = vunpack.c.l.b16 %v1975
          %v3205 = vunpack.c.h.b16 %v1975
          %v3206 = vunpack.c.l.b16 %v1976
          %v3207 = vunpack.c.h.b16 %v1976
          %v3208 = vunpack.c.l.b16 %v1977
          %v3209 = vunpack.c.h.b16 %v1977
          %v3210 = vunpack.c.l.b16 %v1978
          %v3211 = vunpack.c.h.b16 %v1978
          %v3212 = vunpack.c.l.b16 %v1979
          %v3213 = vunpack.c.h.b16 %v1979
          %v3214 = vunpack.c.l.b16 %v1980
          %v3215 = vunpack.c.h.b16 %v1980
          %v3216 = vunpack.c.l.b16 %v1981
          %v3217 = vunpack.c.h.b16 %v1981
          %v3218 = vunpack.c.l.b16 %v1982
          %v3219 = vunpack.c.h.b16 %v1982
          %v3220 = vunpack.c.l.b16 %v1983
          %v3221 = vunpack.c.h.b16 %v1983
          %v3222 = vunpack.c.l.b16 %v1984
          %v3223 = vunpack.c.h.b16 %v1984
          %v3224 = vunpack.c.l.b16 %v1985
          %v3225 = vunpack.c.h.b16 %v1985
          %v3226 = vunpack.c.l.b16 %v1986
          %v3227 = vunpack.c.h.b16 %v1986
          %v3228 = vunpack.c.l.b16 %v1987
          %v3229 = vunpack.c.h.b16 %v1987
          %v3230 = vunpack.c.l.b16 %v1988
          %v3231 = vunpack.c.h.b16 %v1988
          %v3232 = vunpack.c.l.b16 %v1989
          %v3233 = vunpack.c.h.b16 %v1989
          %v3234 = vunpack.c.l.b16 %v1990
          %v3235 = vunpack.c.h.b16 %v1990
          %v3236 = vunpack.c.l.b16 %v1991
          %v3237 = vunpack.c.h.b16 %v1991
          %v3238 = vunpack.c.l.b16 %v1992
          %v3239 = vunpack.c.h.b16 %v1992
          %v3240 = vunpack.c.l.b16 %v1993
          %v3241 = vunpack.c.h.b16 %v1993
          %v3242 = vunpack.c.l.b16 %v1994
          %v3243 = vunpack.c.h.b16 %v1994
          %v3244 = vunpack.c.l.b16 %v1995
          %v3245 = vunpack.c.h.b16 %v1995
          %v3246 = vunpack.c.l.b16 %v1996
          %v3247 = vunpack.c.h.b16 %v1996
          %v3248 = vunpack.c.l.b16 %v1997
          %v3249 = vunpack.c.h.b16 %v1997
          %v3250 = vunpack.c.l.b16 %v1998
          %v3251 = vunpack.c.h.b16 %v1998
          %v3252 = vunpack.c.l.b16 %v1999
          %v3253 = vunpack.c.h.b16 %v1999
          %v3254 = vunpack.c.l.b16 %v2000
          %v3255 = vunpack.c.h.b16 %v2000
          %v3256 = vunpack.c.l.b16 %v2001
          %v3257 = vunpack.c.h.b16 %v2001
          %v3258 = vunpack.c.l.b16 %v2002
          %v3259 = vunpack.c.h.b16 %v2002
          %v3260 = vunpack.c.l.b16 %v2003
          %v3261 = vunpack.c.h.b16 %v2003
          %v3262 = vunpack.c.l.b16 %v2004
          %v3263 = vunpack.c.h.b16 %v2004
          %v3264 = vunpack.c.l.b16 %v2005
          %v3265 = vunpack.c.h.b16 %v2005
          %v3266 = vunpack.c.l.b16 %v2006
          %v3267 = vunpack.c.h.b16 %v2006
          %v3268 = vunpack.c.l.b16 %v2007
          %v3269 = vunpack.c.h.b16 %v2007
          %v3270 = vunpack.c.l.b16 %v2008
          %v3271 = vunpack.c.h.b16 %v2008
          %v3272 = vunpack.c.l.b16 %v2009
          %v3273 = vunpack.c.h.b16 %v2009
          %v3274 = vunpack.c.l.b16 %v2010
          %v3275 = vunpack.c.h.b16 %v2010
          %v3276 = vunpack.c.l.b16 %v2011
          %v3277 = vunpack.c.h.b16 %v2011
          %v3278 = vunpack.c.l.b16 %v2012
          %v3279 = vunpack.c.h.b16 %v2012
          %v3280 = vunpack.c.l.b16 %v2013
          %v3281 = vunpack.c.h.b16 %v2013
          %v3282 = vunpack.c.l.b16 %v2014
          %v3283 = vunpack.c.h.b16 %v2014
          %v3284 = vunpack.c.l.b16 %v2015
          %v3285 = vunpack.c.h.b16 %v2015
          %v3286 = vunpack.c.l.b16 %v2016
          %v3287 = vunpack.c.h.b16 %v2016
          %v3288 = vunpack.c.l.b16 %v2017
          %v3289 = vunpack.c.h.b16 %v2017
          %v3290 = vunpack.c.l.b16 %v2018
          %v3291 = vunpack.c.h.b16 %v2018
          %v3292 = vunpack.c.l.b16 %v2019
          %v3293 = vunpack.c.h.b16 %v2019
          %v3294 = vunpack.c.l.b16 %v2020
          %v3295 = vunpack.c.h.b16 %v2020
          %v3296 = vunpack.c.l.b16 %v2021
          %v3297 = vunpack.c.h.b16 %v2021
          %v3298 = vunpack.c.l.b16 %v2022
          %v3299 = vunpack.c.h.b16 %v2022
          %v3300 = vunpack.c.l.b16 %v2023
          %v3301 = vunpack.c.h.b16 %v2023
          %v3302 = vunpack.c.l.b16 %v2024
          %v3303 = vunpack.c.h.b16 %v2024
          %v3304 = vunpack.c.l.b16 %v2025
          %v3305 = vunpack.c.h.b16 %v2025
          %v3306 = vunpack.c.l.b16 %v2026
          %v3307 = vunpack.c.h.b16 %v2026
          %v3308 = vunpack.c.l.b16 %v2027
          %v3309 = vunpack.c.h.b16 %v2027
          %v3310 = vunpack.c.l.b16 %v2028
          %v3311 = vunpack.c.h.b16 %v2028
          %v3312 = vunpack.c.l.b16 %v2029
          %v3313 = vunpack.c.h.b16 %v2029
          %v3314 = vunpack.c.l.b16 %v2030
          %v3315 = vunpack.c.h.b16 %v2030
          %v3316 = vunpack.c.l.b16 %v2031
          %v3317 = vunpack.c.h.b16 %v2031
          %v3318 = vunpack.c.l.b16 %v2032
          %v3319 = vunpack.c.h.b16 %v2032
          %v3320 = vunpack.c.l.b16 %v2033
          %v3321 = vunpack.c.h.b16 %v2033
          %v3322 = vunpack.c.l.b16 %v2034
          %v3323 = vunpack.c.h.b16 %v2034
          %v3324 = vunpack.c.l.b16 %v2035
          %v3325 = vunpack.c.h.b16 %v2035
          %v3326 = vunpack.c.l.b16 %v2036
          %v3327 = vunpack.c.h.b16 %v2036
          %v3328 = vunpack.c.l.b16 %v2037
          %v3329 = vunpack.c.h.b16 %v2037
          %v3330 = vunpack.c.l.b16 %v2038
          %v3331 = vunpack.c.h.b16 %v2038
          %v3332 = vunpack.c.l.b16 %v2039
          %v3333 = vunpack.c.h.b16 %v2039
          %v3334 = vunpack.c.l.b16 %v2040
          %v3335 = vunpack.c.h.b16 %v2040
          %v3336 = vunpack.c.l.b16 %v2041
          %v3337 = vunpack.c.h.b16 %v2041
          %v3338 = vunpack.c.l.b16 %v2042
          %v3339 = vunpack.c.h.b16 %v2042
          %v3340 = vunpack.c.l.b16 %v2043
          %v3341 = vunpack.c.h.b16 %v2043
          %v3342 = vunpack.c.l.b16 %v2044
          %v3343 = vunpack.c.h.b16 %v2044
          %v3344 = vunpack.c.l.b16 %v2045
          %v3345 = vunpack.c.h.b16 %v2045
          %v3346 = vunpack.c.l.b16 %v2046
          %v3347 = vunpack.c.h.b16 %v2046
          %v3348 = vunpack.c.l.b16 %v2047
          %v3349 = vunpack.c.h.b16 %v2047
          %v3350 = vunpack.c.l.b16 %v2048
          %v3351 = vunpack.c.h.b16 %v2048
          %v3352 = vunpack.c.l.b16 %v2049
          %v3353 = vunpack.c.h.b16 %v2049
          %v3354 = vunpack.c.l.b16 %v2050
          %v3355 = vunpack.c.h.b16 %v2050
          %v3356 = vunpack.c.l.b16 %v2051
          %v3357 = vunpack.c.h.b16 %v2051
          %v3358 = vunpack.c.l.b16 %v2052
          %v3359 = vunpack.c.h.b16 %v2052
          %v3360 = vunpack.c.l.b16 %v2053
          %v3361 = vunpack.c.h.b16 %v2053
          %v3362 = vunpack.c.l.b16 %v2054
          %v3363 = vunpack.c.h.b16 %v2054
          %v3364 = vunpack.c.l.b16 %v2055
          %v3365 = vunpack.c.h.b16 %v2055
          %v3366 = vunpack.c.l.b16 %v2056
          %v3367 = vunpack.c.h.b16 %v2056
          %v3368 = vunpack.c.l.b16 %v2057
          %v3369 = vunpack.c.h.b16 %v2057
          %v3370 = vunpack.c.l.b16 %v2058
          %v3371 = vunpack.c.h.b16 %v2058
          %v3372 = vunpack.c.l.b16 %v2059
          %v3373 = vunpack.c.h.b16 %v2059
          %v3374 = vunpack.c.l.b16 %v2060
          %v3375 = vunpack.c.h.b16 %v2060
          %v3376 = vunpack.c.l.b16 %v2061
          %v3377 = vunpack.c.h.b16 %v2061
          %v3378 = vunpack.c.l.b16 %v2062
          %v3379 = vunpack.c.h.b16 %v2062
          %v3380 = vunpack.c.l.b16 %v2063
          %v3381 = vunpack.c.h.b16 %v2063
          %v3382 = vunpack.c.l.b16 %v2064
          %v3383 = vunpack.c.h.b16 %v2064
          %v3384 = vunpack.c.l.b16 %v2065
          %v3385 = vunpack.c.h.b16 %v2065
          %v3386 = vunpack.c.l.b16 %v2066
          %v3387 = vunpack.c.h.b16 %v2066
          %v3388 = vunpack.c.l.b16 %v2067
          %v3389 = vunpack.c.h.b16 %v2067
          %v3390 = vunpack.c.l.b16 %v2068
          %v3391 = vunpack.c.h.b16 %v2068
          %v3392 = vunpack.c.l.b16 %v2069
          %v3393 = vunpack.c.h.b16 %v2069
          %v3394 = vunpack.c.l.b16 %v2070
          %v3395 = vunpack.c.h.b16 %v2070
          %v3396 = vunpack.c.l.b16 %v2071
          %v3397 = vunpack.c.h.b16 %v2071
          %v3398 = vunpack.c.l.b16 %v2072
          %v3399 = vunpack.c.h.b16 %v2072
          %v3400 = vunpack.c.l.b16 %v2073
          %v3401 = vunpack.c.h.b16 %v2073
          %v3402 = vunpack.c.l.b16 %v2074
          %v3403 = vunpack.c.h.b16 %v2074
          %v3404 = vunpack.c.l.b16 %v2075
          %v3405 = vunpack.c.h.b16 %v2075
          %v3406 = vunpack.c.l.b16 %v2076
          %v3407 = vunpack.c.h.b16 %v2076
          %v3408 = vunpack.c.l.b16 %v2077
          %v3409 = vunpack.c.h.b16 %v2077
          %v3410 = vunpack.c.l.b16 %v2078
          %v3411 = vunpack.c.h.b16 %v2078
          %v3412 = vunpack.c.l.b16 %v2079
          %v3413 = vunpack.c.h.b16 %v2079
          %v3414 = vunpack.c.l.b16 %v2080
          %v3415 = vunpack.c.h.b16 %v2080
          %v3416 = vunpack.c.l.b16 %v2081
          %v3417 = vunpack.c.h.b16 %v2081
          %v3418 = vunpack.c.l.b16 %v2082
          %v3419 = vunpack.c.h.b16 %v2082
          %v3420 = vunpack.c.l.b16 %v2083
          %v3421 = vunpack.c.h.b16 %v2083
          %v3422 = vunpack.c.l.b16 %v2084
          %v3423 = vunpack.c.h.b16 %v2084
          %v3424 = vunpack.c.l.b16 %v2085
          %v3425 = vunpack.c.h.b16 %v2085
          %v3426 = vunpack.c.l.b16 %v2086
          %v3427 = vunpack.c.h.b16 %v2086
          %v3428 = vunpack.c.l.b16 %v2087
          %v3429 = vunpack.c.h.b16 %v2087
          %v3430 = vunpack.c.l.b16 %v2088
          %v3431 = vunpack.c.h.b16 %v2088
          %v3432 = vunpack.c.l.b16 %v2089
          %v3433 = vunpack.c.h.b16 %v2089
          %v3434 = vunpack.c.l.b16 %v2090
          %v3435 = vunpack.c.h.b16 %v2090
          %v3436 = vunpack.c.l.b16 %v2091
          %v3437 = vunpack.c.h.b16 %v2091
          %v3438 = vunpack.c.l.b16 %v2092
          %v3439 = vunpack.c.h.b16 %v2092
          %v3440 = vunpack.c.l.b16 %v2093
          %v3441 = vunpack.c.h.b16 %v2093
          %v3442 = vunpack.c.l.b16 %v2094
          %v3443 = vunpack.c.h.b16 %v2094
          %v3444 = vunpack.c.l.b16 %v2095
          %v3445 = vunpack.c.h.b16 %v2095
          %v3446 = vunpack.c.l.b16 %v2096
          %v3447 = vunpack.c.h.b16 %v2096
          %v3448 = vunpack.c.l.b16 %v2097
          %v3449 = vunpack.c.h.b16 %v2097
          %v3450 = vunpack.c.l.b16 %v2098
          %v3451 = vunpack.c.h.b16 %v2098
          %v3452 = vunpack.c.l.b16 %v2099
          %v3453 = vunpack.c.h.b16 %v2099
          %v3454 = vunpack.c.l.b16 %v2100
          %v3455 = vunpack.c.h.b16 %v2100
          %v3456 = vunpack.c.l.b16 %v2101
          %v3457 = vunpack.c.h.b16 %v2101
          %v3458 = vunpack.c.l.b16 %v2102
          %v3459 = vunpack.c.h.b16 %v2102
          %v3460 = vunpack.c.l.b16 %v2103
          %v3461 = vunpack.c.h.b16 %v2103
          %v3462 = vunpack.c.l.b16 %v2104
          %v3463 = vunpack.c.h.b16 %v2104
          %v3464 = vunpack.c.l.b16 %v2105
          %v3465 = vunpack.c.h.b16 %v2105
          %v3466 = vunpack.c.l.b16 %v2106
          %v3467 = vunpack.c.h.b16 %v2106
          %v3468 = vunpack.c.l.b16 %v2107
          %v3469 = vunpack.c.h.b16 %v2107
          %v3470 = vunpack.c.l.b16 %v2108
          %v3471 = vunpack.c.h.b16 %v2108
          %v3472 = vunpack.c.l.b16 %v2109
          %v3473 = vunpack.c.h.b16 %v2109
          %v3474 = vunpack.c.l.b16 %v2110
          %v3475 = vunpack.c.h.b16 %v2110
          %v3476 = vunpack.c.l.b16 %v2111
          %v3477 = vunpack.c.h.b16 %v2111
          %v3478 = vunpack.c.l.b16 %v2112
          %v3479 = vunpack.c.h.b16 %v2112
          %v3480 = vunpack.c.l.b16 %v2113
          %v3481 = vunpack.c.h.b16 %v2113
          %v3482 = vunpack.c.l.b16 %v2114
          %v3483 = vunpack.c.h.b16 %v2114
          %v3484 = vunpack.c.l.b16 %v2115
          %v3485 = vunpack.c.h.b16 %v2115
          %v3486 = vunpack.c.l.b16 %v2116
          %v3487 = vunpack.c.h.b16 %v2116
          %v3488 = vunpack.c.l.b16 %v2117
          %v3489 = vunpack.c.h.b16 %v2117
          %v3490 = vunpack.c.l.b16 %v2118
          %v3491 = vunpack.c.h.b16 %v2118
          %v3492 = vunpack.c.l.b16 %v2119
          %v3493 = vunpack.c.h.b16 %v2119
          %v3494 = vunpack.c.l.b16 %v2120
          %v3495 = vunpack.c.h.b16 %v2120
          %v3496 = vunpack.c.l.b16 %v2121
          %v3497 = vunpack.c.h.b16 %v2121
          %v3498 = vunpack.c.l.b16 %v2122
          %v3499 = vunpack.c.h.b16 %v2122
          %v3500 = vunpack.c.l.b16 %v2123
          %v3501 = vunpack.c.h.b16 %v2123
          %v3502 = vunpack.c.l.b16 %v2124
          %v3503 = vunpack.c.h.b16 %v2124
          %v3504 = vunpack.c.l.b16 %v2125
          %v3505 = vunpack.c.h.b16 %v2125
          %v3506 = vunpack.c.l.b16 %v2126
          %v3507 = vunpack.c.h.b16 %v2126
          %v3508 = vunpack.c.l.b16 %v2127
          %v3509 = vunpack.c.h.b16 %v2127
          %v3510 = vunpack.c.l.b16 %v2128
          %v3511 = vunpack.c.h.b16 %v2128
          %v3512 = vunpack.c.l.b16 %v2129
          %v3513 = vunpack.c.h.b16 %v2129
          %v3514 = vunpack.c.l.b16 %v2130
          %v3515 = vunpack.c.h.b16 %v2130
          %v3516 = vunpack.c.l.b16 %v2131
          %v3517 = vunpack.c.h.b16 %v2131
          %v3518 = vunpack.c.l.b16 %v2132
          %v3519 = vunpack.c.h.b16 %v2132
          %v3520 = vunpack.c.l.b16 %v2133
          %v3521 = vunpack.c.h.b16 %v2133
          %v3522 = vunpack.c.l.b16 %v2134
          %v3523 = vunpack.c.h.b16 %v2134
          %v3524 = vunpack.c.l.b16 %v2135
          %v3525 = vunpack.c.h.b16 %v2135
          %v3526 = vunpack.c.l.b16 %v2136
          %v3527 = vunpack.c.h.b16 %v2136
          %v3528 = vunpack.c.l.b16 %v2137
          %v3529 = vunpack.c.h.b16 %v2137
          %v3530 = vunpack.c.l.b16 %v2138
          %v3531 = vunpack.c.h.b16 %v2138
          %v3532 = vunpack.c.l.b16 %v2139
          %v3533 = vunpack.c.h.b16 %v2139
          %v3534 = vunpack.c.l.b16 %v2140
          %v3535 = vunpack.c.h.b16 %v2140
          %v3536 = vunpack.c.l.b16 %v2141
          %v3537 = vunpack.c.h.b16 %v2141
          %v3538 = vunpack.c.l.b16 %v2142
          %v3539 = vunpack.c.h.b16 %v2142
          %v3540 = vunpack.c.l.b16 %v2143
          %v3541 = vunpack.c.h.b16 %v2143
          %v3542 = vunpack.c.l.b16 %v2144
          %v3543 = vunpack.c.h.b16 %v2144
          %v3544 = vunpack.c.l.b16 %v2145
          %v3545 = vunpack.c.h.b16 %v2145
          %v3546 = vunpack.c.l.b16 %v2146
          %v3547 = vunpack.c.h.b16 %v2146
          %v3548 = vunpack.c.l.b16 %v2147
          %v3549 = vunpack.c.h.b16 %v2147
          %v3550 = vunpack.c.l.b16 %v2148
          %v3551 = vunpack.c.h.b16 %v2148
          %v3552 = vunpack.c.l.b16 %v2149
          %v3553 = vunpack.c.h.b16 %v2149
          %v3554 = vunpack.c.l.b16 %v2150
          %v3555 = vunpack.c.h.b16 %v2150
          %v3556 = vunpack.c.l.b16 %v2151
          %v3557 = vunpack.c.h.b16 %v2151
          %v3558 = vunpack.c.l.b16 %v2152
          %v3559 = vunpack.c.h.b16 %v2152
          %v3560 = vunpack.c.l.b16 %v2153
          %v3561 = vunpack.c.h.b16 %v2153
          %v3562 = vunpack.c.l.b16 %v2154
          %v3563 = vunpack.c.h.b16 %v2154
          %v3564 = vunpack.c.l.b16 %v2155
          %v3565 = vunpack.c.h.b16 %v2155
          %v3566 = vunpack.c.l.b16 %v2156
          %v3567 = vunpack.c.h.b16 %v2156
          %v3568 = vunpack.c.l.b16 %v2157
          %v3569 = vunpack.c.h.b16 %v2157
          %v3570 = vunpack.c.l.b16 %v2158
          %v3571 = vunpack.c.h.b16 %v2158
          %v3572 = vunpack.c.l.b16 %v2159
          %v3573 = vunpack.c.h.b16 %v2159
          %v3574 = vunpack.c.l.b16 %v2160
          %v3575 = vunpack.c.h.b16 %v2160
          %v3576 = vunpack.c.l.b16 %v2161
          %v3577 = vunpack.c.h.b16 %v2161
          %v3578 = vunpack.c.l.b16 %v2162
          %v3579 = vunpack.c.h.b16 %v2162
          %v3580 = vunpack.c.l.b16 %v2163
          %v3581 = vunpack.c.h.b16 %v2163
          %v3582 = vunpack.c.l.b16 %v2164
          %v3583 = vunpack.c.h.b16 %v2164
          %v3584 = vunpack.c.l.b16 %v2165
          %v3585 = vunpack.c.h.b16 %v2165
          %v3586 = vunpack.c.l.b16 %v2166
          %v3587 = vunpack.c.h.b16 %v2166
          %v3588 = vunpack.c.l.b16 %v2167
          %v3589 = vunpack.c.h.b16 %v2167
          %v3590 = vunpack.c.l.b16 %v2168
          %v3591 = vunpack.c.h.b16 %v2168
          %v3592 = vunpack.c.l.b16 %v2169
          %v3593 = vunpack.c.h.b16 %v2169
          %v3594 = vunpack.c.l.b16 %v2170
          %v3595 = vunpack.c.h.b16 %v2170
          %v3596 = vunpack.c.l.b16 %v2171
          %v3597 = vunpack.c.h.b16 %v2171
          %v3598 = vunpack.c.l.b16 %v2172
          %v3599 = vunpack.c.h.b16 %v2172
          %v3600 = vunpack.c.l.b16 %v2173
          %v3601 = vunpack.c.h.b16 %v2173
          %v3602 = vunpack.c.l.b16 %v2174
          %v3603 = vunpack.c.h.b16 %v2174
          %v3604 = vunpack.c.l.b16 %v2175
          %v3605 = vunpack.c.h.b16 %v2175
          %v3606 = vunpack.c.l.b16 %v2176
          %v3607 = vunpack.c.h.b16 %v2176
          %v3608 = vunpack.c.l.b16 %v2177
          %v3609 = vunpack.c.h.b16 %v2177
          %v3610 = vunpack.c.l.b16 %v2178
          %v3611 = vunpack.c.h.b16 %v2178
          %v3612 = vunpack.c.l.b16 %v2179
          %v3613 = vunpack.c.h.b16 %v2179
          %v3614 = vunpack.c.l.b16 %v2180
          %v3615 = vunpack.c.h.b16 %v2180
          %v3616 = vunpack.c.l.b16 %v2181
          %v3617 = vunpack.c.h.b16 %v2181
          %v3618 = vunpack.c.l.b16 %v2182
          %v3619 = vunpack.c.h.b16 %v2182
          %v3620 = vunpack.c.l.b16 %v2183
          %v3621 = vunpack.c.h.b16 %v2183
          %v3622 = vunpack.c.l.b16 %v2184
          %v3623 = vunpack.c.h.b16 %v2184
          %v3624 = vunpack.c.l.b16 %v2185
          %v3625 = vunpack.c.h.b16 %v2185
          %v3626 = vunpack.c.l.b16 %v2186
          %v3627 = vunpack.c.h.b16 %v2186
          %v3628 = vunpack.c.l.b16 %v2187
          %v3629 = vunpack.c.h.b16 %v2187
          %v3630 = vunpack.c.l.b16 %v2188
          %v3631 = vunpack.c.h.b16 %v2188
          %v3632 = vunpack.c.l.b16 %v2189
          %v3633 = vunpack.c.h.b16 %v2189
          %v3634 = vunpack.c.l.b16 %v2190
          %v3635 = vunpack.c.h.b16 %v2190
          %v3636 = vunpack.c.l.b16 %v2191
          %v3637 = vunpack.c.h.b16 %v2191
          %v3638 = vunpack.c.l.b16 %v2192
          %v3639 = vunpack.c.h.b16 %v2192
          %v3640 = vunpack.c.l.b16 %v2193
          %v3641 = vunpack.c.h.b16 %v2193
          %v3642 = vunpack.c.l.b16 %v2194
          %v3643 = vunpack.c.h.b16 %v2194
          %v3644 = vunpack.c.l.b16 %v2195
          %v3645 = vunpack.c.h.b16 %v2195
          %v3646 = vunpack.c.l.b16 %v2196
          %v3647 = vunpack.c.h.b16 %v2196
          %v3648 = vunpack.c.l.b16 %v2197
          %v3649 = vunpack.c.h.b16 %v2197
          %v3650 = vunpack.c.l.b16 %v2198
          %v3651 = vunpack.c.h.b16 %v2198
          %v3652 = vunpack.c.l.b16 %v2199
          %v3653 = vunpack.c.h.b16 %v2199
          %v3654 = vunpack.c.l.b16 %v2200
          %v3655 = vunpack.c.h.b16 %v2200
          %v3656 = vunpack.c.l.b16 %v2201
          %v3657 = vunpack.c.h.b16 %v2201
          %v3658 = vunpack.c.l.b16 %v2202
          %v3659 = vunpack.c.h.b16 %v2202
          %v3660 = vunpack.c.l.b16 %v2203
          %v3661 = vunpack.c.h.b16 %v2203
          %v3662 = vunpack.c.l.b16 %v2204
          %v3663 = vunpack.c.h.b16 %v2204
          %v3664 = vunpack.c.l.b16 %v2205
          %v3665 = vunpack.c.h.b16 %v2205
          %v3666 = vunpack.c.l.b16 %v2206
          %v3667 = vunpack.c.h.b16 %v2206
          %v3668 = vunpack.c.l.b16 %v2207
          %v3669 = vunpack.c.h.b16 %v2207
          %v3670 = vunpack.c.l.b16 %v2208
          %v3671 = vunpack.c.h.b16 %v2208
          %v3672 = vunpack.c.l.b16 %v2209
          %v3673 = vunpack.c.h.b16 %v2209
          %v3674 = vunpack.c.l.b16 %v2210
          %v3675 = vunpack.c.h.b16 %v2210
          %v3676 = vunpack.c.l.b16 %v2211
          %v3677 = vunpack.c.h.b16 %v2211
          %v3678 = vunpack.c.l.b16 %v2212
          %v3679 = vunpack.c.h.b16 %v2212
          %v3680 = vunpack.c.l.b16 %v2213
          %v3681 = vunpack.c.h.b16 %v2213
          %v3682 = vunpack.c.l.b16 %v2214
          %v3683 = vunpack.c.h.b16 %v2214
          %v3684 = vunpack.c.l.b16 %v2215
          %v3685 = vunpack.c.h.b16 %v2215
          %v3686 = vunpack.c.l.b16 %v2216
          %v3687 = vunpack.c.h.b16 %v2216
          %v3688 = vunpack.c.l.b16 %v2217
          %v3689 = vunpack.c.h.b16 %v2217
          %v3690 = vunpack.c.l.b16 %v2218
          %v3691 = vunpack.c.h.b16 %v2218
          %v3692 = vunpack.c.l.b16 %v2219
          %v3693 = vunpack.c.h.b16 %v2219
          %v3694 = vunpack.c.l.b16 %v2220
          %v3695 = vunpack.c.h.b16 %v2220
          %v3696 = vunpack.c.l.b16 %v2221
          %v3697 = vunpack.c.h.b16 %v2221
          %v3698 = vunpack.c.l.b16 %v2222
          %v3699 = vunpack.c.h.b16 %v2222
          %v3700 = vunpack.c.l.b16 %v2223
          %v3701 = vunpack.c.h.b16 %v2223
          %v3702 = vunpack.c.l.b16 %v2224
          %v3703 = vunpack.c.h.b16 %v2224
          %v3704 = vunpack.c.l.b16 %v2225
          %v3705 = vunpack.c.h.b16 %v2225
          %v3706 = vunpack.c.l.b16 %v2226
          %v3707 = vunpack.c.h.b16 %v2226
          %v3708 = vunpack.c.l.b16 %v2227
          %v3709 = vunpack.c.h.b16 %v2227
          %v3710 = vunpack.c.l.b16 %v2228
          %v3711 = vunpack.c.h.b16 %v2228
          %v3712 = vunpack.c.l.b16 %v2229
          %v3713 = vunpack.c.h.b16 %v2229
          %v3714 = vunpack.c.l.b16 %v2230
          %v3715 = vunpack.c.h.b16 %v2230
          %v3716 = vunpack.c.l.b16 %v2231
          %v3717 = vunpack.c.h.b16 %v2231
          %v3718 = vunpack.c.l.b16 %v2232
          %v3719 = vunpack.c.h.b16 %v2232
          %v3720 = vunpack.c.l.b16 %v2233
          %v3721 = vunpack.c.h.b16 %v2233
          %v3722 = vunpack.c.l.b16 %v2234
          %v3723 = vunpack.c.h.b16 %v2234
          %v3724 = vunpack.c.l.b16 %v2235
          %v3725 = vunpack.c.h.b16 %v2235
          %v3726 = vunpack.c.l.b16 %v2236
          %v3727 = vunpack.c.h.b16 %v2236
          %v3728 = vunpack.c.l.b16 %v2237
          %v3729 = vunpack.c.h.b16 %v2237
          %v3730 = vunpack.c.l.b16 %v2238
          %v3731 = vunpack.c.h.b16 %v2238
          %v3732 = vunpack.c.l.b16 %v2239
          %v3733 = vunpack.c.h.b16 %v2239
          %v3734 = vunpack.c.l.b16 %v2240
          %v3735 = vunpack.c.h.b16 %v2240
          %v3736 = vunpack.c.l.b16 %v2241
          %v3737 = vunpack.c.h.b16 %v2241
          %v3738 = vunpack.c.l.b16 %v2242
          %v3739 = vunpack.c.h.b16 %v2242
          %v3740 = vunpack.c.l.b16 %v2243
          %v3741 = vunpack.c.h.b16 %v2243
          %v3742 = vunpack.c.l.b16 %v2244
          %v3743 = vunpack.c.h.b16 %v2244
          %v3744 = vunpack.c.l.b16 %v2245
          %v3745 = vunpack.c.h.b16 %v2245
          %v3746 = vunpack.c.l.b16 %v2246
          %v3747 = vunpack.c.h.b16 %v2246
          %v3748 = vunpack.c.l.b16 %v2247
          %v3749 = vunpack.c.h.b16 %v2247
          %v3750 = vunpack.c.l.b16 %v2248
          %v3751 = vunpack.c.h.b16 %v2248
          %v3752 = vunpack.c.l.b16 %v2249
          %v3753 = vunpack.c.h.b16 %v2249
          %v3754 = vunpack.c.l.b16 %v2250
          %v3755 = vunpack.c.h.b16 %v2250
          %v3756 = vunpack.c.l.b16 %v2251
          %v3757 = vunpack.c.h.b16 %v2251
          %v3758 = vunpack.c.l.b16 %v2252
          %v3759 = vunpack.c.h.b16 %v2252
          %v3760 = vunpack.c.l.b16 %v2253
          %v3761 = vunpack.c.h.b16 %v2253
          %v3762 = vunpack.c.l.b16 %v2254
          %v3763 = vunpack.c.h.b16 %v2254
          %v3764 = vunpack.c.l.b16 %v2255
          %v3765 = vunpack.c.h.b16 %v2255
          %v3766 = vunpack.c.l.b16 %v2256
          %v3767 = vunpack.c.h.b16 %v2256
          %v3768 = vunpack.c.l.b16 %v2257
          %v3769 = vunpack.c.h.b16 %v2257
          %v3770 = vunpack.c.l.b16 %v2258
          %v3771 = vunpack.c.h.b16 %v2258
          %v3772 = vunpack.c.l.b16 %v2259
          %v3773 = vunpack.c.h.b16 %v2259
          %v3774 = vunpack.c.l.b16 %v2260
          %v3775 = vunpack.c.h.b16 %v2260
          %v3776 = vunpack.c.l.b16 %v2261
          %v3777 = vunpack.c.h.b16 %v2261
          %v3778 = vunpack.c.l.b16 %v2262
          %v3779 = vunpack.c.h.b16 %v2262
          %v3780 = vunpack.c.l.b16 %v2263
          %v3781 = vunpack.c.h.b16 %v2263
          %v3782 = vunpack.c.l.b16 %v2264
          %v3783 = vunpack.c.h.b16 %v2264
          %v3784 = vunpack.c.l.b16 %v2265
          %v3785 = vunpack.c.h.b16 %v2265
          %v3786 = vunpack.c.l.b16 %v2266
          %v3787 = vunpack.c.h.b16 %v2266
          %v3788 = vunpack.c.l.b16 %v2267
          %v3789 = vunpack.c.h.b16 %v2267
          %v3790 = vunpack.c.l.b16 %v2268
          %v3791 = vunpack.c.h.b16 %v2268
          %v3792 = vunpack.c.l.b16 %v2269
          %v3793 = vunpack.c.h.b16 %v2269
          %v3794 = vunpack.c.l.b16 %v2270
          %v3795 = vunpack.c.h.b16 %v2270
          %v3796 = vunpack.c.l.b16 %v2271
          %v3797 = vunpack.c.h.b16 %v2271
          %v3798 = vunpack.c.l.b16 %v2272
          %v3799 = vunpack.c.h.b16 %v2272
          %v3800 = vunpack.c.l.b16 %v2273
          %v3801 = vunpack.c.h.b16 %v2273
          %v3802 = vunpack.c.l.b16 %v2274
          %v3803 = vunpack.c.h.b16 %v2274
          %v3804 = vunpack.c.l.b16 %v2275
          %v3805 = vunpack.c.h.b16 %v2275
          %v3806 = vunpack.c.l.b16 %v2276
          %v3807 = vunpack.c.h.b16 %v2276
          %v3808 = vunpack.c.l.b16 %v2277
          %v3809 = vunpack.c.h.b16 %v2277
          %v3810 = vunpack.c.l.b16 %v2278
          %v3811 = vunpack.c.h.b16 %v2278
          %v3812 = vunpack.c.l.b16 %v2279
          %v3813 = vunpack.c.h.b16 %v2279
          %v3814 = vunpack.c.l.b16 %v2280
          %v3815 = vunpack.c.h.b16 %v2280
          %v3816 = vunpack.c.l.b16 %v2281
          %v3817 = vunpack.c.h.b16 %v2281
          %v3818 = vunpack.c.l.b16 %v2282
          %v3819 = vunpack.c.h.b16 %v2282
          %v3820 = vunpack.c.l.b16 %v2283
          %v3821 = vunpack.c.h.b16 %v2283
          %v3822 = vunpack.c.l.b16 %v2284
          %v3823 = vunpack.c.h.b16 %v2284
          %v3824 = vunpack.c.l.b16 %v2285
          %v3825 = vunpack.c.h.b16 %v2285
          %v3826 = vunpack.c.l.b16 %v2286
          %v3827 = vunpack.c.h.b16 %v2286
          %v3828 = vunpack.c.l.b16 %v2287
          %v3829 = vunpack.c.h.b16 %v2287
          %v3830 = vunpack.c.l.b16 %v2288
          %v3831 = vunpack.c.h.b16 %v2288
          %v3832 = vunpack.c.l.b16 %v2289
          %v3833 = vunpack.c.h.b16 %v2289
          %v3834 = vunpack.c.l.b16 %v2290
          %v3835 = vunpack.c.h.b16 %v2290
          %v3836 = vunpack.c.l.b16 %v2291
          %v3837 = vunpack.c.h.b16 %v2291
          %v3838 = vunpack.c.l.b16 %v2292
          %v3839 = vunpack.c.h.b16 %v2292
          %v3840 = vunpack.c.l.b16 %v2293
          %v3841 = vunpack.c.h.b16 %v2293
          %v3842 = vunpack.c.l.b16 %v2294
          %v3843 = vunpack.c.h.b16 %v2294
          %v3844 = vunpack.c.l.b16 %v2295
          %v3845 = vunpack.c.h.b16 %v2295
          %v3846 = vunpack.c.l.b16 %v2296
          %v3847 = vunpack.c.h.b16 %v2296
          %v3848 = vunpack.c.l.b16 %v2297
          %v3849 = vunpack.c.h.b16 %v2297
          %v3850 = vunpack.c.l.b16 %v2298
          %v3851 = vunpack.c.h.b16 %v2298
          %v3852 = vunpack.c.l.b16 %v2299
          %v3853 = vunpack.c.h.b16 %v2299
          %v3854 = vunpack.c.l.b16 %v2300
          %v3855 = vunpack.c.h.b16 %v2300
          %v3856 = vunpack.c.l.b16 %v2301
          %v3857 = vunpack.c.h.b16 %v2301
          %v3858 = vunpack.c.l.b16 %v2302
          %v3859 = vunpack.c.h.b16 %v2302
          %v3860 = vunpack.c.l.b16 %v2303
          %v3861 = vunpack.c.h.b16 %v2303
          %v3862 = vunpack.c.l.b16 %v2304
          %v3863 = vunpack.c.h.b16 %v2304
          %v3864 = vunpack.c.l.b16 %v2305
          %v3865 = vunpack.c.h.b16 %v2305
          %v3866 = vunpack.c.l.b16 %v2306
          %v3867 = vunpack.c.h.b16 %v2306
          %v3868 = vunpack.c.l.b16 %v2307
          %v3869 = vunpack.c.h.b16 %v2307
          %v3870 = vunpack.c.l.b16 %v2308
          %v3871 = vunpack.c.h.b16 %v2308
          %v3872 = vunpack.c.l.b16 %v2309
          %v3873 = vunpack.c.h.b16 %v2309
          %v3874 = vunpack.c.l.b16 %v2310
          %v3875 = vunpack.c.h.b16 %v2310
          %v3876 = vunpack.c.l.b16 %v2311
          %v3877 = vunpack.c.h.b16 %v2311
          %v3878 = vunpack.c.l.b16 %v2312
          %v3879 = vunpack.c.h.b16 %v2312
          %v3880 = vunpack.c.l.b16 %v2313
          %v3881 = vunpack.c.h.b16 %v2313
          %v3882 = vunpack.c.l.b16 %v2314
          %v3883 = vunpack.c.h.b16 %v2314
          %v3884 = vunpack.c.l.b16 %v2315
          %v3885 = vunpack.c.h.b16 %v2315
          %v3886 = vunpack.c.l.b16 %v2316
          %v3887 = vunpack.c.h.b16 %v2316
          %v3888 = vunpack.c.l.b16 %v2317
          %v3889 = vunpack.c.h.b16 %v2317
          %v3890 = vunpack.c.l.b16 %v2318
          %v3891 = vunpack.c.h.b16 %v2318
          %v3892 = vunpack.c.l.b16 %v2319
          %v3893 = vunpack.c.h.b16 %v2319
          %v3894 = vunpack.c.l.b16 %v2320
          %v3895 = vunpack.c.h.b16 %v2320
          %v3896 = vunpack.c.l.b16 %v2321
          %v3897 = vunpack.c.h.b16 %v2321
          %v3898 = vunpack.c.l.b16 %v2322
          %v3899 = vunpack.c.h.b16 %v2322
          %v3900 = vunpack.c.l.b16 %v2323
          %v3901 = vunpack.c.h.b16 %v2323
          %v3902 = vpack.c.b16 %v2886, %v2878
          %v3903 = vpack.c.b16 %v2887, %v2879
          %v3904 = vpack.c.b16 %v2888, %v2880
          %v3905 = vpack.c.b16 %v2889, %v2881
          %v3906 = vpack.c.b16 %v2890, %v2882
          %v3907 = vpack.c.b16 %v2891, %v2883
          %v3908 = vpack.c.b16 %v2892, %v2884
          %v3909 = vpack.c.b16 %v2893, %v2885
          %v3910 = vpack.c.b16 %v2902, %v2894
          %v3911 = vpack.c.b16 %v2903, %v2895
          %v3912 = vpack.c.b16 %v2904, %v2896
          %v3913 = vpack.c.b16 %v2905, %v2897
          %v3914 = vpack.c.b16 %v2906, %v2898
          %v3915 = vpack.c.b16 %v2907, %v2899
          %v3916 = vpack.c.b16 %v2908, %v2900
          %v3917 = vpack.c.b16 %v2909, %v2901
          %v3918 = vpack.c.b16 %v2918, %v2910
          %v3919 = vpack.c.b16 %v2919, %v2911
          %v3920 = vpack.c.b16 %v2920, %v2912
          %v3921 = vpack.c.b16 %v2921, %v2913
          %v3922 = vpack.c.b16 %v2922, %v2914
          %v3923 = vpack.c.b16 %v2923, %v2915
          %v3924 = vpack.c.b16 %v2924, %v2916
          %v3925 = vpack.c.b16 %v2925, %v2917
          %v3926 = vpack.c.b16 %v2934, %v2926
          %v3927 = vpack.c.b16 %v2935, %v2927
          %v3928 = vpack.c.b16 %v2936, %v2928
          %v3929 = vpack.c.b16 %v2937, %v2929
          %v3930 = vpack.c.b16 %v2938, %v2930
          %v3931 = vpack.c.b16 %v2939, %v2931
          %v3932 = vpack.c.b16 %v2940, %v2932
          %v3933 = vpack.c.b16 %v2941, %v2933
          %v3934 = vpack.c.b16 %v2950, %v2942
          %v3935 = vpack.c.b16 %v2951, %v2943
          %v3936 = vpack.c.b16 %v2952, %v2944
          %v3937 = vpack.c.b16 %v2953, %v2945
          %v3938 = vpack.c.b16 %v2954, %v2946
          %v3939 = vpack.c.b16 %v2955, %v2947
          %v3940 = vpack.c.b16 %v2956, %v2948
          %v3941 = vpack.c.b16 %v2957, %v2949
          %v3942 = vpack.c.b16 %v2966, %v2958
          %v3943 = vpack.c.b16 %v2967, %v2959
          %v3944 = vpack.c.b16 %v2968, %v2960
          %v3945 = vpack.c.b16 %v2969, %v2961
          %v3946 = vpack.c.b16 %v2970, %v2962
          %v3947 = vpack.c.b16 %v2971, %v2963
          %v3948 = vpack.c.b16 %v2972, %v2964
          %v3949 = vpack.c.b16 %v2973, %v2965
          %v3950 = vpack.c.b16 %v2982, %v2974
          %v3951 = vpack.c.b16 %v2983, %v2975
          %v3952 = vpack.c.b16 %v2984, %v2976
          %v3953 = vpack.c.b16 %v2985, %v2977
          %v3954 = vpack.c.b16 %v2986, %v2978
          %v3955 = vpack.c.b16 %v2987, %v2979
          %v3956 = vpack.c.b16 %v2988, %v2980
          %v3957 = vpack.c.b16 %v2989, %v2981
          %v3958 = vpack.c.b16 %v2998, %v2990
          %v3959 = vpack.c.b16 %v2999, %v2991
          %v3960 = vpack.c.b16 %v3000, %v2992
          %v3961 = vpack.c.b16 %v3001, %v2993
          %v3962 = vpack.c.b16 %v3002, %v2994
          %v3963 = vpack.c.b16 %v3003, %v2995
          %v3964 = vpack.c.b16 %v3004, %v2996
          %v3965 = vpack.c.b16 %v3005, %v2997
          %v3966 = vpack.c.b16 %v3014, %v3006
          %v3967 = vpack.c.b16 %v3015, %v3007
          %v3968 = vpack.c.b16 %v3016, %v3008
          %v3969 = vpack.c.b16 %v3017, %v3009
          %v3970 = vpack.c.b16 %v3018, %v3010
          %v3971 = vpack.c.b16 %v3019, %v3011
          %v3972 = vpack.c.b16 %v3020, %v3012
          %v3973 = vpack.c.b16 %v3021, %v3013
          %v3974 = vpack.c.b16 %v3030, %v3022
          %v3975 = vpack.c.b16 %v3031, %v3023
          %v3976 = vpack.c.b16 %v3032, %v3024
          %v3977 = vpack.c.b16 %v3033, %v3025
          %v3978 = vpack.c.b16 %v3034, %v3026
          %v3979 = vpack.c.b16 %v3035, %v3027
          %v3980 = vpack.c.b16 %v3036, %v3028
          %v3981 = vpack.c.b16 %v3037, %v3029
          %v3982 = vpack.c.b16 %v3046, %v3038
          %v3983 = vpack.c.b16 %v3047, %v3039
          %v3984 = vpack.c.b16 %v3048, %v3040
          %v3985 = vpack.c.b16 %v3049, %v3041
          %v3986 = vpack.c.b16 %v3050, %v3042
          %v3987 = vpack.c.b16 %v3051, %v3043
          %v3988 = vpack.c.b16 %v3052, %v3044
          %v3989 = vpack.c.b16 %v3053, %v3045
          %v3990 = vpack.c.b16 %v3062, %v3054
          %v3991 = vpack.c.b16 %v3063, %v3055
          %v3992 = vpack.c.b16 %v3064, %v3056
          %v3993 = vpack.c.b16 %v3065, %v3057
          %v3994 = vpack.c.b16 %v3066, %v3058
          %v3995 = vpack.c.b16 %v3067, %v3059
          %v3996 = vpack.c.b16 %v3068, %v3060
          %v3997 = vpack.c.b16 %v3069, %v3061
          %v3998 = vpack.c.b16 %v3078, %v3070
          %v3999 = vpack.c.b16 %v3079, %v3071
          %v4000 = vpack.c.b16 %v3080, %v3072
          %v4001 = vpack.c.b16 %v3081, %v3073
          %v4002 = vpack.c.b16 %v3082, %v3074
          %v4003 = vpack.c.b16 %v3083, %v3075
          %v4004 = vpack.c.b16 %v3084, %v3076
          %v4005 = vpack.c.b16 %v3085, %v3077
          %v4006 = vpack.c.b16 %v3094, %v3086
          %v4007 = vpack.c.b16 %v3095, %v3087
          %v4008 = vpack.c.b16 %v3096, %v3088
          %v4009 = vpack.c.b16 %v3097, %v3089
          %v4010 = vpack.c.b16 %v3098, %v3090
          %v4011 = vpack.c.b16 %v3099, %v3091
          %v4012 = vpack.c.b16 %v3100, %v3092
          %v4013 = vpack.c.b16 %v3101, %v3093
          %v4014 = vpack.c.b16 %v3110, %v3102
          %v4015 = vpack.c.b16 %v3111, %v3103
          %v4016 = vpack.c.b16 %v3112, %v3104
          %v4017 = vpack.c.b16 %v3113, %v3105
          %v4018 = vpack.c.b16 %v3114, %v3106
          %v4019 = vpack.c.b16 %v3115, %v3107
          %v4020 = vpack.c.b16 %v3116, %v3108
          %v4021 = vpack.c.b16 %v3117, %v3109
          %v4022 = vpack.c.b16 %v3126, %v3118
          %v4023 = vpack.c.b16 %v3127, %v3119
          %v4024 = vpack.c.b16 %v3128, %v3120
          %v4025 = vpack.c.b16 %v3129, %v3121
          %v4026 = vpack.c.b16 %v3130, %v3122
          %v4027 = vpack.c.b16 %v3131, %v3123
          %v4028 = vpack.c.b16 %v3132, %v3124
          %v4029 = vpack.c.b16 %v3133, %v3125
          %v4030 = vpack.c.b16 %v3142, %v3134
          %v4031 = vpack.c.b16 %v3143, %v3135
          %v4032 = vpack.c.b16 %v3144, %v3136
          %v4033 = vpack.c.b16 %v3145, %v3137
          %v4034 = vpack.c.b16 %v3146, %v3138
          %v4035 = vpack.c.b16 %v3147, %v3139
          %v4036 = vpack.c.b16 %v3148, %v3140
          %v4037 = vpack.c.b16 %v3149, %v3141
          %v4038 = vpack.c.b16 %v3158, %v3150
          %v4039 = vpack.c.b16 %v3159, %v3151
          %v4040 = vpack.c.b16 %v3160, %v3152
          %v4041 = vpack.c.b16 %v3161, %v3153
          %v4042 = vpack.c.b16 %v3162, %v3154
          %v4043 = vpack.c.b16 %v3163, %v3155
          %v4044 = vpack.c.b16 %v3164, %v3156
          %v4045 = vpack.c.b16 %v3165, %v3157
          %v4046 = vpack.c.b16 %v3174, %v3166
          %v4047 = vpack.c.b16 %v3175, %v3167
          %v4048 = vpack.c.b16 %v3176, %v3168
          %v4049 = vpack.c.b16 %v3177, %v3169
          %v4050 = vpack.c.b16 %v3178, %v3170
          %v4051 = vpack.c.b16 %v3179, %v3171
          %v4052 = vpack.c.b16 %v3180, %v3172
          %v4053 = vpack.c.b16 %v3181, %v3173
          %v4054 = vpack.c.b16 %v3190, %v3182
          %v4055 = vpack.c.b16 %v3191, %v3183
          %v4056 = vpack.c.b16 %v3192, %v3184
          %v4057 = vpack.c.b16 %v3193, %v3185
          %v4058 = vpack.c.b16 %v3194, %v3186
          %v4059 = vpack.c.b16 %v3195, %v3187
          %v4060 = vpack.c.b16 %v3196, %v3188
          %v4061 = vpack.c.b16 %v3197, %v3189
          %v4062 = vpack.c.b16 %v3206, %v3198
          %v4063 = vpack.c.b16 %v3207, %v3199
          %v4064 = vpack.c.b16 %v3208, %v3200
          %v4065 = vpack.c.b16 %v3209, %v3201
          %v4066 = vpack.c.b16 %v3210, %v3202
          %v4067 = vpack.c.b16 %v3211, %v3203
          %v4068 = vpack.c.b16 %v3212, %v3204
          %v4069 = vpack.c.b16 %v3213, %v3205
          %v4070 = vpack.c.b16 %v3222, %v3214
          %v4071 = vpack.c.b16 %v3223, %v3215
          %v4072 = vpack.c.b16 %v3224, %v3216
          %v4073 = vpack.c.b16 %v3225, %v3217
          %v4074 = vpack.c.b16 %v3226, %v3218
          %v4075 = vpack.c.b16 %v3227, %v3219
          %v4076 = vpack.c.b16 %v3228, %v3220
          %v4077 = vpack.c.b16 %v3229, %v3221
          %v4078 = vpack.c.b16 %v3238, %v3230
          %v4079 = vpack.c.b16 %v3239, %v3231
          %v4080 = vpack.c.b16 %v3240, %v3232
          %v4081 = vpack.c.b16 %v3241, %v3233
          %v4082 = vpack.c.b16 %v3242, %v3234
          %v4083 = vpack.c.b16 %v3243, %v3235
          %v4084 = vpack.c.b16 %v3244, %v3236
          %v4085 = vpack.c.b16 %v3245, %v3237
          %v4086 = vpack.c.b16 %v3254, %v3246
          %v4087 = vpack.c.b16 %v3255, %v3247
          %v4088 = vpack.c.b16 %v3256, %v3248
          %v4089 = vpack.c.b16 %v3257, %v3249
          %v4090 = vpack.c.b16 %v3258, %v3250
          %v4091 = vpack.c.b16 %v3259, %v3251
          %v4092 = vpack.c.b16 %v3260, %v3252
          %v4093 = vpack.c.b16 %v3261, %v3253
          %v4094 = vpack.c.b16 %v3270, %v3262
          %v4095 = vpack.c.b16 %v3271, %v3263
          %v4096 = vpack.c.b16 %v3272, %v3264
          %v4097 = vpack.c.b16 %v3273, %v3265
          %v4098 = vpack.c.b16 %v3274, %v3266
          %v4099 = vpack.c.b16 %v3275, %v3267
          %v4100 = vpack.c.b16 %v3276, %v3268
          %v4101 = vpack.c.b16 %v3277, %v3269
          %v4102 = vpack.c.b16 %v3286, %v3278
          %v4103 = vpack.c.b16 %v3287, %v3279
          %v4104 = vpack.c.b16 %v3288, %v3280
          %v4105 = vpack.c.b16 %v3289, %v3281
          %v4106 = vpack.c.b16 %v3290, %v3282
          %v4107 = vpack.c.b16 %v3291, %v3283
          %v4108 = vpack.c.b16 %v3292, %v3284
          %v4109 = vpack.c.b16 %v3293, %v3285
          %v4110 = vpack.c.b16 %v3302, %v3294
          %v4111 = vpack.c.b16 %v3303, %v3295
          %v4112 = vpack.c.b16 %v3304, %v3296
          %v4113 = vpack.c.b16 %v3305, %v3297
          %v4114 = vpack.c.b16 %v3306, %v3298
          %v4115 = vpack.c.b16 %v3307, %v3299
          %v4116 = vpack.c.b16 %v3308, %v3300
          %v4117 = vpack.c.b16 %v3309, %v3301
          %v4118 = vpack.c.b16 %v3318, %v3310
          %v4119 = vpack.c.b16 %v3319, %v3311
          %v4120 = vpack.c.b16 %v3320, %v3312
          %v4121 = vpack.c.b16 %v3321, %v3313
          %v4122 = vpack.c.b16 %v3322, %v3314
          %v4123 = vpack.c.b16 %v3323, %v3315
          %v4124 = vpack.c.b16 %v3324, %v3316
          %v4125 = vpack.c.b16 %v3325, %v3317
          %v4126 = vpack.c.b16 %v3334, %v3326
          %v4127 = vpack.c.b16 %v3335, %v3327
          %v4128 = vpack.c.b16 %v3336, %v3328
          %v4129 = vpack.c.b16 %v3337, %v3329
          %v4130 = vpack.c.b16 %v3338, %v3330
          %v4131 = vpack.c.b16 %v3339, %v3331
          %v4132 = vpack.c.b16 %v3340, %v3332
          %v4133 = vpack.c.b16 %v3341, %v3333
          %v4134 = vpack.c.b16 %v3350, %v3342
          %v4135 = vpack.c.b16 %v3351, %v3343
          %v4136 = vpack.c.b16 %v3352, %v3344
          %v4137 = vpack.c.b16 %v3353, %v3345
          %v4138 = vpack.c.b16 %v3354, %v3346
          %v4139 = vpack.c.b16 %v3355, %v3347
          %v4140 = vpack.c.b16 %v3356, %v3348
          %v4141 = vpack.c.b16 %v3357, %v3349
          %v4142 = vpack.c.b16 %v3366, %v3358
          %v4143 = vpack.c.b16 %v3367, %v3359
          %v4144 = vpack.c.b16 %v3368, %v3360
          %v4145 = vpack.c.b16 %v3369, %v3361
          %v4146 = vpack.c.b16 %v3370, %v3362
          %v4147 = vpack.c.b16 %v3371, %v3363
          %v4148 = vpack.c.b16 %v3372, %v3364
          %v4149 = vpack.c.b16 %v3373, %v3365
          %v4150 = vpack.c.b16 %v3382, %v3374
          %v4151 = vpack.c.b16 %v3383, %v3375
          %v4152 = vpack.c.b16 %v3384, %v3376
          %v4153 = vpack.c.b16 %v3385, %v3377
          %v4154 = vpack.c.b16 %v3386, %v3378
          %v4155 = vpack.c.b16 %v3387, %v3379
          %v4156 = vpack.c.b16 %v3388, %v3380
          %v4157 = vpack.c.b16 %v3389, %v3381
          %v4158 = vpack.c.b16 %v3398, %v3390
          %v4159 = vpack.c.b16 %v3399, %v3391
          %v4160 = vpack.c.b16 %v3400, %v3392
          %v4161 = vpack.c.b16 %v3401, %v3393
          %v4162 = vpack.c.b16 %v3402, %v3394
          %v4163 = vpack.c.b16 %v3403, %v3395
          %v4164 = vpack.c.b16 %v3404, %v3396
          %v4165 = vpack.c.b16 %v3405, %v3397
          %v4166 = vpack.c.b16 %v3414, %v3406
          %v4167 = vpack.c.b16 %v3415, %v3407
          %v4168 = vpack.c.b16 %v3416, %v3408
          %v4169 = vpack.c.b16 %v3417, %v3409
          %v4170 = vpack.c.b16 %v3418, %v3410
          %v4171 = vpack.c.b16 %v3419, %v3411
          %v4172 = vpack.c.b16 %v3420, %v3412
          %v4173 = vpack.c.b16 %v3421, %v3413
          %v4174 = vpack.c.b16 %v3430, %v3422
          %v4175 = vpack.c.b16 %v3431, %v3423
          %v4176 = vpack.c.b16 %v3432, %v3424
          %v4177 = vpack.c.b16 %v3433, %v3425
          %v4178 = vpack.c.b16 %v3434, %v3426
          %v4179 = vpack.c.b16 %v3435, %v3427
          %v4180 = vpack.c.b16 %v3436, %v3428
          %v4181 = vpack.c.b16 %v3437, %v3429
          %v4182 = vpack.c.b16 %v3446, %v3438
          %v4183 = vpack.c.b16 %v3447, %v3439
          %v4184 = vpack.c.b16 %v3448, %v3440
          %v4185 = vpack.c.b16 %v3449, %v3441
          %v4186 = vpack.c.b16 %v3450, %v3442
          %v4187 = vpack.c.b16 %v3451, %v3443
          %v4188 = vpack.c.b16 %v3452, %v3444
          %v4189 = vpack.c.b16 %v3453, %v3445
          %v4190 = vpack.c.b16 %v3462, %v3454
          %v4191 = vpack.c.b16 %v3463, %v3455
          %v4192 = vpack.c.b16 %v3464, %v3456
          %v4193 = vpack.c.b16 %v3465, %v3457
          %v4194 = vpack.c.b16 %v3466, %v3458
          %v4195 = vpack.c.b16 %v3467, %v3459
          %v4196 = vpack.c.b16 %v3468, %v3460
          %v4197 = vpack.c.b16 %v3469, %v3461
          %v4198 = vpack.c.b16 %v3478, %v3470
          %v4199 = vpack.c.b16 %v3479, %v3471
          %v4200 = vpack.c.b16 %v3480, %v3472
          %v4201 = vpack.c.b16 %v3481, %v3473
          %v4202 = vpack.c.b16 %v3482, %v3474
          %v4203 = vpack.c.b16 %v3483, %v3475
          %v4204 = vpack.c.b16 %v3484, %v3476
          %v4205 = vpack.c.b16 %v3485, %v3477
          %v4206 = vpack.c.b16 %v3494, %v3486
          %v4207 = vpack.c.b16 %v3495, %v3487
          %v4208 = vpack.c.b16 %v3496, %v3488
          %v4209 = vpack.c.b16 %v3497, %v3489
          %v4210 = vpack.c.b16 %v3498, %v3490
          %v4211 = vpack.c.b16 %v3499, %v3491
          %v4212 = vpack.c.b16 %v3500, %v3492
          %v4213 = vpack.c.b16 %v3501, %v3493
          %v4214 = vpack.c.b16 %v3510, %v3502
          %v4215 = vpack.c.b16 %v3511, %v3503
          %v4216 = vpack.c.b16 %v3512, %v3504
          %v4217 = vpack.c.b16 %v3513, %v3505
          %v4218 = vpack.c.b16 %v3514, %v3506
          %v4219 = vpack.c.b16 %v3515, %v3507
          %v4220 = vpack.c.b16 %v3516, %v3508
          %v4221 = vpack.c.b16 %v3517, %v3509
          %v4222 = vpack.c.b16 %v3526, %v3518
          %v4223 = vpack.c.b16 %v3527, %v3519
          %v4224 = vpack.c.b16 %v3528, %v3520
          %v4225 = vpack.c.b16 %v3529, %v3521
          %v4226 = vpack.c.b16 %v3530, %v3522
          %v4227 = vpack.c.b16 %v3531, %v3523
          %v4228 = vpack.c.b16 %v3532, %v3524
          %v4229 = vpack.c.b16 %v3533, %v3525
          %v4230 = vpack.c.b16 %v3542, %v3534
          %v4231 = vpack.c.b16 %v3543, %v3535
          %v4232 = vpack.c.b16 %v3544, %v3536
          %v4233 = vpack.c.b16 %v3545, %v3537
          %v4234 = vpack.c.b16 %v3546, %v3538
          %v4235 = vpack.c.b16 %v3547, %v3539
          %v4236 = vpack.c.b16 %v3548, %v3540
          %v4237 = vpack.c.b16 %v3549, %v3541
          %v4238 = vpack.c.b16 %v3558, %v3550
          %v4239 = vpack.c.b16 %v3559, %v3551
          %v4240 = vpack.c.b16 %v3560, %v3552
          %v4241 = vpack.c.b16 %v3561, %v3553
          %v4242 = vpack.c.b16 %v3562, %v3554
          %v4243 = vpack.c.b16 %v3563, %v3555
          %v4244 = vpack.c.b16 %v3564, %v3556
          %v4245 = vpack.c.b16 %v3565, %v3557
          %v4246 = vpack.c.b16 %v3574, %v3566
          %v4247 = vpack.c.b16 %v3575, %v3567
          %v4248 = vpack.c.b16 %v3576, %v3568
          %v4249 = vpack.c.b16 %v3577, %v3569
          %v4250 = vpack.c.b16 %v3578, %v3570
          %v4251 = vpack.c.b16 %v3579, %v3571
          %v4252 = vpack.c.b16 %v3580, %v3572
          %v4253 = vpack.c.b16 %v3581, %v3573
          %v4254 = vpack.c.b16 %v3590, %v3582
          %v4255 = vpack.c.b16 %v3591, %v3583
          %v4256 = vpack.c.b16 %v3592, %v3584
          %v4257 = vpack.c.b16 %v3593, %v3585
          %v4258 = vpack.c.b16 %v3594, %v3586
          %v4259 = vpack.c.b16 %v3595, %v3587
          %v4260 = vpack.c.b16 %v3596, %v3588
          %v4261 = vpack.c.b16 %v3597, %v3589
          %v4262 = vpack.c.b16 %v3606, %v3598
          %v4263 = vpack.c.b16 %v3607, %v3599
          %v4264 = vpack.c.b16 %v3608, %v3600
          %v4265 = vpack.c.b16 %v3609, %v3601
          %v4266 = vpack.c.b16 %v3610, %v3602
          %v4267 = vpack.c.b16 %v3611, %v3603
          %v4268 = vpack.c.b16 %v3612, %v3604
          %v4269 = vpack.c.b16 %v3613, %v3605
          %v4270 = vpack.c.b16 %v3622, %v3614
          %v4271 = vpack.c.b16 %v3623, %v3615
          %v4272 = vpack.c.b16 %v3624, %v3616
          %v4273 = vpack.c.b16 %v3625, %v3617
          %v4274 = vpack.c.b16 %v3626, %v3618
          %v4275 = vpack.c.b16 %v3627, %v3619
          %v4276 = vpack.c.b16 %v3628, %v3620
          %v4277 = vpack.c.b16 %v3629, %v3621
          %v4278 = vpack.c.b16 %v3638, %v3630
          %v4279 = vpack.c.b16 %v3639, %v3631
          %v4280 = vpack.c.b16 %v3640, %v3632
          %v4281 = vpack.c.b16 %v3641, %v3633
          %v4282 = vpack.c.b16 %v3642, %v3634
          %v4283 = vpack.c.b16 %v3643, %v3635
          %v4284 = vpack.c.b16 %v3644, %v3636
          %v4285 = vpack.c.b16 %v3645, %v3637
          %v4286 = vpack.c.b16 %v3654, %v3646
          %v4287 = vpack.c.b16 %v3655, %v3647
          %v4288 = vpack.c.b16 %v3656, %v3648
          %v4289 = vpack.c.b16 %v3657, %v3649
          %v4290 = vpack.c.b16 %v3658, %v3650
          %v4291 = vpack.c.b16 %v3659, %v3651
          %v4292 = vpack.c.b16 %v3660, %v3652
          %v4293 = vpack.c.b16 %v3661, %v3653
          %v4294 = vpack.c.b16 %v3670, %v3662
          %v4295 = vpack.c.b16 %v3671, %v3663
          %v4296 = vpack.c.b16 %v3672, %v3664
          %v4297 = vpack.c.b16 %v3673, %v3665
          %v4298 = vpack.c.b16 %v3674, %v3666
          %v4299 = vpack.c.b16 %v3675, %v3667
          %v4300 = vpack.c.b16 %v3676, %v3668
          %v4301 = vpack.c.b16 %v3677, %v3669
          %v4302 = vpack.c.b16 %v3686, %v3678
          %v4303 = vpack.c.b16 %v3687, %v3679
          %v4304 = vpack.c.b16 %v3688, %v3680
          %v4305 = vpack.c.b16 %v3689, %v3681
          %v4306 = vpack.c.b16 %v3690, %v3682
          %v4307 = vpack.c.b16 %v3691, %v3683
          %v4308 = vpack.c.b16 %v3692, %v3684
          %v4309 = vpack.c.b16 %v3693, %v3685
          %v4310 = vpack.c.b16 %v3702, %v3694
          %v4311 = vpack.c.b16 %v3703, %v3695
          %v4312 = vpack.c.b16 %v3704, %v3696
          %v4313 = vpack.c.b16 %v3705, %v3697
          %v4314 = vpack.c.b16 %v3706, %v3698
          %v4315 = vpack.c.b16 %v3707, %v3699
          %v4316 = vpack.c.b16 %v3708, %v3700
          %v4317 = vpack.c.b16 %v3709, %v3701
          %v4318 = vpack.c.b16 %v3718, %v3710
          %v4319 = vpack.c.b16 %v3719, %v3711
          %v4320 = vpack.c.b16 %v3720, %v3712
          %v4321 = vpack.c.b16 %v3721, %v3713
          %v4322 = vpack.c.b16 %v3722, %v3714
          %v4323 = vpack.c.b16 %v3723, %v3715
          %v4324 = vpack.c.b16 %v3724, %v3716
          %v4325 = vpack.c.b16 %v3725, %v3717
          %v4326 = vpack.c.b16 %v3734, %v3726
          %v4327 = vpack.c.b16 %v3735, %v3727
          %v4328 = vpack.c.b16 %v3736, %v3728
          %v4329 = vpack.c.b16 %v3737, %v3729
          %v4330 = vpack.c.b16 %v3738, %v3730
          %v4331 = vpack.c.b16 %v3739, %v3731
          %v4332 = vpack.c.b16 %v3740, %v3732
          %v4333 = vpack.c.b16 %v3741, %v3733
          %v4334 = vpack.c.b16 %v3750, %v3742
          %v4335 = vpack.c.b16 %v3751, %v3743
          %v4336 = vpack.c.b16 %v3752, %v3744
          %v4337 = vpack.c.b16 %v3753, %v3745
          %v4338 = vpack.c.b16 %v3754, %v3746
          %v4339 = vpack.c.b16 %v3755, %v3747
          %v4340 = vpack.c.b16 %v3756, %v3748
          %v4341 = vpack.c.b16 %v3757, %v3749
          %v4342 = vpack.c.b16 %v3766, %v3758
          %v4343 = vpack.c.b16 %v3767, %v3759
          %v4344 = vpack.c.b16 %v3768, %v3760
          %v4345 = vpack.c.b16 %v3769, %v3761
          %v4346 = vpack.c.b16 %v3770, %v3762
          %v4347 = vpack.c.b16 %v3771, %v3763
          %v4348 = vpack.c.b16 %v3772, %v3764
          %v4349 = vpack.c.b16 %v3773, %v3765
          %v4350 = vpack.c.b16 %v3782, %v3774
          %v4351 = vpack.c.b16 %v3783, %v3775
          %v4352 = vpack.c.b16 %v3784, %v3776
          %v4353 = vpack.c.b16 %v3785, %v3777
          %v4354 = vpack.c.b16 %v3786, %v3778
          %v4355 = vpack.c.b16 %v3787, %v3779
          %v4356 = vpack.c.b16 %v3788, %v3780
          %v4357 = vpack.c.b16 %v3789, %v3781
          %v4358 = vpack.c.b16 %v3798, %v3790
          %v4359 = vpack.c.b16 %v3799, %v3791
          %v4360 = vpack.c.b16 %v3800, %v3792
          %v4361 = vpack.c.b16 %v3801, %v3793
          %v4362 = vpack.c.b16 %v3802, %v3794
          %v4363 = vpack.c.b16 %v3803, %v3795
          %v4364 = vpack.c.b16 %v3804, %v3796
          %v4365 = vpack.c.b16 %v3805, %v3797
          %v4366 = vpack.c.b16 %v3814, %v3806
          %v4367 = vpack.c.b16 %v3815, %v3807
          %v4368 = vpack.c.b16 %v3816, %v3808
          %v4369 = vpack.c.b16 %v3817, %v3809
          %v4370 = vpack.c.b16 %v3818, %v3810
          %v4371 = vpack.c.b16 %v3819, %v3811
          %v4372 = vpack.c.b16 %v3820, %v3812
          %v4373 = vpack.c.b16 %v3821, %v3813
          %v4374 = vpack.c.b16 %v3830, %v3822
          %v4375 = vpack.c.b16 %v3831, %v3823
          %v4376 = vpack.c.b16 %v3832, %v3824
          %v4377 = vpack.c.b16 %v3833, %v3825
          %v4378 = vpack.c.b16 %v3834, %v3826
          %v4379 = vpack.c.b16 %v3835, %v3827
          %v4380 = vpack.c.b16 %v3836, %v3828
          %v4381 = vpack.c.b16 %v3837, %v3829
          %v4382 = vpack.c.b16 %v3846, %v3838
          %v4383 = vpack.c.b16 %v3847, %v3839
          %v4384 = vpack.c.b16 %v3848, %v3840
          %v4385 = vpack.c.b16 %v3849, %v3841
          %v4386 = vpack.c.b16 %v3850, %v3842
          %v4387 = vpack.c.b16 %v3851, %v3843
          %v4388 = vpack.c.b16 %v3852, %v3844
          %v4389 = vpack.c.b16 %v3853, %v3845
          %v4390 = vpack.c.b16 %v3862, %v3854
          %v4391 = vpack.c.b16 %v3863, %v3855
          %v4392 = vpack.c.b16 %v3864, %v3856
          %v4393 = vpack.c.b16 %v3865, %v3857
          %v4394 = vpack.c.b16 %v3866, %v3858
          %v4395 = vpack.c.b16 %v3867, %v3859
          %v4396 = vpack.c.b16 %v3868, %v3860
          %v4397 = vpack.c.b16 %v3869, %v3861
          %v4398 = vpack.c.b16 %v3878, %v3870
          %v4399 = vpack.c.b16 %v3879, %v3871
          %v4400 = vpack.c.b16 %v3880, %v3872
          %v4401 = vpack.c.b16 %v3881, %v3873
          %v4402 = vpack.c.b16 %v3882, %v3874
          %v4403 = vpack.c.b16 %v3883, %v3875
          %v4404 = vpack.c.b16 %v3884, %v3876
          %v4405 = vpack.c.b16 %v3885, %v3877
          %v4406 = vpack.c.b16 %v3894, %v3886
          %v4407 = vpack.c.b16 %v3895, %v3887
          %v4408 = vpack.c.b16 %v3896, %v3888
          %v4409 = vpack.c.b16 %v3897, %v3889
          %v4410 = vpack.c.b16 %v3898, %v3890
          %v4411 = vpack.c.b16 %v3899, %v3891
          %v4412 = vpack.c.b16 %v3900, %v3892
          %v4413 = vpack.c.b16 %v3901, %v3893
          %4926 = vmatprep.subr.bf16.mxu0 %v3903
          %4927 = vmatpush1.bf16.msra.mxu0 %v3902
          %4928 = vmatprep.subr.bf16.mxu0 %v3911
          %4929 = vmatpush1.bf16.msra.mxu0 %v3910
          %4930 = vmatprep.subr.bf16.mxu0 %v3919
          %4931 = vmatpush1.bf16.msra.mxu0 %v3918
          %4932 = vmatprep.subr.bf16.mxu0 %v3927
          %4933 = vmatpush1.bf16.msra.mxu0 %v3926
          %4934 = vmatprep.subr.bf16.mxu0 %v3935
          %4935 = vmatpush1.bf16.msra.mxu0 %v3934
          %4936 = vmatprep.subr.bf16.mxu0 %v3943
          %4937 = vmatpush1.bf16.msra.mxu0 %v3942
          %4938 = vmatprep.subr.bf16.mxu0 %v3951
          %4939 = vmatpush1.bf16.msra.mxu0 %v3950
          %4940 = vmatprep.subr.bf16.mxu0 %v3959
          %4941 = vmatpush1.bf16.msra.mxu0 %v3958
          %4942 = vmatprep.subr.bf16.mxu0 %v3967
          %4943 = vmatpush1.bf16.msra.mxu0 %v3966
          %4944 = vmatprep.subr.bf16.mxu0 %v3975
          %4945 = vmatpush1.bf16.msra.mxu0 %v3974
          %4946 = vmatprep.subr.bf16.mxu0 %v3983
          %4947 = vmatpush1.bf16.msra.mxu0 %v3982
          %4948 = vmatprep.subr.bf16.mxu0 %v3991
          %4949 = vmatpush1.bf16.msra.mxu0 %v3990
          %4950 = vmatprep.subr.bf16.mxu0 %v3999
          %4951 = vmatpush1.bf16.msra.mxu0 %v3998
          %4952 = vmatprep.subr.bf16.mxu0 %v4007
          %4953 = vmatpush1.bf16.msra.mxu0 %v4006
          %4954 = vmatprep.subr.bf16.mxu0 %v4015
          %4955 = vmatpush1.bf16.msra.mxu0 %v4014
          %4956 = vmatprep.subr.bf16.mxu0 %v4023
          %4957 = vmatpush1.bf16.msra.mxu0 %v4022
          %4958 = vmatprep.mubr.bf16.mxu0 %v1805
          %4959 = vmatmul.mubr.bf16.gmra.mrb[0].mxu0 %v1804
          %v4960 = vpop.f32.mrb[0].mxu0
          %v4961 = vadd.f32 %v2329, %v4960
          %v4962 = vpop.f32.mrb[0].mxu0
          %v4963 = vadd.f32 %v2333, %v4962
          %v4964 = vpop.f32.mrb[0].mxu0
          %v4965 = vpop.f32.mrb[0].mxu0
          %4966 = vdwg.mxu0
          %4967 = vmatprep.subr.bf16.mxu0 %v4031
          %4968 = vmatpush1.bf16.msra.mxu0 %v4030
          %4969 = vmatprep.subr.bf16.mxu0 %v4039
          %4970 = vmatpush1.bf16.msra.mxu0 %v4038
          %4971 = vmatprep.subr.bf16.mxu0 %v4047
          %4972 = vmatpush1.bf16.msra.mxu0 %v4046
          %4973 = vmatprep.subr.bf16.mxu0 %v4055
          %4974 = vmatpush1.bf16.msra.mxu0 %v4054
          %4975 = vmatprep.subr.bf16.mxu0 %v4063
          %4976 = vmatpush1.bf16.msra.mxu0 %v4062
          %4977 = vmatprep.subr.bf16.mxu0 %v4071
          %4978 = vmatpush1.bf16.msra.mxu0 %v4070
          %4979 = vmatprep.subr.bf16.mxu0 %v4079
          %4980 = vmatpush1.bf16.msra.mxu0 %v4078
          %4981 = vmatprep.subr.bf16.mxu0 %v4087
          %4982 = vmatpush1.bf16.msra.mxu0 %v4086
          %4983 = vmatprep.subr.bf16.mxu0 %v4095
          %4984 = vmatpush1.bf16.msra.mxu0 %v4094
          %4985 = vmatprep.subr.bf16.mxu0 %v4103
          %4986 = vmatpush1.bf16.msra.mxu0 %v4102
          %4987 = vmatprep.subr.bf16.mxu0 %v4111
          %4988 = vmatpush1.bf16.msra.mxu0 %v4110
          %4989 = vmatprep.subr.bf16.mxu0 %v4119
          %4990 = vmatpush1.bf16.msra.mxu0 %v4118
          %4991 = vmatprep.subr.bf16.mxu0 %v4127
          %4992 = vmatpush1.bf16.msra.mxu0 %v4126
          %4993 = vmatprep.subr.bf16.mxu0 %v4135
          %4994 = vmatpush1.bf16.msra.mxu0 %v4134
          %4995 = vmatprep.subr.bf16.mxu0 %v4143
          %4996 = vmatpush1.bf16.msra.mxu0 %v4142
          %4997 = vmatprep.subr.bf16.mxu0 %v4151
          %4998 = vmatpush1.bf16.msra.mxu0 %v4150
          %4999 = vmatprep.mubr.bf16.mxu0 %v1807
          %5000 = vmatmul.mubr.bf16.gmra.mrb[0].mxu0 %v1806
          %v5001 = vpop.f32.mrb[0].mxu0
          %v5002 = vadd.f32 %v4961, %v5001
          %v5003 = vpop.f32.mrb[0].mxu0
          %v5004 = vadd.f32 %v4963, %v5003
          %v5005 = vpop.f32.mrb[0].mxu0
          %v5006 = vpop.f32.mrb[0].mxu0
          %5007 = vdwg.mxu0
          %5008 = vmatprep.subr.bf16.mxu0 %v4159
          %5009 = vmatpush1.bf16.msra.mxu0 %v4158
          %5010 = vmatprep.subr.bf16.mxu0 %v4167
          %5011 = vmatpush1.bf16.msra.mxu0 %v4166
          %5012 = vmatprep.subr.bf16.mxu0 %v4175
          %5013 = vmatpush1.bf16.msra.mxu0 %v4174
          %5014 = vmatprep.subr.bf16.mxu0 %v4183
          %5015 = vmatpush1.bf16.msra.mxu0 %v4182
          %5016 = vmatprep.subr.bf16.mxu0 %v4191
          %5017 = vmatpush1.bf16.msra.mxu0 %v4190
          %5018 = vmatprep.subr.bf16.mxu0 %v4199
          %5019 = vmatpush1.bf16.msra.mxu0 %v4198
          %5020 = vmatprep.subr.bf16.mxu0 %v4207
          %5021 = vmatpush1.bf16.msra.mxu0 %v4206
          %5022 = vmatprep.subr.bf16.mxu0 %v4215
          %5023 = vmatpush1.bf16.msra.mxu0 %v4214
          %5024 = vmatprep.subr.bf16.mxu0 %v4223
          %5025 = vmatpush1.bf16.msra.mxu0 %v4222
          %5026 = vmatprep.subr.bf16.mxu0 %v4231
          %5027 = vmatpush1.bf16.msra.mxu0 %v4230
          %5028 = vmatprep.subr.bf16.mxu0 %v4239
          %5029 = vmatpush1.bf16.msra.mxu0 %v4238
          %5030 = vmatprep.subr.bf16.mxu0 %v4247
          %5031 = vmatpush1.bf16.msra.mxu0 %v4246
          %5032 = vmatprep.subr.bf16.mxu0 %v4255
          %5033 = vmatpush1.bf16.msra.mxu0 %v4254
          %5034 = vmatprep.subr.bf16.mxu0 %v4263
          %5035 = vmatpush1.bf16.msra.mxu0 %v4262
          %5036 = vmatprep.subr.bf16.mxu0 %v4271
          %5037 = vmatpush1.bf16.msra.mxu0 %v4270
          %5038 = vmatprep.subr.bf16.mxu0 %v4279
          %5039 = vmatpush1.bf16.msra.mxu0 %v4278
          %5040 = vmatprep.mubr.bf16.mxu0 %v1809
          %5041 = vmatmul.mubr.bf16.gmra.mrb[0].mxu0 %v1808
          %v5042 = vpop.f32.mrb[0].mxu0
          %v5043 = vadd.f32 %v5002, %v5042
          %v5044 = vpop.f32.mrb[0].mxu0
          %v5045 = vadd.f32 %v5004, %v5044
          %v5046 = vpop.f32.mrb[0].mxu0
          %v5047 = vpop.f32.mrb[0].mxu0
          %5048 = vdwg.mxu0
          %5049 = vmatprep.subr.bf16.mxu0 %v4287
          %5050 = vmatpush1.bf16.msra.mxu0 %v4286
          %5051 = vmatprep.subr.bf16.mxu0 %v4295
          %5052 = vmatpush1.bf16.msra.mxu0 %v4294
          %5053 = vmatprep.subr.bf16.mxu0 %v4303
          %5054 = vmatpush1.bf16.msra.mxu0 %v4302
          %5055 = vmatprep.subr.bf16.mxu0 %v4311
          %5056 = vmatpush1.bf16.msra.mxu0 %v4310
          %5057 = vmatprep.subr.bf16.mxu0 %v4319
          %5058 = vmatpush1.bf16.msra.mxu0 %v4318
          %5059 = vmatprep.subr.bf16.mxu0 %v4327
          %5060 = vmatpush1.bf16.msra.mxu0 %v4326
          %5061 = vmatprep.subr.bf16.mxu0 %v4335
          %5062 = vmatpush1.bf16.msra.mxu0 %v4334
          %5063 = vmatprep.subr.bf16.mxu0 %v4343
          %5064 = vmatpush1.bf16.msra.mxu0 %v4342
          %5065 = vmatprep.subr.bf16.mxu0 %v4351
          %5066 = vmatpush1.bf16.msra.mxu0 %v4350
          %5067 = vmatprep.subr.bf16.mxu0 %v4359
          %5068 = vmatpush1.bf16.msra.mxu0 %v4358
          %5069 = vmatprep.subr.bf16.mxu0 %v4367
          %5070 = vmatpush1.bf16.msra.mxu0 %v4366
          %5071 = vmatprep.subr.bf16.mxu0 %v4375
          %5072 = vmatpush1.bf16.msra.mxu0 %v4374
          %5073 = vmatprep.subr.bf16.mxu0 %v4383
          %5074 = vmatpush1.bf16.msra.mxu0 %v4382
          %5075 = vmatprep.subr.bf16.mxu0 %v4391
          %5076 = vmatpush1.bf16.msra.mxu0 %v4390
          %5077 = vmatprep.subr.bf16.mxu0 %v4399
          %5078 = vmatpush1.bf16.msra.mxu0 %v4398
          %5079 = vmatprep.subr.bf16.mxu0 %v4407
          %5080 = vmatpush1.bf16.msra.mxu0 %v4406
          %5081 = vmatprep.mubr.bf16.mxu0 %v1811
          %5082 = vmatmul.mubr.bf16.gmra.mrb[0].mxu0 %v1810
          %v5083 = vpop.f32.mrb[0].mxu0
          %v5084 = vadd.f32 %v5043, %v5083
          %v5085 = vpop.f32.mrb[0].mxu0
          %v5086 = vadd.f32 %v5045, %v5085
          %v5087 = vpop.f32.mrb[0].mxu0
          %v5088 = vpop.f32.mrb[0].mxu0
          %5089 = vdwg.mxu0
          %5090 = vmatprep.subr.bf16.mxu0 %v3905
          %5091 = vmatpush1.bf16.msra.mxu0 %v3904
          %5092 = vmatprep.subr.bf16.mxu0 %v3913
          %5093 = vmatpush1.bf16.msra.mxu0 %v3912
          %5094 = vmatprep.subr.bf16.mxu0 %v3921
          %5095 = vmatpush1.bf16.msra.mxu0 %v3920
          %5096 = vmatprep.subr.bf16.mxu0 %v3929
          %5097 = vmatpush1.bf16.msra.mxu0 %v3928
          %5098 = vmatprep.subr.bf16.mxu0 %v3937
          %5099 = vmatpush1.bf16.msra.mxu0 %v3936
          %5100 = vmatprep.subr.bf16.mxu0 %v3945
          %5101 = vmatpush1.bf16.msra.mxu0 %v3944
          %5102 = vmatprep.subr.bf16.mxu0 %v3953
          %5103 = vmatpush1.bf16.msra.mxu0 %v3952
          %5104 = vmatprep.subr.bf16.mxu0 %v3961
          %5105 = vmatpush1.bf16.msra.mxu0 %v3960
          %5106 = vmatprep.subr.bf16.mxu0 %v3969
          %5107 = vmatpush1.bf16.msra.mxu0 %v3968
          %5108 = vmatprep.subr.bf16.mxu0 %v3977
          %5109 = vmatpush1.bf16.msra.mxu0 %v3976
          %5110 = vmatprep.subr.bf16.mxu0 %v3985
          %5111 = vmatpush1.bf16.msra.mxu0 %v3984
          %5112 = vmatprep.subr.bf16.mxu0 %v3993
          %5113 = vmatpush1.bf16.msra.mxu0 %v3992
          %5114 = vmatprep.subr.bf16.mxu0 %v4001
          %5115 = vmatpush1.bf16.msra.mxu0 %v4000
          %5116 = vmatprep.subr.bf16.mxu0 %v4009
          %5117 = vmatpush1.bf16.msra.mxu0 %v4008
          %5118 = vmatprep.subr.bf16.mxu0 %v4017
          %5119 = vmatpush1.bf16.msra.mxu0 %v4016
          %5120 = vmatprep.subr.bf16.mxu0 %v4025
          %5121 = vmatpush1.bf16.msra.mxu0 %v4024
          %5122 = vmatprep.mubr.bf16.mxu0 %v1805
          %5123 = vmatmul.mubr.bf16.gmra.mrb[0].mxu0 %v1804
          %v5124 = vpop.f32.mrb[0].mxu0
          %v5125 = vadd.f32 %v2337, %v5124
          %v5126 = vpop.f32.mrb[0].mxu0
          %v5127 = vadd.f32 %v2341, %v5126
          %v5128 = vpop.f32.mrb[0].mxu0
          %v5129 = vpop.f32.mrb[0].mxu0
          %5130 = vdwg.mxu0
          %5131 = vmatprep.subr.bf16.mxu0 %v4033
          %5132 = vmatpush1.bf16.msra.mxu0 %v4032
          %5133 = vmatprep.subr.bf16.mxu0 %v4041
          %5134 = vmatpush1.bf16.msra.mxu0 %v4040
          %5135 = vmatprep.subr.bf16.mxu0 %v4049
          %5136 = vmatpush1.bf16.msra.mxu0 %v4048
          %5137 = vmatprep.subr.bf16.mxu0 %v4057
          %5138 = vmatpush1.bf16.msra.mxu0 %v4056
          %5139 = vmatprep.subr.bf16.mxu0 %v4065
          %5140 = vmatpush1.bf16.msra.mxu0 %v4064
          %5141 = vmatprep.subr.bf16.mxu0 %v4073
          %5142 = vmatpush1.bf16.msra.mxu0 %v4072
          %5143 = vmatprep.subr.bf16.mxu0 %v4081
          %5144 = vmatpush1.bf16.msra.mxu0 %v4080
          %5145 = vmatprep.subr.bf16.mxu0 %v4089
          %5146 = vmatpush1.bf16.msra.mxu0 %v4088
          %5147 = vmatprep.subr.bf16.mxu0 %v4097
          %5148 = vmatpush1.bf16.msra.mxu0 %v4096
          %5149 = vmatprep.subr.bf16.mxu0 %v4105
          %5150 = vmatpush1.bf16.msra.mxu0 %v4104
          %5151 = vmatprep.subr.bf16.mxu0 %v4113
          %5152 = vmatpush1.bf16.msra.mxu0 %v4112
          %5153 = vmatprep.subr.bf16.mxu0 %v4121
          %5154 = vmatpush1.bf16.msra.mxu0 %v4120
          %5155 = vmatprep.subr.bf16.mxu0 %v4129
          %5156 = vmatpush1.bf16.msra.mxu0 %v4128
          %5157 = vmatprep.subr.bf16.mxu0 %v4137
          %5158 = vmatpush1.bf16.msra.mxu0 %v4136
          %5159 = vmatprep.subr.bf16.mxu0 %v4145
          %5160 = vmatpush1.bf16.msra.mxu0 %v4144
          %5161 = vmatprep.subr.bf16.mxu0 %v4153
          %5162 = vmatpush1.bf16.msra.mxu0 %v4152
          %5163 = vmatprep.mubr.bf16.mxu0 %v1807
          %5164 = vmatmul.mubr.bf16.gmra.mrb[0].mxu0 %v1806
          %v5165 = vpop.f32.mrb[0].mxu0
          %v5166 = vadd.f32 %v5125, %v5165
          %v5167 = vpop.f32.mrb[0].mxu0
          %v5168 = vadd.f32 %v5127, %v5167
          %v5169 = vpop.f32.mrb[0].mxu0
          %v5170 = vpop.f32.mrb[0].mxu0
          %5171 = vdwg.mxu0
          %5172 = vmatprep.subr.bf16.mxu0 %v4161
          %5173 = vmatpush1.bf16.msra.mxu0 %v4160
          %5174 = vmatprep.subr.bf16.mxu0 %v4169
          %5175 = vmatpush1.bf16.msra.mxu0 %v4168
          %5176 = vmatprep.subr.bf16.mxu0 %v4177
          %5177 = vmatpush1.bf16.msra.mxu0 %v4176
          %5178 = vmatprep.subr.bf16.mxu0 %v4185
          %5179 = vmatpush1.bf16.msra.mxu0 %v4184
          %5180 = vmatprep.subr.bf16.mxu0 %v4193
          %5181 = vmatpush1.bf16.msra.mxu0 %v4192
          %5182 = vmatprep.subr.bf16.mxu0 %v4201
          %5183 = vmatpush1.bf16.msra.mxu0 %v4200
          %5184 = vmatprep.subr.bf16.mxu0 %v4209
          %5185 = vmatpush1.bf16.msra.mxu0 %v4208
          %5186 = vmatprep.subr.bf16.mxu0 %v4217
          %5187 = vmatpush1.bf16.msra.mxu0 %v4216
          %5188 = vmatprep.subr.bf16.mxu0 %v4225
          %5189 = vmatpush1.bf16.msra.mxu0 %v4224
          %5190 = vmatprep.subr.bf16.mxu0 %v4233
          %5191 = vmatpush1.bf16.msra.mxu0 %v4232
          %5192 = vmatprep.subr.bf16.mxu0 %v4241
          %5193 = vmatpush1.bf16.msra.mxu0 %v4240
          %5194 = vmatprep.subr.bf16.mxu0 %v4249
          %5195 = vmatpush1.bf16.msra.mxu0 %v4248
          %5196 = vmatprep.subr.bf16.mxu0 %v4257
          %5197 = vmatpush1.bf16.msra.mxu0 %v4256
          %5198 = vmatprep.subr.bf16.mxu0 %v4265
          %5199 = vmatpush1.bf16.msra.mxu0 %v4264
          %5200 = vmatprep.subr.bf16.mxu0 %v4273
          %5201 = vmatpush1.bf16.msra.mxu0 %v4272
          %5202 = vmatprep.subr.bf16.mxu0 %v4281
          %5203 = vmatpush1.bf16.msra.mxu0 %v4280
          %5204 = vmatprep.mubr.bf16.mxu0 %v1809
          %5205 = vmatmul.mubr.bf16.gmra.mrb[0].mxu0 %v1808
          %v5206 = vpop.f32.mrb[0].mxu0
          %v5207 = vadd.f32 %v5166, %v5206
          %v5208 = vpop.f32.mrb[0].mxu0
          %v5209 = vadd.f32 %v5168, %v5208
          %v5210 = vpop.f32.mrb[0].mxu0
          %v5211 = vpop.f32.mrb[0].mxu0
          %5212 = vdwg.mxu0
          %5213 = vmatprep.subr.bf16.mxu0 %v4289
          %5214 = vmatpush1.bf16.msra.mxu0 %v4288
          %5215 = vmatprep.subr.bf16.mxu0 %v4297
          %5216 = vmatpush1.bf16.msra.mxu0 %v4296
          %5217 = vmatprep.subr.bf16.mxu0 %v4305
          %5218 = vmatpush1.bf16.msra.mxu0 %v4304
          %5219 = vmatprep.subr.bf16.mxu0 %v4313
          %5220 = vmatpush1.bf16.msra.mxu0 %v4312
          %5221 = vmatprep.subr.bf16.mxu0 %v4321
          %5222 = vmatpush1.bf16.msra.mxu0 %v4320
          %5223 = vmatprep.subr.bf16.mxu0 %v4329
          %5224 = vmatpush1.bf16.msra.mxu0 %v4328
          %5225 = vmatprep.subr.bf16.mxu0 %v4337
          %5226 = vmatpush1.bf16.msra.mxu0 %v4336
          %5227 = vmatprep.subr.bf16.mxu0 %v4345
          %5228 = vmatpush1.bf16.msra.mxu0 %v4344
          %5229 = vmatprep.subr.bf16.mxu0 %v4353
          %5230 = vmatpush1.bf16.msra.mxu0 %v4352
          %5231 = vmatprep.subr.bf16.mxu0 %v4361
          %5232 = vmatpush1.bf16.msra.mxu0 %v4360
          %5233 = vmatprep.subr.bf16.mxu0 %v4369
          %5234 = vmatpush1.bf16.msra.mxu0 %v4368
          %5235 = vmatprep.subr.bf16.mxu0 %v4377
          %5236 = vmatpush1.bf16.msra.mxu0 %v4376
          %5237 = vmatprep.subr.bf16.mxu0 %v4385
          %5238 = vmatpush1.bf16.msra.mxu0 %v4384
          %5239 = vmatprep.subr.bf16.mxu0 %v4393
          %5240 = vmatpush1.bf16.msra.mxu0 %v4392
          %5241 = vmatprep.subr.bf16.mxu0 %v4401
          %5242 = vmatpush1.bf16.msra.mxu0 %v4400
          %5243 = vmatprep.subr.bf16.mxu0 %v4409
          %5244 = vmatpush1.bf16.msra.mxu0 %v4408
          %5245 = vmatprep.mubr.bf16.mxu0 %v1811
          %5246 = vmatmul.mubr.bf16.gmra.mrb[0].mxu0 %v1810
          %v5247 = vpop.f32.mrb[0].mxu0
          %v5248 = vadd.f32 %v5207, %v5247
          %v5249 = vpop.f32.mrb[0].mxu0
          %v5250 = vadd.f32 %v5209, %v5249
          %v5251 = vpop.f32.mrb[0].mxu0
          %v5252 = vpop.f32.mrb[0].mxu0
          %5253 = vdwg.mxu0
          %5254 = vmatprep.subr.bf16.mxu0 %v3907
          %5255 = vmatpush1.bf16.msra.mxu0 %v3906
          %5256 = vmatprep.subr.bf16.mxu0 %v3915
          %5257 = vmatpush1.bf16.msra.mxu0 %v3914
          %5258 = vmatprep.subr.bf16.mxu0 %v3923
          %5259 = vmatpush1.bf16.msra.mxu0 %v3922
          %5260 = vmatprep.subr.bf16.mxu0 %v3931
          %5261 = vmatpush1.bf16.msra.mxu0 %v3930
          %5262 = vmatprep.subr.bf16.mxu0 %v3939
          %5263 = vmatpush1.bf16.msra.mxu0 %v3938
          %5264 = vmatprep.subr.bf16.mxu0 %v3947
          %5265 = vmatpush1.bf16.msra.mxu0 %v3946
          %5266 = vmatprep.subr.bf16.mxu0 %v3955
          %5267 = vmatpush1.bf16.msra.mxu0 %v3954
          %5268 = vmatprep.subr.bf16.mxu0 %v3963
          %5269 = vmatpush1.bf16.msra.mxu0 %v3962
          %5270 = vmatprep.subr.bf16.mxu0 %v3971
          %5271 = vmatpush1.bf16.msra.mxu0 %v3970
          %5272 = vmatprep.subr.bf16.mxu0 %v3979
          %5273 = vmatpush1.bf16.msra.mxu0 %v3978
          %5274 = vmatprep.subr.bf16.mxu0 %v3987
          %5275 = vmatpush1.bf16.msra.mxu0 %v3986
          %5276 = vmatprep.subr.bf16.mxu0 %v3995
          %5277 = vmatpush1.bf16.msra.mxu0 %v3994
          %5278 = vmatprep.subr.bf16.mxu0 %v4003
          %5279 = vmatpush1.bf16.msra.mxu0 %v4002
          %5280 = vmatprep.subr.bf16.mxu0 %v4011
          %5281 = vmatpush1.bf16.msra.mxu0 %v4010
          %5282 = vmatprep.subr.bf16.mxu0 %v4019
          %5283 = vmatpush1.bf16.msra.mxu0 %v4018
          %5284 = vmatprep.subr.bf16.mxu0 %v4027
          %5285 = vmatpush1.bf16.msra.mxu0 %v4026
          %5286 = vmatprep.mubr.bf16.mxu0 %v1805
          %5287 = vmatmul.mubr.bf16.gmra.mrb[0].mxu0 %v1804
          %v5288 = vpop.f32.mrb[0].mxu0
          %v5289 = vadd.f32 %v2345, %v5288
          %v5290 = vpop.f32.mrb[0].mxu0
          %v5291 = vadd.f32 %v2349, %v5290
          %v5292 = vpop.f32.mrb[0].mxu0
          %v5293 = vpop.f32.mrb[0].mxu0
          %5294 = vdwg.mxu0
          %5295 = vmatprep.subr.bf16.mxu0 %v4035
          %5296 = vmatpush1.bf16.msra.mxu0 %v4034
          %5297 = vmatprep.subr.bf16.mxu0 %v4043
          %5298 = vmatpush1.bf16.msra.mxu0 %v4042
          %5299 = vmatprep.subr.bf16.mxu0 %v4051
          %5300 = vmatpush1.bf16.msra.mxu0 %v4050
          %5301 = vmatprep.subr.bf16.mxu0 %v4059
          %5302 = vmatpush1.bf16.msra.mxu0 %v4058
          %5303 = vmatprep.subr.bf16.mxu0 %v4067
          %5304 = vmatpush1.bf16.msra.mxu0 %v4066
          %5305 = vmatprep.subr.bf16.mxu0 %v4075
          %5306 = vmatpush1.bf16.msra.mxu0 %v4074
          %5307 = vmatprep.subr.bf16.mxu0 %v4083
          %5308 = vmatpush1.bf16.msra.mxu0 %v4082
          %5309 = vmatprep.subr.bf16.mxu0 %v4091
          %5310 = vmatpush1.bf16.msra.mxu0 %v4090
          %5311 = vmatprep.subr.bf16.mxu0 %v4099
          %5312 = vmatpush1.bf16.msra.mxu0 %v4098
          %5313 = vmatprep.subr.bf16.mxu0 %v4107
          %5314 = vmatpush1.bf16.msra.mxu0 %v4106
          %5315 = vmatprep.subr.bf16.mxu0 %v4115
          %5316 = vmatpush1.bf16.msra.mxu0 %v4114
          %5317 = vmatprep.subr.bf16.mxu0 %v4123
          %5318 = vmatpush1.bf16.msra.mxu0 %v4122
          %5319 = vmatprep.subr.bf16.mxu0 %v4131
          %5320 = vmatpush1.bf16.msra.mxu0 %v4130
          %5321 = vmatprep.subr.bf16.mxu0 %v4139
          %5322 = vmatpush1.bf16.msra.mxu0 %v4138
          %5323 = vmatprep.subr.bf16.mxu0 %v4147
          %5324 = vmatpush1.bf16.msra.mxu0 %v4146
          %5325 = vmatprep.subr.bf16.mxu0 %v4155
          %5326 = vmatpush1.bf16.msra.mxu0 %v4154
          %5327 = vmatprep.mubr.bf16.mxu0 %v1807
          %5328 = vmatmul.mubr.bf16.gmra.mrb[0].mxu0 %v1806
          %v5329 = vpop.f32.mrb[0].mxu0
          %v5330 = vadd.f32 %v5289, %v5329
          %v5331 = vpop.f32.mrb[0].mxu0
          %v5332 = vadd.f32 %v5291, %v5331
          %v5333 = vpop.f32.mrb[0].mxu0
          %v5334 = vpop.f32.mrb[0].mxu0
          %5335 = vdwg.mxu0
          %5336 = vmatprep.subr.bf16.mxu0 %v4163
          %5337 = vmatpush1.bf16.msra.mxu0 %v4162
          %5338 = vmatprep.subr.bf16.mxu0 %v4171
          %5339 = vmatpush1.bf16.msra.mxu0 %v4170
          %5340 = vmatprep.subr.bf16.mxu0 %v4179
          %5341 = vmatpush1.bf16.msra.mxu0 %v4178
          %5342 = vmatprep.subr.bf16.mxu0 %v4187
          %5343 = vmatpush1.bf16.msra.mxu0 %v4186
          %5344 = vmatprep.subr.bf16.mxu0 %v4195
          %5345 = vmatpush1.bf16.msra.mxu0 %v4194
          %5346 = vmatprep.subr.bf16.mxu0 %v4203
          %5347 = vmatpush1.bf16.msra.mxu0 %v4202
          %5348 = vmatprep.subr.bf16.mxu0 %v4211
          %5349 = vmatpush1.bf16.msra.mxu0 %v4210
          %5350 = vmatprep.subr.bf16.mxu0 %v4219
          %5351 = vmatpush1.bf16.msra.mxu0 %v4218
          %5352 = vmatprep.subr.bf16.mxu0 %v4227
          %5353 = vmatpush1.bf16.msra.mxu0 %v4226
          %5354 = vmatprep.subr.bf16.mxu0 %v4235
          %5355 = vmatpush1.bf16.msra.mxu0 %v4234
          %5356 = vmatprep.subr.bf16.mxu0 %v4243
          %5357 = vmatpush1.bf16.msra.mxu0 %v4242
          %5358 = vmatprep.subr.bf16.mxu0 %v4251
          %5359 = vmatpush1.bf16.msra.mxu0 %v4250
          %5360 = vmatprep.subr.bf16.mxu0 %v4259
          %5361 = vmatpush1.bf16.msra.mxu0 %v4258
          %5362 = vmatprep.subr.bf16.mxu0 %v4267
          %5363 = vmatpush1.bf16.msra.mxu0 %v4266
          %5364 = vmatprep.subr.bf16.mxu0 %v4275
          %5365 = vmatpush1.bf16.msra.mxu0 %v4274
          %5366 = vmatprep.subr.bf16.mxu0 %v4283
          %5367 = vmatpush1.bf16.msra.mxu0 %v4282
          %5368 = vmatprep.mubr.bf16.mxu0 %v1809
          %5369 = vmatmul.mubr.bf16.gmra.mrb[0].mxu0 %v1808
          %v5370 = vpop.f32.mrb[0].mxu0
          %v5371 = vadd.f32 %v5330, %v5370
          %v5372 = vpop.f32.mrb[0].mxu0
          %v5373 = vadd.f32 %v5332, %v5372
          %v5374 = vpop.f32.mrb[0].mxu0
          %v5375 = vpop.f32.mrb[0].mxu0
          %5376 = vdwg.mxu0
          %5377 = vmatprep.subr.bf16.mxu0 %v4291
          %5378 = vmatpush1.bf16.msra.mxu0 %v4290
          %5379 = vmatprep.subr.bf16.mxu0 %v4299
          %5380 = vmatpush1.bf16.msra.mxu0 %v4298
          %5381 = vmatprep.subr.bf16.mxu0 %v4307
          %5382 = vmatpush1.bf16.msra.mxu0 %v4306
          %5383 = vmatprep.subr.bf16.mxu0 %v4315
          %5384 = vmatpush1.bf16.msra.mxu0 %v4314
          %5385 = vmatprep.subr.bf16.mxu0 %v4323
          %5386 = vmatpush1.bf16.msra.mxu0 %v4322
          %5387 = vmatprep.subr.bf16.mxu0 %v4331
          %5388 = vmatpush1.bf16.msra.mxu0 %v4330
          %5389 = vmatprep.subr.bf16.mxu0 %v4339
          %5390 = vmatpush1.bf16.msra.mxu0 %v4338
          %5391 = vmatprep.subr.bf16.mxu0 %v4347
          %5392 = vmatpush1.bf16.msra.mxu0 %v4346
          %5393 = vmatprep.subr.bf16.mxu0 %v4355
          %5394 = vmatpush1.bf16.msra.mxu0 %v4354
          %5395 = vmatprep.subr.bf16.mxu0 %v4363
          %5396 = vmatpush1.bf16.msra.mxu0 %v4362
          %5397 = vmatprep.subr.bf16.mxu0 %v4371
          %5398 = vmatpush1.bf16.msra.mxu0 %v4370
          %5399 = vmatprep.subr.bf16.mxu0 %v4379
          %5400 = vmatpush1.bf16.msra.mxu0 %v4378
          %5401 = vmatprep.subr.bf16.mxu0 %v4387
          %5402 = vmatpush1.bf16.msra.mxu0 %v4386
          %5403 = vmatprep.subr.bf16.mxu0 %v4395
          %5404 = vmatpush1.bf16.msra.mxu0 %v4394
          %5405 = vmatprep.subr.bf16.mxu0 %v4403
          %5406 = vmatpush1.bf16.msra.mxu0 %v4402
          %5407 = vmatprep.subr.bf16.mxu0 %v4411
          %5408 = vmatpush1.bf16.msra.mxu0 %v4410
          %5409 = vmatprep.mubr.bf16.mxu0 %v1811
          %5410 = vmatmul.mubr.bf16.gmra.mrb[0].mxu0 %v1810
          %v5411 = vpop.f32.mrb[0].mxu0
          %v5412 = vadd.f32 %v5371, %v5411
          %v5413 = vpop.f32.mrb[0].mxu0
          %v5414 = vadd.f32 %v5373, %v5413
          %v5415 = vpop.f32.mrb[0].mxu0
          %v5416 = vpop.f32.mrb[0].mxu0
          %5417 = vdwg.mxu0
          %5418 = vmatprep.subr.bf16.mxu0 %v3909
          %5419 = vmatpush1.bf16.msra.mxu0 %v3908
          %5420 = vmatprep.subr.bf16.mxu0 %v3917
          %5421 = vmatpush1.bf16.msra.mxu0 %v3916
          %5422 = vmatprep.subr.bf16.mxu0 %v3925
          %5423 = vmatpush1.bf16.msra.mxu0 %v3924
          %5424 = vmatprep.subr.bf16.mxu0 %v3933
          %5425 = vmatpush1.bf16.msra.mxu0 %v3932
          %5426 = vmatprep.subr.bf16.mxu0 %v3941
          %5427 = vmatpush1.bf16.msra.mxu0 %v3940
          %5428 = vmatprep.subr.bf16.mxu0 %v3949
          %5429 = vmatpush1.bf16.msra.mxu0 %v3948
          %5430 = vmatprep.subr.bf16.mxu0 %v3957
          %5431 = vmatpush1.bf16.msra.mxu0 %v3956
          %5432 = vmatprep.subr.bf16.mxu0 %v3965
          %5433 = vmatpush1.bf16.msra.mxu0 %v3964
          %5434 = vmatprep.subr.bf16.mxu0 %v3973
          %5435 = vmatpush1.bf16.msra.mxu0 %v3972
          %5436 = vmatprep.subr.bf16.mxu0 %v3981
          %5437 = vmatpush1.bf16.msra.mxu0 %v3980
          %5438 = vmatprep.subr.bf16.mxu0 %v3989
          %5439 = vmatpush1.bf16.msra.mxu0 %v3988
          %5440 = vmatprep.subr.bf16.mxu0 %v3997
          %5441 = vmatpush1.bf16.msra.mxu0 %v3996
          %5442 = vmatprep.subr.bf16.mxu0 %v4005
          %5443 = vmatpush1.bf16.msra.mxu0 %v4004
          %5444 = vmatprep.subr.bf16.mxu0 %v4013
          %5445 = vmatpush1.bf16.msra.mxu0 %v4012
          %5446 = vmatprep.subr.bf16.mxu0 %v4021
          %5447 = vmatpush1.bf16.msra.mxu0 %v4020
          %5448 = vmatprep.subr.bf16.mxu0 %v4029
          %5449 = vmatpush1.bf16.msra.mxu0 %v4028
          %5450 = vmatprep.mubr.bf16.mxu0 %v1805
          %5451 = vmatmul.mubr.bf16.gmra.mrb[0].mxu0 %v1804
          %v5452 = vpop.f32.mrb[0].mxu0
          %v5453 = vadd.f32 %v2353, %v5452
          %v5454 = vpop.f32.mrb[0].mxu0
          %v5455 = vadd.f32 %v2357, %v5454
          %v5456 = vpop.f32.mrb[0].mxu0
          %v5457 = vpop.f32.mrb[0].mxu0
          %5458 = vdwg.mxu0
          %5459 = vmatprep.subr.bf16.mxu0 %v4037
          %5460 = vmatpush1.bf16.msra.mxu0 %v4036
          %5461 = vmatprep.subr.bf16.mxu0 %v4045
          %5462 = vmatpush1.bf16.msra.mxu0 %v4044
          %5463 = vmatprep.subr.bf16.mxu0 %v4053
          %5464 = vmatpush1.bf16.msra.mxu0 %v4052
          %5465 = vmatprep.subr.bf16.mxu0 %v4061
          %5466 = vmatpush1.bf16.msra.mxu0 %v4060
          %5467 = vmatprep.subr.bf16.mxu0 %v4069
          %5468 = vmatpush1.bf16.msra.mxu0 %v4068
          %5469 = vmatprep.subr.bf16.mxu0 %v4077
          %5470 = vmatpush1.bf16.msra.mxu0 %v4076
          %5471 = vmatprep.subr.bf16.mxu0 %v4085
          %5472 = vmatpush1.bf16.msra.mxu0 %v4084
          %5473 = vmatprep.subr.bf16.mxu0 %v4093
          %5474 = vmatpush1.bf16.msra.mxu0 %v4092
          %5475 = vmatprep.subr.bf16.mxu0 %v4101
          %5476 = vmatpush1.bf16.msra.mxu0 %v4100
          %5477 = vmatprep.subr.bf16.mxu0 %v4109
          %5478 = vmatpush1.bf16.msra.mxu0 %v4108
          %5479 = vmatprep.subr.bf16.mxu0 %v4117
          %5480 = vmatpush1.bf16.msra.mxu0 %v4116
          %5481 = vmatprep.subr.bf16.mxu0 %v4125
          %5482 = vmatpush1.bf16.msra.mxu0 %v4124
          %5483 = vmatprep.subr.bf16.mxu0 %v4133
          %5484 = vmatpush1.bf16.msra.mxu0 %v4132
          %5485 = vmatprep.subr.bf16.mxu0 %v4141
          %5486 = vmatpush1.bf16.msra.mxu0 %v4140
          %5487 = vmatprep.subr.bf16.mxu0 %v4149
          %5488 = vmatpush1.bf16.msra.mxu0 %v4148
          %5489 = vmatprep.subr.bf16.mxu0 %v4157
          %5490 = vmatpush1.bf16.msra.mxu0 %v4156
          %5491 = vmatprep.mubr.bf16.mxu0 %v1807
          %5492 = vmatmul.mubr.bf16.gmra.mrb[0].mxu0 %v1806
          %v5493 = vpop.f32.mrb[0].mxu0
          %v5494 = vadd.f32 %v5453, %v5493
          %v5495 = vpop.f32.mrb[0].mxu0
          %v5496 = vadd.f32 %v5455, %v5495
          %v5497 = vpop.f32.mrb[0].mxu0
          %v5498 = vpop.f32.mrb[0].mxu0
          %5499 = vdwg.mxu0
          %5500 = vmatprep.subr.bf16.mxu0 %v4165
          %5501 = vmatpush1.bf16.msra.mxu0 %v4164
          %5502 = vmatprep.subr.bf16.mxu0 %v4173
          %5503 = vmatpush1.bf16.msra.mxu0 %v4172
          %5504 = vmatprep.subr.bf16.mxu0 %v4181
          %5505 = vmatpush1.bf16.msra.mxu0 %v4180
          %5506 = vmatprep.subr.bf16.mxu0 %v4189
          %5507 = vmatpush1.bf16.msra.mxu0 %v4188
          %5508 = vmatprep.subr.bf16.mxu0 %v4197
          %5509 = vmatpush1.bf16.msra.mxu0 %v4196
          %5510 = vmatprep.subr.bf16.mxu0 %v4205
          %5511 = vmatpush1.bf16.msra.mxu0 %v4204
          %5512 = vmatprep.subr.bf16.mxu0 %v4213
          %5513 = vmatpush1.bf16.msra.mxu0 %v4212
          %5514 = vmatprep.subr.bf16.mxu0 %v4221
          %5515 = vmatpush1.bf16.msra.mxu0 %v4220
          %5516 = vmatprep.subr.bf16.mxu0 %v4229
          %5517 = vmatpush1.bf16.msra.mxu0 %v4228
          %5518 = vmatprep.subr.bf16.mxu0 %v4237
          %5519 = vmatpush1.bf16.msra.mxu0 %v4236
          %5520 = vmatprep.subr.bf16.mxu0 %v4245
          %5521 = vmatpush1.bf16.msra.mxu0 %v4244
          %5522 = vmatprep.subr.bf16.mxu0 %v4253
          %5523 = vmatpush1.bf16.msra.mxu0 %v4252
          %5524 = vmatprep.subr.bf16.mxu0 %v4261
          %5525 = vmatpush1.bf16.msra.mxu0 %v4260
          %5526 = vmatprep.subr.bf16.mxu0 %v4269
          %5527 = vmatpush1.bf16.msra.mxu0 %v4268
          %5528 = vmatprep.subr.bf16.mxu0 %v4277
          %5529 = vmatpush1.bf16.msra.mxu0 %v4276
          %5530 = vmatprep.subr.bf16.mxu0 %v4285
          %5531 = vmatpush1.bf16.msra.mxu0 %v4284
          %5532 = vmatprep.mubr.bf16.mxu0 %v1809
          %5533 = vmatmul.mubr.bf16.gmra.mrb[0].mxu0 %v1808
          %v5534 = vpop.f32.mrb[0].mxu0
          %v5535 = vadd.f32 %v5494, %v5534
          %v5536 = vpop.f32.mrb[0].mxu0
          %v5537 = vadd.f32 %v5496, %v5536
          %v5538 = vpop.f32.mrb[0].mxu0
          %v5539 = vpop.f32.mrb[0].mxu0
          %5540 = vdwg.mxu0
          %5541 = vmatprep.subr.bf16.mxu0 %v4293
          %5542 = vmatpush1.bf16.msra.mxu0 %v4292
          %5543 = vmatprep.subr.bf16.mxu0 %v4301
          %5544 = vmatpush1.bf16.msra.mxu0 %v4300
          %5545 = vmatprep.subr.bf16.mxu0 %v4309
          %5546 = vmatpush1.bf16.msra.mxu0 %v4308
          %5547 = vmatprep.subr.bf16.mxu0 %v4317
          %5548 = vmatpush1.bf16.msra.mxu0 %v4316
          %5549 = vmatprep.subr.bf16.mxu0 %v4325
          %5550 = vmatpush1.bf16.msra.mxu0 %v4324
          %5551 = vmatprep.subr.bf16.mxu0 %v4333
          %5552 = vmatpush1.bf16.msra.mxu0 %v4332
          %5553 = vmatprep.subr.bf16.mxu0 %v4341
          %5554 = vmatpush1.bf16.msra.mxu0 %v4340
          %5555 = vmatprep.subr.bf16.mxu0 %v4349
          %5556 = vmatpush1.bf16.msra.mxu0 %v4348
          %5557 = vmatprep.subr.bf16.mxu0 %v4357
          %5558 = vmatpush1.bf16.msra.mxu0 %v4356
          %5559 = vmatprep.subr.bf16.mxu0 %v4365
          %5560 = vmatpush1.bf16.msra.mxu0 %v4364
          %5561 = vmatprep.subr.bf16.mxu0 %v4373
          %5562 = vmatpush1.bf16.msra.mxu0 %v4372
          %5563 = vmatprep.subr.bf16.mxu0 %v4381
          %5564 = vmatpush1.bf16.msra.mxu0 %v4380
          %5565 = vmatprep.subr.bf16.mxu0 %v4389
          %5566 = vmatpush1.bf16.msra.mxu0 %v4388
          %5567 = vmatprep.subr.bf16.mxu0 %v4397
          %5568 = vmatpush1.bf16.msra.mxu0 %v4396
          %5569 = vmatprep.subr.bf16.mxu0 %v4405
          %5570 = vmatpush1.bf16.msra.mxu0 %v4404
          %5571 = vmatprep.subr.bf16.mxu0 %v4413
          %5572 = vmatpush1.bf16.msra.mxu0 %v4412
          %5573 = vmatprep.mubr.bf16.mxu0 %v1811
          %5574 = vmatmul.mubr.bf16.gmra.mrb[0].mxu0 %v1810
          %v5575 = vpop.f32.mrb[0].mxu0
          %v5576 = vadd.f32 %v5535, %v5575
          %v5577 = vpop.f32.mrb[0].mxu0
          %v5578 = vadd.f32 %v5537, %v5577
          %v5579 = vpop.f32.mrb[0].mxu0
          %v5580 = vpop.f32.mrb[0].mxu0
          %5581 = vdwg.mxu0
          %vm5582 = vcmp.ge.f32.partialorder %v5084, 0.0
          %vm5583 = vcmp.ge.f32.partialorder %v5086, 0.0
          %vm5584 = vcmp.ge.f32.partialorder %v5248, 0.0
          %vm5585 = vcmp.ge.f32.partialorder %v5250, 0.0
          %vm5586 = vcmp.ge.f32.partialorder %v5412, 0.0
          %vm5587 = vcmp.ge.f32.partialorder %v5414, 0.0
          %vm5588 = vcmp.ge.f32.partialorder %v5576, 0.0
          %vm5589 = vcmp.ge.f32.partialorder %v5578, 0.0
          %v5590 = vmul.f32 %v5084, 0.2
          %v5591 = vmul.f32 %v5086, 0.2
          %v5592 = vmul.f32 %v5248, 0.2
          %v5593 = vmul.f32 %v5250, 0.2
          %v5594 = vmul.f32 %v5412, 0.2
          %v5595 = vmul.f32 %v5414, 0.2
          %v5596 = vmul.f32 %v5576, 0.2
          %v5597 = vmul.f32 %v5578, 0.2
          %v5598 = vsel %vm5582, %v5084, %v5590
          %v5599 = vsel %vm5583, %v5086, %v5591
          %v5600 = vsel %vm5584, %v5248, %v5592
          %v5601 = vsel %vm5585, %v5250, %v5593
          %v5602 = vsel %vm5586, %v5412, %v5594
          %v5603 = vsel %vm5587, %v5414, %v5595
          %v5604 = vsel %vm5588, %v5576, %v5596
          %v5605 = vsel %vm5589, %v5578, %v5597
          %v5606 = vld [vmem:[#allocation15] sm:$0xff]
          %v5608 = vlaneseq
          %v5609 = vshrl.u32 %v5608, 7
          %v5610 = vsub.s32 0, %v5609
          %v5611 = vrot.slane %v5606, %v5610
          %v5612 = vlaneseq
          %v5613 = vshrl.u32 %v5612, 7
          %v5614 = vsub.s32 1, %v5613
          %v5615 = vrot.slane %v5606, %v5614
          %v5616 = vlaneseq
          %v5617 = vshrl.u32 %v5616, 7
          %v5618 = vsub.s32 2, %v5617
          %v5619 = vrot.slane %v5606, %v5618
          %v5620 = vlaneseq
          %v5621 = vshrl.u32 %v5620, 7
          %v5622 = vsub.s32 3, %v5621
          %v5623 = vrot.slane %v5606, %v5622
          %v5624 = vlaneseq
          %v5625 = vshrl.u32 %v5624, 7
          %v5626 = vsub.s32 4, %v5625
          %v5627 = vrot.slane %v5606, %v5626
          %v5628 = vlaneseq
          %v5629 = vshrl.u32 %v5628, 7
          %v5630 = vsub.s32 5, %v5629
          %v5631 = vrot.slane %v5606, %v5630
          %v5632 = vlaneseq
          %v5633 = vshrl.u32 %v5632, 7
          %v5634 = vsub.s32 6, %v5633
          %v5635 = vrot.slane %v5606, %v5634
          %v5636 = vlaneseq
          %v5637 = vshrl.u32 %v5636, 7
          %v5638 = vsub.s32 7, %v5637
          %v5639 = vrot.slane %v5606, %v5638
          %v5648 = vmul.f32 %v5598, %v5611
          %v5649 = vmul.f32 %v5599, %v5615
          %v5650 = vmul.f32 %v5600, %v5619
          %v5651 = vmul.f32 %v5601, %v5623
          %v5652 = vmul.f32 %v5602, %v5627
          %v5653 = vmul.f32 %v5603, %v5631
          %v5654 = vmul.f32 %v5604, %v5635
          %v5655 = vmul.f32 %v5605, %v5639
          %v5656 = vadd.f32 %v5648, %v5649
          %v5657 = vadd.f32 %v5656, %v5650
          %v5658 = vadd.f32 %v5657, %v5651
          %v5659 = vadd.f32 %v5658, %v5652
          %v5660 = vadd.f32 %v5659, %v5653
          %v5661 = vadd.f32 %v5660, %v5654
          %v5662 = vadd.f32 %v5661, %v5655
          %5663 = vadd.xlane.f32.xlu0 %v5662
          %v5664 = vpop.xlane.xlu0 %5663
          %v5665 = vld [vmem:[#allocation4] sm:$0x1]
          %v5667 = vlaneseq
          %v5668 = vshrl.u32 %v5667, 7
          %v5669 = vsub.s32 0, %v5668
          %v5670 = vrot.slane %v5665, %v5669
          %v5672 = vadd.f32 %v5664, %v5670
          %v5673 = vxor.u32 %v5672, 2147483648
          %v5674 = vmul.f32 %v5673, 1.442695
          %v5675 = vpow.pop %v5674
          %v5676 = vadd.f32 %v5675, 1.0
          %v5677 = vrcp.pop %v5676
          %v5678 = vmul.f32 1.0, %v5677
          %vm5679 = vcmask 7168
          %5680 = vst.msk [vmem:[%s436] sm:$0xff] %vm5679, %v5678
        $region96: #{discriminator_forward.1} parent=55 // pred_fallthru
          _
        %p5681 = scmp.lt.s32.totalorder %s31, 0
        %s5682 = scalar_select %p5681, %s31, 0
        %s5683 = smul.addr %s5682, 8
        %s5684 = scalar_lea.vmem %s9, %s5683
        // Predicated region
        $region101: #{discriminator_forward.1} parent=55 // pred_check
          %p5685 = pneg %p250
        $region102: #{discriminator_forward.1} parent=55 // pred_check_branch
          %5687 = sbr.rel (%p5685) target = $region104
        $region103: #{discriminator_forward.1} parent=55 // pred_region
          _
        $region104: #{discriminator_forward.1} parent=55 // pred_fallthru
          _
        // Predicated region
        $region105: #{discriminator_forward.1} parent=55 // pred_check
          %p5688 = pneg %p250
        $region106: #{discriminator_forward.1} parent=55 // pred_check_branch
          %5690 = sbr.rel (%p5688) target = $region108
        $region107: #{discriminator_forward.1} parent=55 // pred_region
          %p5691 = scmp.lt.s32.totalorder %s31, 0
          %s5692 = scalar_select %p5691, %s31, 0
          %s5693 = smul.addr %s5692, 8
          %s5694 = scalar_lea.vmem %s9, %s5693
        $region108: #{discriminator_forward.1} parent=55 // pred_fallthru
          _
      $region56: #{discriminator_forward.1} parent=5 // pred_fallthru
        _
      %p5695 = scmp.le.s32.totalorder 2, %s21
      // Predicated region
      $region109: #{discriminator_forward.1} parent=5 // pred_check
        %p5696 = pneg %p5695
      $region110: #{discriminator_forward.1} parent=5 // pred_check_branch
        %5698 = sbr.rel (%p5696) target = $region112
      $region111: #{discriminator_forward.1} parent=5 // pred_region
        %s5699 = ssub.s32 %s21, 2
      $region112: #{discriminator_forward.1} parent=5 // pred_fallthru
        _
    $region6: #{discriminator_forward.1} parent=1 // loop_footer
      %s25 = sadd.s32 1, %s21
    $region7: #{discriminator_forward.1} parent=1 // loop_footer_branch
      %20 = sbr.rel target = $region3
    $region8: #{discriminator_forward.1} parent=1 // loop_exit
      _
    %5700 = vsyncpa [#allocation6], 1
    %s5701 = scalar_lea.sflag [#allocation6], 1
    %5702 = vsyncpa %s5701, 1
    %5703 = vsyncpa [#allocation8], 1
    %5704 = vsyncpa [#allocation11], 1
    %5705 = vsyncpa [#allocation14], 1

</llo_original>
